<compile_context>
chip_gen: v7x
topology: tpu7x:2x2x1
jax: 0.10.0
libtpu: 0.0.40
codegen_flags: <defaults>
</compile_context>

<pallas_src>
import math
from functools import partial

import jax
import jax.numpy as jnp
from jax import lax
from jax.experimental import pallas as pl
from jax.experimental.pallas import tpu as pltpu

LN_EPS = 1e-12
SQRT_HALF = 0.7071067811865476


# ----------------------------- in-kernel helpers ----------------------------

def _gelu_exact(x):
    # exact (erf-based) GELU, as in BERT's hidden_act="gelu"
    return 0.5 * x * (1.0 + lax.erf(x * SQRT_HALF))


def _layernorm_f32(y, g, b, eps=LN_EPS):
    mu = jnp.mean(y, axis=-1, keepdims=True)
    var = jnp.mean((y - mu) * (y - mu), axis=-1, keepdims=True)
    return (y - mu) * lax.rsqrt(var + eps) * g + b


# ----------------------------- Pallas kernels -------------------------------

def _layernorm_kernel(x_ref, g_ref, b_ref, o_ref):
    x = x_ref[...].astype(jnp.float32)
    o_ref[...] = _layernorm_f32(x, g_ref[...], b_ref[...]).astype(o_ref.dtype)


def layernorm(x, g, b, *, block_m=128):
    """Row-tiled LayerNorm over a token-major (M, H) activation."""
    M, H = x.shape
    bm = block_m if M % block_m == 0 else M
    return pl.pallas_call(
        _layernorm_kernel,
        out_shape=jax.ShapeDtypeStruct((M, H), jnp.float32),
        grid=(M // bm,),
        in_specs=[
            pl.BlockSpec((bm, H), lambda i: (i, 0)),
            pl.BlockSpec((1, H), lambda i: (0, 0)),
            pl.BlockSpec((1, H), lambda i: (0, 0)),
        ],
        out_specs=pl.BlockSpec((bm, H), lambda i: (i, 0)),
        compiler_params=pltpu.CompilerParams(dimension_semantics=("parallel",)),
    )(x, g, b)


def _attn_block_kernel(x_ref, mask_ref, wqkv_ref, bqkv_ref, wo_ref, bo_ref,
                       g_ref, b_ref, o_ref, *, num_heads, scale):
    # One batch per grid step: QKV proj -> MHA -> out proj -> +residual -> LN.
    x = x_ref[...]                                       # (S, H) f32 residual stream
    S, H = x.shape
    Dh = H // num_heads

    # Fused QKV projection: bf16 MXU operands, f32 accumulation.
    qkv = jnp.dot(x.astype(jnp.bfloat16), wqkv_ref[...],
                  preferred_element_type=jnp.float32) + bqkv_ref[...]    # (S, 3H)

    # Additive mask bias for this batch, rebuilt in-kernel from the raw (B, S) mask.
    m = mask_ref[pl.ds(pl.program_id(0), 1), :]          # (1, S)
    bias = (1.0 - m) * -10000.0

    # Per-head attention (static unroll).  The output projection is folded in as
    # attn = sum_h ctx_h @ Wo[h*Dh:(h+1)*Dh, :]  ==  concat_h(ctx_h) @ Wo.
    attn = jnp.zeros((S, H), jnp.float32)
    for h in range(num_heads):
        q = qkv[:, h * Dh:(h + 1) * Dh].astype(jnp.bfloat16)            # (S, Dh)
        k = qkv[:, H + h * Dh:H + (h + 1) * Dh].astype(jnp.bfloat16)    # (S, Dh)
        v = qkv[:, 2 * H + h * Dh:2 * H + (h + 1) * Dh].astype(jnp.bfloat16)
        # contract over Dh directly — no k.T / XLU transpose
        s = lax.dot_general(q, k, (((1,), (1,)), ((), ())),
                            preferred_element_type=jnp.float32) * scale  # (S, S)
        s = s + bias
        s = s - jnp.max(s, axis=-1, keepdims=True)
        p = jnp.exp(s)
        p = p * pl.reciprocal(jnp.sum(p, axis=-1, keepdims=True), approx=True)
        ctx_h = jnp.dot(p.astype(jnp.bfloat16), v,
                        preferred_element_type=jnp.float32)              # (S, Dh)
        attn = attn + jnp.dot(ctx_h.astype(jnp.bfloat16),
                              wo_ref[h * Dh:(h + 1) * Dh, :],
                              preferred_element_type=jnp.float32)        # (S, H)
    attn = attn + bo_ref[...]

    # residual add + LayerNorm, fused (f32 statistics)
    o_ref[...] = _layernorm_f32(attn + x, g_ref[...], b_ref[...]).astype(o_ref.dtype)


def attention_block(x, mask_f, wqkv, bqkv, wo, bo, g, b, *, num_heads):
    """Full BERT self-attention block: x (B*S, H) -> LN(x + MHA(x))."""
    M, H = x.shape
    B, S = mask_f.shape
    scale = 1.0 / math.sqrt(H // num_heads)
    return pl.pallas_call(
        partial(_attn_block_kernel, num_heads=num_heads, scale=scale),
        out_shape=jax.ShapeDtypeStruct((M, H), jnp.float32),
        grid=(B,),
        in_specs=[
            pl.BlockSpec((S, H), lambda i: (i, 0)),        # this batch's tokens
            pl.BlockSpec((B, S), lambda i: (0, 0)),        # raw mask (tiny, resident)
            pl.BlockSpec((H, 3 * H), lambda i: (0, 0)),    # fused QKV weight (bf16)
            pl.BlockSpec((1, 3 * H), lambda i: (0, 0)),
            pl.BlockSpec((H, H), lambda i: (0, 0)),        # output projection (bf16)
            pl.BlockSpec((1, H), lambda i: (0, 0)),
            pl.BlockSpec((1, H), lambda i: (0, 0)),        # LN gamma
            pl.BlockSpec((1, H), lambda i: (0, 0)),        # LN beta
        ],
        out_specs=pl.BlockSpec((S, H), lambda i: (i, 0)),
        compiler_params=pltpu.CompilerParams(dimension_semantics=("parallel",)),
    )(x, mask_f, wqkv, bqkv, wo, bo, g, b)


def _ffn_block_kernel(x_ref, w1_ref, b1_ref, w2_ref, b2_ref, g_ref, b_ref, o_ref):
    x = x_ref[...]                                        # (tm, H) f32
    h = jnp.dot(x.astype(jnp.bfloat16), w1_ref[...],
                preferred_element_type=jnp.float32) + b1_ref[...]        # (tm, I)
    h = _gelu_exact(h)
    y = jnp.dot(h.astype(jnp.bfloat16), w2_ref[...],
                preferred_element_type=jnp.float32) + b2_ref[...]        # (tm, H)
    o_ref[...] = _layernorm_f32(y + x, g_ref[...], b_ref[...]).astype(o_ref.dtype)


def ffn_block(x, w1, b1, w2, b2, g, b, *, block_m=128):
    """Full BERT FFN block: x (B*S, H) -> LN(x + W2 @ gelu(W1 @ x))."""
    M, H = x.shape
    I = w1.shape[1]
    bm = block_m if M % block_m == 0 else M
    return pl.pallas_call(
        _ffn_block_kernel,
        out_shape=jax.ShapeDtypeStruct((M, H), jnp.float32),
        grid=(M // bm,),
        in_specs=[
            pl.BlockSpec((bm, H), lambda i: (i, 0)),
            pl.BlockSpec((H, I), lambda i: (0, 0)),
            pl.BlockSpec((1, I), lambda i: (0, 0)),
            pl.BlockSpec((I, H), lambda i: (0, 0)),
            pl.BlockSpec((1, H), lambda i: (0, 0)),
            pl.BlockSpec((1, H), lambda i: (0, 0)),
            pl.BlockSpec((1, H), lambda i: (0, 0)),
        ],
        out_specs=pl.BlockSpec((bm, H), lambda i: (i, 0)),
        compiler_params=pltpu.CompilerParams(dimension_semantics=("parallel",)),
    )(x, w1, b1, w2, b2, g, b)


# ------------------------------ Model (glue) --------------------------------

def init_params(key, *, vocab=1000, H=128, L=2, I=512, max_pos=128,
                type_vocab=2, n_classes=2):
    keys = iter(jax.random.split(key, 8 + 4 * L))

    def nrm(shape, dtype=jnp.float32):
        return (0.02 * jax.random.normal(next(keys), shape, jnp.float32)).astype(dtype)

    params = {
        "word_emb": nrm((vocab, H)),
        "pos_emb": nrm((max_pos, H)),
        "type_emb": nrm((type_vocab, H)),
        "emb_ln_g": jnp.ones((1, H), jnp.float32),
        "emb_ln_b": jnp.zeros((1, H), jnp.float32),
        "layers": [],
        "pool_w": nrm((H, H)),
        "pool_b": jnp.zeros((H,), jnp.float32),
        "cls_w": nrm((H, n_classes)),
        "cls_b": jnp.zeros((n_classes,), jnp.float32),
    }
    for _ in range(L):
        params["layers"].append({
            "wqkv": nrm((H, 3 * H), jnp.bfloat16),   # fused [Wq | Wk | Wv], bf16 MXU operand
            "bqkv": jnp.zeros((1, 3 * H), jnp.float32),
            "wo": nrm((H, H), jnp.bfloat16),
            "bo": jnp.zeros((1, H), jnp.float32),
            "ln1_g": jnp.ones((1, H), jnp.float32),
            "ln1_b": jnp.zeros((1, H), jnp.float32),
            "w1": nrm((H, I), jnp.bfloat16),
            "b1": jnp.zeros((1, I), jnp.float32),
            "w2": nrm((I, H), jnp.bfloat16),
            "b2": jnp.zeros((1, H), jnp.float32),
            "ln2_g": jnp.ones((1, H), jnp.float32),
            "ln2_b": jnp.zeros((1, H), jnp.float32),
        })
    return params


def bert_forward(params, input_ids, attention_mask, *, num_heads):
    """Returns classification logits, shape (B, NUM_CLASSES)."""
    B, S = input_ids.shape
    H = params["word_emb"].shape[1]

    # embeddings (gather + adds are XLA glue; LN is a Pallas kernel)
    x = jnp.take(params["word_emb"], input_ids, axis=0)              # (B, S, H)
    x = x + params["pos_emb"][:S][None, :, :]
    x = x + params["type_emb"][0][None, None, :]                     # token_type_ids = 0
    x = layernorm(x.reshape(B * S, H), params["emb_ln_g"], params["emb_ln_b"])

    mask_f = attention_mask.astype(jnp.float32)                      # (B, S)

    for layer in params["layers"]:
        # fused: QKV proj -> MHA(+mask) -> out proj -> +residual -> LN   (1 kernel)
        x = attention_block(x, mask_f, layer["wqkv"], layer["bqkv"],
                            layer["wo"], layer["bo"],
                            layer["ln1_g"], layer["ln1_b"], num_heads=num_heads)
        # fused: W1 -> GELU -> W2 -> +residual -> LN                     (1 kernel)
        x = ffn_block(x, layer["w1"], layer["b1"], layer["w2"], layer["b2"],
                      layer["ln2_g"], layer["ln2_b"])

    # [CLS] pooler (tanh) + 2-class head: plain XLA — (B, H) @ (H, 2) is far too
    # small to amortize a pallas_call and would force sub-128-lane masked stores.
    cls_tok = x.reshape(B, S, H)[:, 0, :]
    pooled = jnp.tanh(cls_tok @ params["pool_w"] + params["pool_b"])
    logits = pooled @ params["cls_w"] + params["cls_b"]
    return logits
    # TODO(synk): dropout layers are identity here (inference semantics); no
    # pretrained 'bert-base-uncased' checkpoint is loaded — weights are synthetic.


# --------------------------------- main --------------------------------------

if __name__ == "__main__":
    # Scaled-down, TPU-tile-aligned BERT: H=128 (4 heads, Dh=32), I=512, L=2, S=128.
    B, S = 2, 128
    VOCAB, H, NH, L, I = 1000, 128, 4, 2, 512

    key = jax.random.PRNGKey(0)
    k_param, k_ids = jax.random.split(key)

    params = init_params(k_param, vocab=VOCAB, H=H, L=L, I=I,
                         max_pos=S, type_vocab=2, n_classes=2)

    input_ids = jax.random.randint(k_ids, (B, S), 0, VOCAB, dtype=jnp.int32)
    attention_mask = jnp.ones((B, S), dtype=jnp.int32)
    attention_mask = attention_mask.at[1, 96:].set(0)   # exercise masking

    forward = jax.jit(partial(bert_forward, num_heads=NH))
    logits = jax.block_until_ready(forward(params, input_ids, attention_mask))

    assert logits.shape == (B, 2) and logits.dtype == jnp.float32
    assert bool(jnp.all(jnp.isfinite(logits)))
    print("KERNEL_OK")
</pallas_src>

<mosaic_0001>
module attributes {stable_mosaic.version = 11 : i64} {
  func.func @_layernorm_kernel(%arg0: i32, %arg1: memref<128x128xf32, #tpu.memory_space<vmem>>, %arg2: memref<1x128xf32, #tpu.memory_space<vmem>>, %arg3: memref<1x128xf32, #tpu.memory_space<vmem>>, %arg4: memref<128x128xf32, #tpu.memory_space<vmem>>) attributes {dimension_semantics = [#tpu.dimension_semantics<parallel>], iteration_bounds = array<i64: 2>, scalar_prefetch = 0 : i64, scratch_operands = 0 : i64, tpu.core_type = #tpu.core_type<tc>, window_params = [{transform_indices = @transform_0, window_bounds = array<i64: 128, 128>}, {pipeline_mode = #tpu.pipeline_mode<synchronous>, transform_indices = @transform_1, window_bounds = array<i64: 1, 128>}, {pipeline_mode = #tpu.pipeline_mode<synchronous>, transform_indices = @transform_2, window_bounds = array<i64: 1, 128>}, {transform_indices = @transform_3, window_bounds = array<i64: 128, 128>}]} {
    %c0 = arith.constant 0 : index
    %c0_0 = arith.constant 0 : index
    %0 = vector.load %arg1[%c0, %c0_0] : memref<128x128xf32, #tpu.memory_space<vmem>>, vector<128x128xf32>
    %c0_1 = arith.constant 0 : index
    %c0_2 = arith.constant 0 : index
    %1 = vector.load %arg2[%c0_1, %c0_2] : memref<1x128xf32, #tpu.memory_space<vmem>>, vector<1x128xf32>
    %c0_3 = arith.constant 0 : index
    %c0_4 = arith.constant 0 : index
    %2 = vector.load %arg3[%c0_3, %c0_4] : memref<1x128xf32, #tpu.memory_space<vmem>>, vector<1x128xf32>
    %cst = arith.constant dense<0.000000e+00> : vector<128xf32>
    %3 = vector.multi_reduction <add>, %0, %cst [1] : vector<128x128xf32> to vector<128xf32>
    %4 = vector.shape_cast %3 : vector<128xf32> to vector<128x1xf32>
    %cst_5 = arith.constant 1.280000e+02 : f32
    %5 = vector.broadcast %cst_5 : f32 to vector<128x1xf32>
    %6 = arith.divf %4, %5 : vector<128x1xf32>
    %7 = vector.broadcast %6 : vector<128x1xf32> to vector<128x128xf32>
    %8 = arith.subf %0, %7 : vector<128x128xf32>
    %9 = vector.broadcast %6 : vector<128x1xf32> to vector<128x128xf32>
    %10 = arith.subf %0, %9 : vector<128x128xf32>
    %11 = arith.mulf %8, %10 : vector<128x128xf32>
    %cst_6 = arith.constant dense<0.000000e+00> : vector<128xf32>
    %12 = vector.multi_reduction <add>, %11, %cst_6 [1] : vector<128x128xf32> to vector<128xf32>
    %13 = vector.shape_cast %12 : vector<128xf32> to vector<128x1xf32>
    %cst_7 = arith.constant 1.280000e+02 : f32
    %14 = vector.broadcast %cst_7 : f32 to vector<128x1xf32>
    %15 = arith.divf %13, %14 : vector<128x1xf32>
    %16 = vector.broadcast %6 : vector<128x1xf32> to vector<128x128xf32>
    %17 = arith.subf %0, %16 : vector<128x128xf32>
    %cst_8 = arith.constant 9.99999996E-13 : f32
    %18 = vector.broadcast %cst_8 : f32 to vector<128x1xf32>
    %19 = arith.addf %15, %18 : vector<128x1xf32>
    %20 = math.rsqrt %19 : vector<128x1xf32>
    %21 = vector.broadcast %20 : vector<128x1xf32> to vector<128x128xf32>
    %22 = arith.mulf %17, %21 : vector<128x128xf32>
    %23 = vector.broadcast %1 : vector<1x128xf32> to vector<128x128xf32>
    %24 = arith.mulf %22, %23 : vector<128x128xf32>
    %25 = vector.broadcast %2 : vector<1x128xf32> to vector<128x128xf32>
    %26 = arith.addf %24, %25 : vector<128x128xf32>
    %c0_9 = arith.constant 0 : index
    %c0_10 = arith.constant 0 : index
    %27 = vector.load %arg4[%c0_9, %c0_10] : memref<128x128xf32, #tpu.memory_space<vmem>>, vector<128x128xf32>
    tpu.vector_store %arg4[%c0_9, %c0_10], %26 {strides = array<i32>} : memref<128x128xf32, #tpu.memory_space<vmem>>, vector<128x128xf32>,
    return
  }
  func.func @transform_0(%arg0: i32) -> (i32, i32) {
    %c0_i32 = arith.constant 0 : i32
    %c0_i32_0 = arith.constant 0 : i32
    return %arg0, %c0_i32 : i32, i32
  }
  func.func @transform_1(%arg0: i32) -> (i32, i32) {
    %c0_i32 = arith.constant 0 : i32
    %c0_i32_0 = arith.constant 0 : i32
    %c0_i32_1 = arith.constant 0 : i32
    return %c0_i32, %c0_i32_0 : i32, i32
  }
  func.func @transform_2(%arg0: i32) -> (i32, i32) {
    %c0_i32 = arith.constant 0 : i32
    %c0_i32_0 = arith.constant 0 : i32
    %c0_i32_1 = arith.constant 0 : i32
    return %c0_i32, %c0_i32_0 : i32, i32
  }
  func.func @transform_3(%arg0: i32) -> (i32, i32) {
    %c0_i32 = arith.constant 0 : i32
    %c0_i32_0 = arith.constant 0 : i32
    return %arg0, %c0_i32 : i32, i32
  }
}

module attributes {stable_mosaic.version = 11 : i64} {
  func.func @_attn_block_kernel(%arg0: i32, %arg1: memref<128x128xf32, #tpu.memory_space<vmem>>, %arg2: memref<2x128xf32, #tpu.memory_space<vmem>>, %arg3: memref<128x384xbf16, #tpu.memory_space<vmem>>, %arg4: memref<1x384xf32, #tpu.memory_space<vmem>>, %arg5: memref<128x128xbf16, #tpu.memory_space<vmem>>, %arg6: memref<1x128xf32, #tpu.memory_space<vmem>>, %arg7: memref<1x128xf32, #tpu.memory_space<vmem>>, %arg8: memref<1x128xf32, #tpu.memory_space<vmem>>, %arg9: memref<128x128xf32, #tpu.memory_space<vmem>>) attributes {dimension_semantics = [#tpu.dimension_semantics<parallel>], iteration_bounds = array<i64: 2>, scalar_prefetch = 0 : i64, scratch_operands = 0 : i64, tpu.core_type = #tpu.core_type<tc>, window_params = [{transform_indices = @transform_0, window_bounds = array<i64: 128, 128>}, {pipeline_mode = #tpu.pipeline_mode<synchronous>, transform_indices = @transform_1, window_bounds = array<i64: 2, 128>}, {pipeline_mode = #tpu.pipeline_mode<synchronous>, transform_indices = @transform_2, window_bounds = array<i64: 128, 384>}, {pipeline_mode = #tpu.pipeline_mode<synchronous>, transform_indices = @transform_3, window_bounds = array<i64: 1, 384>}, {pipeline_mode = #tpu.pipeline_mode<synchronous>, transform_indices = @transform_4, window_bounds = array<i64: 128, 128>}, {pipeline_mode = #tpu.pipeline_mode<synchronous>, transform_indices = @transform_5, window_bounds = array<i64: 1, 128>}, {pipeline_mode = #tpu.pipeline_mode<synchronous>, transform_indices = @transform_6, window_bounds = array<i64: 1, 128>}, {pipeline_mode = #tpu.pipeline_mode<synchronous>, transform_indices = @transform_7, window_bounds = array<i64: 1, 128>}, {transform_indices = @transform_8, window_bounds = array<i64: 128, 128>}]} {
    %c0 = arith.constant 0 : index
    %c0_0 = arith.constant 0 : index
    %0 = vector.load %arg1[%c0, %c0_0] : memref<128x128xf32, #tpu.memory_space<vmem>>, vector<128x128xf32>
    %1 = arith.truncf %0 : vector<128x128xf32> to vector<128x128xbf16>
    %c0_1 = arith.constant 0 : index
    %c0_2 = arith.constant 0 : index
    %2 = vector.load %arg3[%c0_1, %c0_2] : memref<128x384xbf16, #tpu.memory_space<vmem>>, vector<128x384xbf16>
    %cst = arith.constant dense<0.000000e+00> : vector<128x384xf32>
    %3 = tpu.matmul %1, %2, %cst {dimension_numbers = #tpu.dot_dimension_numbers<[1], [0], [0], [1], [0, 0, 1, 1], [], []>} : vector<128x128xbf16>, vector<128x384xbf16>, vector<128x384xf32> -> vector<128x384xf32>
    %c0_3 = arith.constant 0 : index
    %c0_4 = arith.constant 0 : index
    %4 = vector.load %arg4[%c0_3, %c0_4] : memref<1x384xf32, #tpu.memory_space<vmem>>, vector<1x384xf32>
    %5 = vector.broadcast %4 : vector<1x384xf32> to vector<128x384xf32>
    %6 = arith.addf %3, %5 : vector<128x384xf32>
    %7 = arith.index_cast %arg0 : i32 to index
    %c0_5 = arith.constant 0 : index
    %8 = vector.load %arg2[%7, %c0_5] : memref<2x128xf32, #tpu.memory_space<vmem>>, vector<1x128xf32>
    %cst_6 = arith.constant 1.000000e+00 : f32
    %9 = vector.broadcast %cst_6 : f32 to vector<1x128xf32>
    %10 = arith.subf %9, %8 : vector<1x128xf32>
    %cst_7 = arith.constant -1.000000e+04 : f32
    %11 = vector.broadcast %cst_7 : f32 to vector<1x128xf32>
    %12 = arith.mulf %10, %11 : vector<1x128xf32>
    %cst_8 = arith.constant 0.000000e+00 : f32
    %13 = vector.broadcast %cst_8 : f32 to vector<128x128xf32>
    %14 = vector.extract_strided_slice %6 {offsets = [0, 0], sizes = [128, 32], strides = [1, 1]} : vector<128x384xf32> to vector<128x32xf32>
    %15 = arith.truncf %14 : vector<128x32xf32> to vector<128x32xbf16>
    %16 = vector.extract_strided_slice %6 {offsets = [0, 128], sizes = [128, 32], strides = [1, 1]} : vector<128x384xf32> to vector<128x32xf32>
    %17 = arith.truncf %16 : vector<128x32xf32> to vector<128x32xbf16>
    %18 = vector.extract_strided_slice %6 {offsets = [0, 256], sizes = [128, 32], strides = [1, 1]} : vector<128x384xf32> to vector<128x32xf32>
    %19 = arith.truncf %18 : vector<128x32xf32> to vector<128x32xbf16>
    %cst_9 = arith.constant dense<0.000000e+00> : vector<128x128xf32>
    %20 = tpu.matmul %15, %17, %cst_9 {dimension_numbers = #tpu.dot_dimension_numbers<[1], [1], [0], [0], [0, 0, 1, 0], [], []>} : vector<128x32xbf16>, vector<128x32xbf16>, vector<128x128xf32> -> vector<128x128xf32>
    %cst_10 = arith.constant 0.176776692 : f32
    %21 = vector.broadcast %cst_10 : f32 to vector<128x128xf32>
    %22 = arith.mulf %20, %21 : vector<128x128xf32>
    %23 = vector.broadcast %12 : vector<1x128xf32> to vector<128x128xf32>
    %24 = arith.addf %22, %23 : vector<128x128xf32>
    %cst_11 = arith.constant dense<0xFF800000> : vector<128xf32>
    %25 = vector.multi_reduction <maximumf>, %24, %cst_11 [1] : vector<128x128xf32> to vector<128xf32>
    %26 = vector.shape_cast %25 : vector<128xf32> to vector<128x1xf32>
    %27 = vector.broadcast %26 : vector<128x1xf32> to vector<128x128xf32>
    %28 = arith.subf %24, %27 : vector<128x128xf32>
    %29 = math.exp %28 : vector<128x128xf32>
    %cst_12 = arith.constant dense<0.000000e+00> : vector<128xf32>
    %30 = vector.multi_reduction <add>, %29, %cst_12 [1] : vector<128x128xf32> to vector<128xf32>
    %31 = vector.shape_cast %30 : vector<128xf32> to vector<128x1xf32>
    %32 = tpu.reciprocal %31 {approx = true} : vector<128x1xf32> -> vector<128x1xf32>
    %33 = vector.broadcast %32 : vector<128x1xf32> to vector<128x128xf32>
    %34 = arith.mulf %29, %33 : vector<128x128xf32>
    %35 = arith.truncf %34 : vector<128x128xf32> to vector<128x128xbf16>
    %cst_13 = arith.constant dense<0.000000e+00> : vector<128x32xf32>
    %36 = tpu.matmul %35, %19, %cst_13 {dimension_numbers = #tpu.dot_dimension_numbers<[1], [0], [0], [1], [0, 0, 1, 1], [], []>} : vector<128x128xbf16>, vector<128x32xbf16>, vector<128x32xf32> -> vector<128x32xf32>
    %37 = arith.truncf %36 : vector<128x32xf32> to vector<128x32xbf16>
    %c0_14 = arith.constant 0 : index
    %c0_15 = arith.constant 0 : index
    %38 = vector.load %arg5[%c0_14, %c0_15] : memref<128x128xbf16, #tpu.memory_space<vmem>>, vector<32x128xbf16>
    %cst_16 = arith.constant dense<0.000000e+00> : vector<128x128xf32>
    %39 = tpu.matmul %37, %38, %cst_16 {dimension_numbers = #tpu.dot_dimension_numbers<[1], [0], [0], [1], [0, 0, 1, 1], [], []>} : vector<128x32xbf16>, vector<32x128xbf16>, vector<128x128xf32> -> vector<128x128xf32>
    %40 = arith.addf %13, %39 : vector<128x128xf32>
    %41 = vector.extract_strided_slice %6 {offsets = [0, 32], sizes = [128, 32], strides = [1, 1]} : vector<128x384xf32> to vector<128x32xf32>
    %42 = arith.truncf %41 : vector<128x32xf32> to vector<128x32xbf16>
    %43 = vector.extract_strided_slice %6 {offsets = [0, 160], sizes = [128, 32], strides = [1, 1]} : vector<128x384xf32> to vector<128x32xf32>
    %44 = arith.truncf %43 : vector<128x32xf32> to vector<128x32xbf16>
    %45 = vector.extract_strided_slice %6 {offsets = [0, 288], sizes = [128, 32], strides = [1, 1]} : vector<128x384xf32> to vector<128x32xf32>
    %46 = arith.truncf %45 : vector<128x32xf32> to vector<128x32xbf16>
    %cst_17 = arith.constant dense<0.000000e+00> : vector<128x128xf32>
    %47 = tpu.matmul %42, %44, %cst_17 {dimension_numbers = #tpu.dot_dimension_numbers<[1], [1], [0], [0], [0, 0, 1, 0], [], []>} : vector<128x32xbf16>, vector<128x32xbf16>, vector<128x128xf32> -> vector<128x128xf32>
    %cst_18 = arith.constant 0.176776692 : f32
    %48 = vector.broadcast %cst_18 : f32 to vector<128x128xf32>
    %49 = arith.mulf %47, %48 : vector<128x128xf32>
    %50 = vector.broadcast %12 : vector<1x128xf32> to vector<128x128xf32>
    %51 = arith.addf %49, %50 : vector<128x128xf32>
    %cst_19 = arith.constant dense<0xFF800000> : vector<128xf32>
    %52 = vector.multi_reduction <maximumf>, %51, %cst_19 [1] : vector<128x128xf32> to vector<128xf32>
    %53 = vector.shape_cast %52 : vector<128xf32> to vector<128x1xf32>
    %54 = vector.broadcast %53 : vector<128x1xf32> to vector<128x128xf32>
    %55 = arith.subf %51, %54 : vector<128x128xf32>
    %56 = math.exp %55 : vector<128x128xf32>
    %cst_20 = arith.constant dense<0.000000e+00> : vector<128xf32>
    %57 = vector.multi_reduction <add>, %56, %cst_20 [1] : vector<128x128xf32> to vector<128xf32>
    %58 = vector.shape_cast %57 : vector<128xf32> to vector<128x1xf32>
    %59 = tpu.reciprocal %58 {approx = true} : vector<128x1xf32> -> vector<128x1xf32>
    %60 = vector.broadcast %59 : vector<128x1xf32> to vector<128x128xf32>
    %61 = arith.mulf %56, %60 : vector<128x128xf32>
    %62 = arith.truncf %61 : vector<128x128xf32> to vector<128x128xbf16>
    %cst_21 = arith.constant dense<0.000000e+00> : vector<128x32xf32>
    %63 = tpu.matmul %62, %46, %cst_21 {dimension_numbers = #tpu.dot_dimension_numbers<[1], [0], [0], [1], [0, 0, 1, 1], [], []>} : vector<128x128xbf16>, vector<128x32xbf16>, vector<128x32xf32> -> vector<128x32xf32>
    %64 = arith.truncf %63 : vector<128x32xf32> to vector<128x32xbf16>
    %c32 = arith.constant 32 : index
    %c0_22 = arith.constant 0 : index
    %65 = vector.load %arg5[%c32, %c0_22] : memref<128x128xbf16, #tpu.memory_space<vmem>>, vector<32x128xbf16>
    %cst_23 = arith.constant dense<0.000000e+00> : vector<128x128xf32>
    %66 = tpu.matmul %64, %65, %cst_23 {dimension_numbers = #tpu.dot_dimension_numbers<[1], [0], [0], [1], [0, 0, 1, 1], [], []>} : vector<128x32xbf16>, vector<32x128xbf16>, vector<128x128xf32> -> vector<128x128xf32>
    %67 = arith.addf %40, %66 : vector<128x128xf32>
    %68 = vector.extract_strided_slice %6 {offsets = [0, 64], sizes = [128, 32], strides = [1, 1]} : vector<128x384xf32> to vector<128x32xf32>
    %69 = arith.truncf %68 : vector<128x32xf32> to vector<128x32xbf16>
    %70 = vector.extract_strided_slice %6 {offsets = [0, 192], sizes = [128, 32], strides = [1, 1]} : vector<128x384xf32> to vector<128x32xf32>
    %71 = arith.truncf %70 : vector<128x32xf32> to vector<128x32xbf16>
    %72 = vector.extract_strided_slice %6 {offsets = [0, 320], sizes = [128, 32], strides = [1, 1]} : vector<128x384xf32> to vector<128x32xf32>
    %73 = arith.truncf %72 : vector<128x32xf32> to vector<128x32xbf16>
    %cst_24 = arith.constant dense<0.000000e+00> : vector<128x128xf32>
    %74 = tpu.matmul %69, %71, %cst_24 {dimension_numbers = #tpu.dot_dimension_numbers<[1], [1], [0], [0], [0, 0, 1, 0], [], []>} : vector<128x32xbf16>, vector<128x32xbf16>, vector<128x128xf32> -> vector<128x128xf32>
    %cst_25 = arith.constant 0.176776692 : f32
    %75 = vector.broadcast %cst_25 : f32 to vector<128x128xf32>
    %76 = arith.mulf %74, %75 : vector<128x128xf32>
    %77 = vector.broadcast %12 : vector<1x128xf32> to vector<128x128xf32>
    %78 = arith.addf %76, %77 : vector<128x128xf32>
    %cst_26 = arith.constant dense<0xFF800000> : vector<128xf32>
    %79 = vector.multi_reduction <maximumf>, %78, %cst_26 [1] : vector<128x128xf32> to vector<128xf32>
    %80 = vector.shape_cast %79 : vector<128xf32> to vector<128x1xf32>
    %81 = vector.broadcast %80 : vector<128x1xf32> to vector<128x128xf32>
    %82 = arith.subf %78, %81 : vector<128x128xf32>
    %83 = math.exp %82 : vector<128x128xf32>
    %cst_27 = arith.constant dense<0.000000e+00> : vector<128xf32>
    %84 = vector.multi_reduction <add>, %83, %cst_27 [1] : vector<128x128xf32> to vector<128xf32>
    %85 = vector.shape_cast %84 : vector<128xf32> to vector<128x1xf32>
    %86 = tpu.reciprocal %85 {approx = true} : vector<128x1xf32> -> vector<128x1xf32>
    %87 = vector.broadcast %86 : vector<128x1xf32> to vector<128x128xf32>
    %88 = arith.mulf %83, %87 : vector<128x128xf32>
    %89 = arith.truncf %88 : vector<128x128xf32> to vector<128x128xbf16>
    %cst_28 = arith.constant dense<0.000000e+00> : vector<128x32xf32>
    %90 = tpu.matmul %89, %73, %cst_28 {dimension_numbers = #tpu.dot_dimension_numbers<[1], [0], [0], [1], [0, 0, 1, 1], [], []>} : vector<128x128xbf16>, vector<128x32xbf16>, vector<128x32xf32> -> vector<128x32xf32>
    %91 = arith.truncf %90 : vector<128x32xf32> to vector<128x32xbf16>
    %c64 = arith.constant 64 : index
    %c0_29 = arith.constant 0 : index
    %92 = vector.load %arg5[%c64, %c0_29] : memref<128x128xbf16, #tpu.memory_space<vmem>>, vector<32x128xbf16>
    %cst_30 = arith.constant dense<0.000000e+00> : vector<128x128xf32>
    %93 = tpu.matmul %91, %92, %cst_30 {dimension_numbers = #tpu.dot_dimension_numbers<[1], [0], [0], [1], [0, 0, 1, 1], [], []>} : vector<128x32xbf16>, vector<32x128xbf16>, vector<128x128xf32> -> vector<128x128xf32>
    %94 = arith.addf %67, %93 : vector<128x128xf32>
    %95 = vector.extract_strided_slice %6 {offsets = [0, 96], sizes = [128, 32], strides = [1, 1]} : vector<128x384xf32> to vector<128x32xf32>
    %96 = arith.truncf %95 : vector<128x32xf32> to vector<128x32xbf16>
    %97 = vector.extract_strided_slice %6 {offsets = [0, 224], sizes = [128, 32], strides = [1, 1]} : vector<128x384xf32> to vector<128x32xf32>
    %98 = arith.truncf %97 : vector<128x32xf32> to vector<128x32xbf16>
    %99 = vector.extract_strided_slice %6 {offsets = [0, 352], sizes = [128, 32], strides = [1, 1]} : vector<128x384xf32> to vector<128x32xf32>
    %100 = arith.truncf %99 : vector<128x32xf32> to vector<128x32xbf16>
    %cst_31 = arith.constant dense<0.000000e+00> : vector<128x128xf32>
    %101 = tpu.matmul %96, %98, %cst_31 {dimension_numbers = #tpu.dot_dimension_numbers<[1], [1], [0], [0], [0, 0, 1, 0], [], []>} : vector<128x32xbf16>, vector<128x32xbf16>, vector<128x128xf32> -> vector<128x128xf32>
    %cst_32 = arith.constant 0.176776692 : f32
    %102 = vector.broadcast %cst_32 : f32 to vector<128x128xf32>
    %103 = arith.mulf %101, %102 : vector<128x128xf32>
    %104 = vector.broadcast %12 : vector<1x128xf32> to vector<128x128xf32>
    %105 = arith.addf %103, %104 : vector<128x128xf32>
    %cst_33 = arith.constant dense<0xFF800000> : vector<128xf32>
    %106 = vector.multi_reduction <maximumf>, %105, %cst_33 [1] : vector<128x128xf32> to vector<128xf32>
    %107 = vector.shape_cast %106 : vector<128xf32> to vector<128x1xf32>
    %108 = vector.broadcast %107 : vector<128x1xf32> to vector<128x128xf32>
    %109 = arith.subf %105, %108 : vector<128x128xf32>
    %110 = math.exp %109 : vector<128x128xf32>
    %cst_34 = arith.constant dense<0.000000e+00> : vector<128xf32>
    %111 = vector.multi_reduction <add>, %110, %cst_34 [1] : vector<128x128xf32> to vector<128xf32>
    %112 = vector.shape_cast %111 : vector<128xf32> to vector<128x1xf32>
    %113 = tpu.reciprocal %112 {approx = true} : vector<128x1xf32> -> vector<128x1xf32>
    %114 = vector.broadcast %113 : vector<128x1xf32> to vector<128x128xf32>
    %115 = arith.mulf %110, %114 : vector<128x128xf32>
    %116 = arith.truncf %115 : vector<128x128xf32> to vector<128x128xbf16>
    %cst_35 = arith.constant dense<0.000000e+00> : vector<128x32xf32>
    %117 = tpu.matmul %116, %100, %cst_35 {dimension_numbers = #tpu.dot_dimension_numbers<[1], [0], [0], [1], [0, 0, 1, 1], [], []>} : vector<128x128xbf16>, vector<128x32xbf16>, vector<128x32xf32> -> vector<128x32xf32>
    %118 = arith.truncf %117 : vector<128x32xf32> to vector<128x32xbf16>
    %c96 = arith.constant 96 : index
    %c0_36 = arith.constant 0 : index
    %119 = vector.load %arg5[%c96, %c0_36] : memref<128x128xbf16, #tpu.memory_space<vmem>>, vector<32x128xbf16>
    %cst_37 = arith.constant dense<0.000000e+00> : vector<128x128xf32>
    %120 = tpu.matmul %118, %119, %cst_37 {dimension_numbers = #tpu.dot_dimension_numbers<[1], [0], [0], [1], [0, 0, 1, 1], [], []>} : vector<128x32xbf16>, vector<32x128xbf16>, vector<128x128xf32> -> vector<128x128xf32>
    %121 = arith.addf %94, %120 : vector<128x128xf32>
    %c0_38 = arith.constant 0 : index
    %c0_39 = arith.constant 0 : index
    %122 = vector.load %arg6[%c0_38, %c0_39] : memref<1x128xf32, #tpu.memory_space<vmem>>, vector<1x128xf32>
    %123 = vector.broadcast %122 : vector<1x128xf32> to vector<128x128xf32>
    %124 = arith.addf %121, %123 : vector<128x128xf32>
    %125 = arith.addf %124, %0 : vector<128x128xf32>
    %c0_40 = arith.constant 0 : index
    %c0_41 = arith.constant 0 : index
    %126 = vector.load %arg7[%c0_40, %c0_41] : memref<1x128xf32, #tpu.memory_space<vmem>>, vector<1x128xf32>
    %c0_42 = arith.constant 0 : index
    %c0_43 = arith.constant 0 : index
    %127 = vector.load %arg8[%c0_42, %c0_43] : memref<1x128xf32, #tpu.memory_space<vmem>>, vector<1x128xf32>
    %cst_44 = arith.constant dense<0.000000e+00> : vector<128xf32>
    %128 = vector.multi_reduction <add>, %125, %cst_44 [1] : vector<128x128xf32> to vector<128xf32>
    %129 = vector.shape_cast %128 : vector<128xf32> to vector<128x1xf32>
    %cst_45 = arith.constant 1.280000e+02 : f32
    %130 = vector.broadcast %cst_45 : f32 to vector<128x1xf32>
    %131 = arith.divf %129, %130 : vector<128x1xf32>
    %132 = vector.broadcast %131 : vector<128x1xf32> to vector<128x128xf32>
    %133 = arith.subf %125, %132 : vector<128x128xf32>
    %134 = vector.broadcast %131 : vector<128x1xf32> to vector<128x128xf32>
    %135 = arith.subf %125, %134 : vector<128x128xf32>
    %136 = arith.mulf %133, %135 : vector<128x128xf32>
    %cst_46 = arith.constant dense<0.000000e+00> : vector<128xf32>
    %137 = vector.multi_reduction <add>, %136, %cst_46 [1] : vector<128x128xf32> to vector<128xf32>
    %138 = vector.shape_cast %137 : vector<128xf32> to vector<128x1xf32>
    %cst_47 = arith.constant 1.280000e+02 : f32
    %139 = vector.broadcast %cst_47 : f32 to vector<128x1xf32>
    %140 = arith.divf %138, %139 : vector<128x1xf32>
    %141 = vector.broadcast %131 : vector<128x1xf32> to vector<128x128xf32>
    %142 = arith.subf %125, %141 : vector<128x128xf32>
    %cst_48 = arith.constant 9.99999996E-13 : f32
    %143 = vector.broadcast %cst_48 : f32 to vector<128x1xf32>
    %144 = arith.addf %140, %143 : vector<128x1xf32>
    %145 = math.rsqrt %144 : vector<128x1xf32>
    %146 = vector.broadcast %145 : vector<128x1xf32> to vector<128x128xf32>
    %147 = arith.mulf %142, %146 : vector<128x128xf32>
    %148 = vector.broadcast %126 : vector<1x128xf32> to vector<128x128xf32>
    %149 = arith.mulf %147, %148 : vector<128x128xf32>
    %150 = vector.broadcast %127 : vector<1x128xf32> to vector<128x128xf32>
    %151 = arith.addf %149, %150 : vector<128x128xf32>
    %c0_49 = arith.constant 0 : index
    %c0_50 = arith.constant 0 : index
    %152 = vector.load %arg9[%c0_49, %c0_50] : memref<128x128xf32, #tpu.memory_space<vmem>>, vector<128x128xf32>
    tpu.vector_store %arg9[%c0_49, %c0_50], %151 {strides = array<i32>} : memref<128x128xf32, #tpu.memory_space<vmem>>, vector<128x128xf32>,
    return
  }
  func.func @transform_0(%arg0: i32) -> (i32, i32) {
    %c0_i32 = arith.constant 0 : i32
    %c0_i32_0 = arith.constant 0 : i32
    return %arg0, %c0_i32 : i32, i32
  }
  func.func @transform_1(%arg0: i32) -> (i32, i32) {
    %c0_i32 = arith.constant 0 : i32
    %c0_i32_0 = arith.constant 0 : i32
    %c0_i32_1 = arith.constant 0 : i32
    return %c0_i32, %c0_i32_0 : i32, i32
  }
  func.func @transform_2(%arg0: i32) -> (i32, i32) {
    %c0_i32 = arith.constant 0 : i32
    %c0_i32_0 = arith.constant 0 : i32
    %c0_i32_1 = arith.constant 0 : i32
    return %c0_i32, %c0_i32_0 : i32, i32
  }
  func.func @transform_3(%arg0: i32) -> (i32, i32) {
    %c0_i32 = arith.constant 0 : i32
    %c0_i32_0 = arith.constant 0 : i32
    %c0_i32_1 = arith.constant 0 : i32
    return %c0_i32, %c0_i32_0 : i32, i32
  }
  func.func @transform_4(%arg0: i32) -> (i32, i32) {
    %c0_i32 = arith.constant 0 : i32
    %c0_i32_0 = arith.constant 0 : i32
    %c0_i32_1 = arith.constant 0 : i32
    return %c0_i32, %c0_i32_0 : i32, i32
  }
  func.func @transform_5(%arg0: i32) -> (i32, i32) {
    %c0_i32 = arith.constant 0 : i32
    %c0_i32_0 = arith.constant 0 : i32
    %c0_i32_1 = arith.constant 0 : i32
    return %c0_i32, %c0_i32_0 : i32, i32
  }
  func.func @transform_6(%arg0: i32) -> (i32, i32) {
    %c0_i32 = arith.constant 0 : i32
    %c0_i32_0 = arith.constant 0 : i32
    %c0_i32_1 = arith.constant 0 : i32
    return %c0_i32, %c0_i32_0 : i32, i32
  }
  func.func @transform_7(%arg0: i32) -> (i32, i32) {
    %c0_i32 = arith.constant 0 : i32
    %c0_i32_0 = arith.constant 0 : i32
    %c0_i32_1 = arith.constant 0 : i32
    return %c0_i32, %c0_i32_0 : i32, i32
  }
  func.func @transform_8(%arg0: i32) -> (i32, i32) {
    %c0_i32 = arith.constant 0 : i32
    %c0_i32_0 = arith.constant 0 : i32
    return %arg0, %c0_i32 : i32, i32
  }
}

module attributes {stable_mosaic.version = 11 : i64} {
  func.func @_ffn_block_kernel(%arg0: i32, %arg1: memref<128x128xf32, #tpu.memory_space<vmem>>, %arg2: memref<128x512xbf16, #tpu.memory_space<vmem>>, %arg3: memref<1x512xf32, #tpu.memory_space<vmem>>, %arg4: memref<512x128xbf16, #tpu.memory_space<vmem>>, %arg5: memref<1x128xf32, #tpu.memory_space<vmem>>, %arg6: memref<1x128xf32, #tpu.memory_space<vmem>>, %arg7: memref<1x128xf32, #tpu.memory_space<vmem>>, %arg8: memref<128x128xf32, #tpu.memory_space<vmem>>) attributes {dimension_semantics = [#tpu.dimension_semantics<parallel>], iteration_bounds = array<i64: 2>, scalar_prefetch = 0 : i64, scratch_operands = 0 : i64, tpu.core_type = #tpu.core_type<tc>, window_params = [{transform_indices = @transform_0, window_bounds = array<i64: 128, 128>}, {pipeline_mode = #tpu.pipeline_mode<synchronous>, transform_indices = @transform_1, window_bounds = array<i64: 128, 512>}, {pipeline_mode = #tpu.pipeline_mode<synchronous>, transform_indices = @transform_2, window_bounds = array<i64: 1, 512>}, {pipeline_mode = #tpu.pipeline_mode<synchronous>, transform_indices = @transform_3, window_bounds = array<i64: 512, 128>}, {pipeline_mode = #tpu.pipeline_mode<synchronous>, transform_indices = @transform_4, window_bounds = array<i64: 1, 128>}, {pipeline_mode = #tpu.pipeline_mode<synchronous>, transform_indices = @transform_5, window_bounds = array<i64: 1, 128>}, {pipeline_mode = #tpu.pipeline_mode<synchronous>, transform_indices = @transform_6, window_bounds = array<i64: 1, 128>}, {transform_indices = @transform_7, window_bounds = array<i64: 128, 128>}]} {
    %c0 = arith.constant 0 : index
    %c0_0 = arith.constant 0 : index
    %0 = vector.load %arg1[%c0, %c0_0] : memref<128x128xf32, #tpu.memory_space<vmem>>, vector<128x128xf32>
    %1 = arith.truncf %0 : vector<128x128xf32> to vector<128x128xbf16>
    %c0_1 = arith.constant 0 : index
    %c0_2 = arith.constant 0 : index
    %2 = vector.load %arg2[%c0_1, %c0_2] : memref<128x512xbf16, #tpu.memory_space<vmem>>, vector<128x512xbf16>
    %cst = arith.constant dense<0.000000e+00> : vector<128x512xf32>
    %3 = tpu.matmul %1, %2, %cst {dimension_numbers = #tpu.dot_dimension_numbers<[1], [0], [0], [1], [0, 0, 1, 1], [], []>} : vector<128x128xbf16>, vector<128x512xbf16>, vector<128x512xf32> -> vector<128x512xf32>
    %c0_3 = arith.constant 0 : index
    %c0_4 = arith.constant 0 : index
    %4 = vector.load %arg3[%c0_3, %c0_4] : memref<1x512xf32, #tpu.memory_space<vmem>>, vector<1x512xf32>
    %5 = vector.broadcast %4 : vector<1x512xf32> to vector<128x512xf32>
    %6 = arith.addf %3, %5 : vector<128x512xf32>
    %cst_5 = arith.constant 5.000000e-01 : f32
    %7 = vector.broadcast %cst_5 : f32 to vector<128x512xf32>
    %8 = arith.mulf %7, %6 : vector<128x512xf32>
    %cst_6 = arith.constant 0.707106769 : f32
    %9 = vector.broadcast %cst_6 : f32 to vector<128x512xf32>
    %10 = arith.mulf %6, %9 : vector<128x512xf32>
    %11 = math.erf %10 : vector<128x512xf32>
    %cst_7 = arith.constant 1.000000e+00 : f32
    %12 = vector.broadcast %cst_7 : f32 to vector<128x512xf32>
    %13 = arith.addf %12, %11 : vector<128x512xf32>
    %14 = arith.mulf %8, %13 : vector<128x512xf32>
    %15 = arith.truncf %14 : vector<128x512xf32> to vector<128x512xbf16>
    %c0_8 = arith.constant 0 : index
    %c0_9 = arith.constant 0 : index
    %16 = vector.load %arg4[%c0_8, %c0_9] : memref<512x128xbf16, #tpu.memory_space<vmem>>, vector<512x128xbf16>
    %cst_10 = arith.constant dense<0.000000e+00> : vector<128x128xf32>
    %17 = tpu.matmul %15, %16, %cst_10 {dimension_numbers = #tpu.dot_dimension_numbers<[1], [0], [0], [1], [0, 0, 1, 1], [], []>} : vector<128x512xbf16>, vector<512x128xbf16>, vector<128x128xf32> -> vector<128x128xf32>
    %c0_11 = arith.constant 0 : index
    %c0_12 = arith.constant 0 : index
    %18 = vector.load %arg5[%c0_11, %c0_12] : memref<1x128xf32, #tpu.memory_space<vmem>>, vector<1x128xf32>
    %19 = vector.broadcast %18 : vector<1x128xf32> to vector<128x128xf32>
    %20 = arith.addf %17, %19 : vector<128x128xf32>
    %21 = arith.addf %20, %0 : vector<128x128xf32>
    %c0_13 = arith.constant 0 : index
    %c0_14 = arith.constant 0 : index
    %22 = vector.load %arg6[%c0_13, %c0_14] : memref<1x128xf32, #tpu.memory_space<vmem>>, vector<1x128xf32>
    %c0_15 = arith.constant 0 : index
    %c0_16 = arith.constant 0 : index
    %23 = vector.load %arg7[%c0_15, %c0_16] : memref<1x128xf32, #tpu.memory_space<vmem>>, vector<1x128xf32>
    %cst_17 = arith.constant dense<0.000000e+00> : vector<128xf32>
    %24 = vector.multi_reduction <add>, %21, %cst_17 [1] : vector<128x128xf32> to vector<128xf32>
    %25 = vector.shape_cast %24 : vector<128xf32> to vector<128x1xf32>
    %cst_18 = arith.constant 1.280000e+02 : f32
    %26 = vector.broadcast %cst_18 : f32 to vector<128x1xf32>
    %27 = arith.divf %25, %26 : vector<128x1xf32>
    %28 = vector.broadcast %27 : vector<128x1xf32> to vector<128x128xf32>
    %29 = arith.subf %21, %28 : vector<128x128xf32>
    %30 = vector.broadcast %27 : vector<128x1xf32> to vector<128x128xf32>
    %31 = arith.subf %21, %30 : vector<128x128xf32>
    %32 = arith.mulf %29, %31 : vector<128x128xf32>
    %cst_19 = arith.constant dense<0.000000e+00> : vector<128xf32>
    %33 = vector.multi_reduction <add>, %32, %cst_19 [1] : vector<128x128xf32> to vector<128xf32>
    %34 = vector.shape_cast %33 : vector<128xf32> to vector<128x1xf32>
    %cst_20 = arith.constant 1.280000e+02 : f32
    %35 = vector.broadcast %cst_20 : f32 to vector<128x1xf32>
    %36 = arith.divf %34, %35 : vector<128x1xf32>
    %37 = vector.broadcast %27 : vector<128x1xf32> to vector<128x128xf32>
    %38 = arith.subf %21, %37 : vector<128x128xf32>
    %cst_21 = arith.constant 9.99999996E-13 : f32
    %39 = vector.broadcast %cst_21 : f32 to vector<128x1xf32>
    %40 = arith.addf %36, %39 : vector<128x1xf32>
    %41 = math.rsqrt %40 : vector<128x1xf32>
    %42 = vector.broadcast %41 : vector<128x1xf32> to vector<128x128xf32>
    %43 = arith.mulf %38, %42 : vector<128x128xf32>
    %44 = vector.broadcast %22 : vector<1x128xf32> to vector<128x128xf32>
    %45 = arith.mulf %43, %44 : vector<128x128xf32>
    %46 = vector.broadcast %23 : vector<1x128xf32> to vector<128x128xf32>
    %47 = arith.addf %45, %46 : vector<128x128xf32>
    %c0_22 = arith.constant 0 : index
    %c0_23 = arith.constant 0 : index
    %48 = vector.load %arg8[%c0_22, %c0_23] : memref<128x128xf32, #tpu.memory_space<vmem>>, vector<128x128xf32>
    tpu.vector_store %arg8[%c0_22, %c0_23], %47 {strides = array<i32>} : memref<128x128xf32, #tpu.memory_space<vmem>>, vector<128x128xf32>,
    return
  }
  func.func @transform_0(%arg0: i32) -> (i32, i32) {
    %c0_i32 = arith.constant 0 : i32
    %c0_i32_0 = arith.constant 0 : i32
    return %arg0, %c0_i32 : i32, i32
  }
  func.func @transform_1(%arg0: i32) -> (i32, i32) {
    %c0_i32 = arith.constant 0 : i32
    %c0_i32_0 = arith.constant 0 : i32
    %c0_i32_1 = arith.constant 0 : i32
    return %c0_i32, %c0_i32_0 : i32, i32
  }
  func.func @transform_2(%arg0: i32) -> (i32, i32) {
    %c0_i32 = arith.constant 0 : i32
    %c0_i32_0 = arith.constant 0 : i32
    %c0_i32_1 = arith.constant 0 : i32
    return %c0_i32, %c0_i32_0 : i32, i32
  }
  func.func @transform_3(%arg0: i32) -> (i32, i32) {
    %c0_i32 = arith.constant 0 : i32
    %c0_i32_0 = arith.constant 0 : i32
    %c0_i32_1 = arith.constant 0 : i32
    return %c0_i32, %c0_i32_0 : i32, i32
  }
  func.func @transform_4(%arg0: i32) -> (i32, i32) {
    %c0_i32 = arith.constant 0 : i32
    %c0_i32_0 = arith.constant 0 : i32
    %c0_i32_1 = arith.constant 0 : i32
    return %c0_i32, %c0_i32_0 : i32, i32
  }
  func.func @transform_5(%arg0: i32) -> (i32, i32) {
    %c0_i32 = arith.constant 0 : i32
    %c0_i32_0 = arith.constant 0 : i32
    %c0_i32_1 = arith.constant 0 : i32
    return %c0_i32, %c0_i32_0 : i32, i32
  }
  func.func @transform_6(%arg0: i32) -> (i32, i32) {
    %c0_i32 = arith.constant 0 : i32
    %c0_i32_0 = arith.constant 0 : i32
    %c0_i32_1 = arith.constant 0 : i32
    return %c0_i32, %c0_i32_0 : i32, i32
  }
  func.func @transform_7(%arg0: i32) -> (i32, i32) {
    %c0_i32 = arith.constant 0 : i32
    %c0_i32_0 = arith.constant 0 : i32
    return %arg0, %c0_i32 : i32, i32
  }
}

</mosaic_0001>

<llo_original>
// kernel: bert_forward.5
$region0: #{bert_forward.5}
  #allocation0 [shape = 'u32[]', space=smem, size = 0x4, offset = 0x4, fixed_abs, tag = 'smem constant byte address 0x4 - core index']
  #allocation1 [shape = 'u32[144,128]{1,0:T(1,128)}', space=vmem, size = 0x12000, scoped, tag = 'internal scratch']
  %s0 = inlined_call_operand.vmem [shape: f32[256,128], index: 0, kind: input, shape index: {}]
  %s1 = inlined_call_operand.vmem [shape: f32[1,128], index: 1, kind: input, shape index: {}]
  %s2 = inlined_call_operand.vmem [shape: f32[1,128], index: 2, kind: input, shape index: {}]
  %s3 = inlined_call_operand.vmem [shape: f32[256,128], index: 3, kind: output, shape index: {}]
  %s4 = sld [smem:[#allocation0]]
  $region45: #{bert_forward.5} parent=0
    _
  %s6 = ssub.s32 1, %s4
  %s7 = scalar_select 0, %s6, %s4
  loop: start=0, step=1, limit=4
  $region2: #{bert_forward.5} parent=0 // loop_pre_header
    _
  $region3: #{bert_forward.5} parent=0 // loop_header
    %s9 = sphi 0, %s13
    %p10 = scmp.ge.s32.totalorder %s9, 4
    %s19 = sphi 0, %s21
    %s22 = sphi 0, %s19
    %s23 = sphi 0, %s22
    %s39 = sphi 0, %s23
    %s43 = sphi 0, %s43
    %s45 = sphi 0, %s43
    %s46 = sphi 0, %s45
    %s60 = sphi 0, %s46
    %s64 = sphi 0, %s64
    %s66 = sphi 0, %s64
    %s67 = sphi 0, %s66
    %s81 = sphi 0, %s67
    %s87 = sphi 0, %s89
    %s90 = sphi 0, %s87
    %s91 = sphi 0, %s90
    %s107 = sphi 0, %s91
  $region4: #{bert_forward.5} parent=0 // loop_header_branch
    %12 = sbr.rel (%p10) target = $region8
  $region5: #{bert_forward.5} parent=0 // loop_body
    %s14 = ssub.s32 %s9, 1
    %s15 = ssub.s32 %s9, 2
    %s16 = sadd.s32 %s9, 1
    %s17 = ssub.s32 %s9, %s16
    %p18 = scmp.eq.s32.totalorder %s17, 0
    %s20 = sadd.s32 %s19, 1
    %s21 = scalar_select %p18, %s19, %s20
    %p24 = pneg %p18
    %p25 = scmp.eq.s32.totalorder %s9, 1
    %p26 = por %p24, %p25
    %p27 = scmp.ne.s32.totalorder %s19, %s22
    %p28 = scmp.eq.s32.totalorder %s9, 0
    %p29 = por %p27, %p28
    %p30 = scmp.ne.s32.totalorder %s19, %s22
    %p31 = scmp.eq.s32.totalorder %s14, 1
    %p32 = por %p30, %p31
    %p33 = scmp.ne.s32.totalorder %s22, %s23
    %p34 = scmp.eq.s32.totalorder %s14, 0
    %p35 = por %p33, %p34
    %p36 = scmp.ne.s32.totalorder %s22, %s23
    %p37 = scmp.eq.s32.totalorder %s15, 1
    %p38 = por %p36, %p37
    %p40 = scmp.ne.s32.totalorder %s23, %s39
    %p41 = scmp.eq.s32.totalorder %s15, 0
    %p42 = por %p40, %p41
    %s44 = sadd.s32 %s43, 1
    %p47 = scmp.eq.s32.totalorder %s9, 1
    %p48 = scmp.ne.s32.totalorder %s43, %s45
    %p49 = scmp.eq.s32.totalorder %s9, 0
    %p50 = por %p48, %p49
    %p51 = scmp.ne.s32.totalorder %s43, %s45
    %p52 = scmp.eq.s32.totalorder %s14, 1
    %p53 = por %p51, %p52
    %p54 = scmp.ne.s32.totalorder %s45, %s46
    %p55 = scmp.eq.s32.totalorder %s14, 0
    %p56 = por %p54, %p55
    %p57 = scmp.ne.s32.totalorder %s45, %s46
    %p58 = scmp.eq.s32.totalorder %s15, 1
    %p59 = por %p57, %p58
    %p61 = scmp.ne.s32.totalorder %s46, %s60
    %p62 = scmp.eq.s32.totalorder %s15, 0
    %p63 = por %p61, %p62
    %s65 = sadd.s32 %s64, 1
    %p68 = scmp.eq.s32.totalorder %s9, 1
    %p69 = scmp.ne.s32.totalorder %s64, %s66
    %p70 = scmp.eq.s32.totalorder %s9, 0
    %p71 = por %p69, %p70
    %p72 = scmp.ne.s32.totalorder %s64, %s66
    %p73 = scmp.eq.s32.totalorder %s14, 1
    %p74 = por %p72, %p73
    %p75 = scmp.ne.s32.totalorder %s66, %s67
    %p76 = scmp.eq.s32.totalorder %s14, 0
    %p77 = por %p75, %p76
    %p78 = scmp.ne.s32.totalorder %s66, %s67
    %p79 = scmp.eq.s32.totalorder %s15, 1
    %p80 = por %p78, %p79
    %p82 = scmp.ne.s32.totalorder %s67, %s81
    %p83 = scmp.eq.s32.totalorder %s15, 0
    %p84 = por %p82, %p83
    %s85 = ssub.s32 %s9, %s16
    %p86 = scmp.eq.s32.totalorder %s85, 0
    %s88 = sadd.s32 %s87, 1
    %s89 = scalar_select %p86, %s87, %s88
    %p92 = pneg %p86
    %p93 = scmp.eq.s32.totalorder %s9, 1
    %p94 = por %p92, %p93
    %p95 = scmp.ne.s32.totalorder %s87, %s90
    %p96 = scmp.eq.s32.totalorder %s9, 0
    %p97 = por %p95, %p96
    %p98 = scmp.ne.s32.totalorder %s87, %s90
    %p99 = scmp.eq.s32.totalorder %s14, 1
    %p100 = por %p98, %p99
    %p101 = scmp.ne.s32.totalorder %s90, %s91
    %p102 = scmp.eq.s32.totalorder %s14, 0
    %p103 = por %p101, %p102
    %p104 = scmp.ne.s32.totalorder %s90, %s91
    %p105 = scmp.eq.s32.totalorder %s15, 1
    %p106 = por %p104, %p105
    %p108 = scmp.ne.s32.totalorder %s91, %s107
    %p109 = scmp.eq.s32.totalorder %s15, 0
    %p110 = por %p108, %p109
    %p111 = scmp.le.s32.totalorder 1, %s9
    %p112 = scmp.lt.s32.totalorder %s9, 3
    %p113 = pnand %p111, %p112
    %p114 = pneg %p113
    // Predicated region
    $region9: #{bert_forward.5} parent=5 // pred_check
      _
    $region10: #{bert_forward.5} parent=5 // pred_check_branch
      %116 = sbr.rel (%p113) target = $region12
    $region11: #{bert_forward.5} parent=5 // pred_region
      %s117 = ssub.s32 %s9, 1
      // Predicated region
      $region13: #{bert_forward.5} parent=11 // pred_check
        %p118 = pneg %p56
      $region14: #{bert_forward.5} parent=11 // pred_check_branch
        %120 = sbr.rel (%p118) target = $region16
      $region15: #{bert_forward.5} parent=11 // pred_region
        _
      $region16: #{bert_forward.5} parent=11 // pred_fallthru
        _
      // Predicated region
      $region17: #{bert_forward.5} parent=11 // pred_check
        %p121 = pneg %p77
      $region18: #{bert_forward.5} parent=11 // pred_check_branch
        %123 = sbr.rel (%p121) target = $region20
      $region19: #{bert_forward.5} parent=11 // pred_region
        _
      $region20: #{bert_forward.5} parent=11 // pred_fallthru
        _
    $region12: #{bert_forward.5} parent=5 // pred_fallthru
      _
    %p124 = scmp.lt.s32.totalorder %s9, 2
    // Predicated region
    $region21: #{bert_forward.5} parent=5 // pred_check
      %p125 = pneg %p124
    $region22: #{bert_forward.5} parent=5 // pred_check_branch
      %127 = sbr.rel (%p125) target = $region24
    $region23: #{bert_forward.5} parent=5 // pred_region
      // Predicated region
      $region25: #{bert_forward.5} parent=23 // pred_check
        %p128 = pneg %p29
      $region26: #{bert_forward.5} parent=23 // pred_check_branch
        %130 = sbr.rel (%p128) target = $region28
      $region27: #{bert_forward.5} parent=23 // pred_region
        %s131 = smul.u32 16, %s9
        %p132 = scmp.lt.s32.totalorder %s131, 31
        %s133 = scalar_select %p132, %s131, 31
        %s134 = smul.addr %s133, 8
        %s135 = scalar_lea.vmem %s0, %s134
        %s136 = smul.u32 16, %s9
      $region28: #{bert_forward.5} parent=23 // pred_fallthru
        _
    $region24: #{bert_forward.5} parent=5 // pred_fallthru
      _
    %p137 = scmp.le.s32.totalorder 1, %s9
    %p138 = scmp.lt.s32.totalorder %s9, 3
    %p139 = pnand %p137, %p138
    %p140 = pneg %p139
    // Predicated region
    $region29: #{bert_forward.5} parent=5 // pred_check
      _
    $region30: #{bert_forward.5} parent=5 // pred_check_branch
      %142 = sbr.rel (%p139) target = $region32
    $region31: #{bert_forward.5} parent=5 // pred_region
      %s143 = ssub.s32 %s9, 1
      %s144 = smul.u32 16, %s14
      %p145 = scmp.lt.s32.totalorder %s144, 31
      %s146 = scalar_select %p145, %s144, 31
      %s147 = smul.addr %s146, 8
      %s148 = scalar_lea.vmem %s0, %s147
      %p149 = pneg %p35
      %p150 = pneg %p32
      %p151 = pneg %p56
      %p152 = pneg %p53
      %p153 = pneg %p77
      %p154 = pneg %p74
      %p155 = pneg %p103
      %p156 = pneg %p100
      %s157 = smul.u32 16, %s14
      %p158 = scmp.lt.s32.totalorder %s157, 31
      %s159 = scalar_select %p158, %s157, 31
      %s160 = smul.addr %s159, 8
      %s161 = scalar_lea.vmem %s3, %s160
      %s162 = smul.u32 16, %s14
      %p163 = scmp.lt.s32.totalorder %s162, 31
      %s164 = scalar_select %p163, %s162, 31
      %s165 = smul.addr %s164, 8
      %s166 = scalar_lea.vmem %s0, %s165
      %s167 = smul.u32 16, %s14
      %s168 = smul.u32 16, %s14
      %p169 = scmp.lt.s32.totalorder %s168, 31
      %s170 = scalar_select %p169, %s168, 31
      %s171 = smul.addr %s170, 8
      %s172 = scalar_lea.vmem %s3, %s171
      %s173 = smul.u32 16, %s14
      %v174 = vld [vmem:[%s166] sm:$0xff]
      %v175 = vld [vmem:[%s166 + $0x8] sm:$0xff]
      %v176 = vld [vmem:[%s166 + $0x10] sm:$0xff]
      %v177 = vld [vmem:[%s166 + $0x18] sm:$0xff]
      %v178 = vld [vmem:[%s166 + $0x20] sm:$0xff]
      %v179 = vld [vmem:[%s166 + $0x28] sm:$0xff]
      %v180 = vld [vmem:[%s166 + $0x30] sm:$0xff]
      %v181 = vld [vmem:[%s166 + $0x38] sm:$0xff]
      %v182 = vld [vmem:[%s166 + $0x40] sm:$0xff]
      %v183 = vld [vmem:[%s166 + $0x48] sm:$0xff]
      %v184 = vld [vmem:[%s166 + $0x50] sm:$0xff]
      %v185 = vld [vmem:[%s166 + $0x58] sm:$0xff]
      %v186 = vld [vmem:[%s166 + $0x60] sm:$0xff]
      %v187 = vld [vmem:[%s166 + $0x68] sm:$0xff]
      %v188 = vld [vmem:[%s166 + $0x70] sm:$0xff]
      %v189 = vld [vmem:[%s166 + $0x78] sm:$0xff]
      %v190 = vld [vmem:[%s1] sm:$0x1]
      %v191 = vld [vmem:[%s2] sm:$0x1]
      %192 = vadd.xlane.f32.xlu0 %v174
      %v193 = vpop.xlane.xlu0 %192
      %194 = vadd.xlane.f32.xlu0 %v175
      %v195 = vpop.xlane.xlu0 %194
      %196 = vadd.xlane.f32.xlu0 %v176
      %v197 = vpop.xlane.xlu0 %196
      %198 = vadd.xlane.f32.xlu0 %v177
      %v199 = vpop.xlane.xlu0 %198
      %200 = vadd.xlane.f32.xlu0 %v178
      %v201 = vpop.xlane.xlu0 %200
      %202 = vadd.xlane.f32.xlu0 %v179
      %v203 = vpop.xlane.xlu0 %202
      %204 = vadd.xlane.f32.xlu0 %v180
      %v205 = vpop.xlane.xlu0 %204
      %206 = vadd.xlane.f32.xlu0 %v181
      %v207 = vpop.xlane.xlu0 %206
      %208 = vadd.xlane.f32.xlu0 %v182
      %v209 = vpop.xlane.xlu0 %208
      %210 = vadd.xlane.f32.xlu0 %v183
      %v211 = vpop.xlane.xlu0 %210
      %212 = vadd.xlane.f32.xlu0 %v184
      %v213 = vpop.xlane.xlu0 %212
      %214 = vadd.xlane.f32.xlu0 %v185
      %v215 = vpop.xlane.xlu0 %214
      %216 = vadd.xlane.f32.xlu0 %v186
      %v217 = vpop.xlane.xlu0 %216
      %218 = vadd.xlane.f32.xlu0 %v187
      %v219 = vpop.xlane.xlu0 %218
      %220 = vadd.xlane.f32.xlu0 %v188
      %v221 = vpop.xlane.xlu0 %220
      %222 = vadd.xlane.f32.xlu0 %v189
      %v223 = vpop.xlane.xlu0 %222
      %v224 = vrcp.pop 128.0
      %v225 = vmul.f32 %v193, %v224
      %v226 = vmul.f32 %v195, %v224
      %v227 = vmul.f32 %v197, %v224
      %v228 = vmul.f32 %v199, %v224
      %v229 = vmul.f32 %v201, %v224
      %v230 = vmul.f32 %v203, %v224
      %v231 = vmul.f32 %v205, %v224
      %v232 = vmul.f32 %v207, %v224
      %v233 = vmul.f32 %v209, %v224
      %v234 = vmul.f32 %v211, %v224
      %v235 = vmul.f32 %v213, %v224
      %v236 = vmul.f32 %v215, %v224
      %v237 = vmul.f32 %v217, %v224
      %v238 = vmul.f32 %v219, %v224
      %v239 = vmul.f32 %v221, %v224
      %v240 = vmul.f32 %v223, %v224
      %v241 = vsub.f32 %v174, %v225
      %v242 = vsub.f32 %v175, %v226
      %v243 = vsub.f32 %v176, %v227
      %v244 = vsub.f32 %v177, %v228
      %v245 = vsub.f32 %v178, %v229
      %v246 = vsub.f32 %v179, %v230
      %v247 = vsub.f32 %v180, %v231
      %v248 = vsub.f32 %v181, %v232
      %v249 = vsub.f32 %v182, %v233
      %v250 = vsub.f32 %v183, %v234
      %v251 = vsub.f32 %v184, %v235
      %v252 = vsub.f32 %v185, %v236
      %v253 = vsub.f32 %v186, %v237
      %v254 = vsub.f32 %v187, %v238
      %v255 = vsub.f32 %v188, %v239
      %v256 = vsub.f32 %v189, %v240
      %v257 = vmul.f32 %v241, %v241
      %v258 = vmul.f32 %v242, %v242
      %v259 = vmul.f32 %v243, %v243
      %v260 = vmul.f32 %v244, %v244
      %v261 = vmul.f32 %v245, %v245
      %v262 = vmul.f32 %v246, %v246
      %v263 = vmul.f32 %v247, %v247
      %v264 = vmul.f32 %v248, %v248
      %v265 = vmul.f32 %v249, %v249
      %v266 = vmul.f32 %v250, %v250
      %v267 = vmul.f32 %v251, %v251
      %v268 = vmul.f32 %v252, %v252
      %v269 = vmul.f32 %v253, %v253
      %v270 = vmul.f32 %v254, %v254
      %v271 = vmul.f32 %v255, %v255
      %v272 = vmul.f32 %v256, %v256
      %273 = vadd.xlane.f32.xlu0 %v257
      %v274 = vpop.xlane.xlu0 %273
      %275 = vadd.xlane.f32.xlu0 %v258
      %v276 = vpop.xlane.xlu0 %275
      %277 = vadd.xlane.f32.xlu0 %v259
      %v278 = vpop.xlane.xlu0 %277
      %279 = vadd.xlane.f32.xlu0 %v260
      %v280 = vpop.xlane.xlu0 %279
      %281 = vadd.xlane.f32.xlu0 %v261
      %v282 = vpop.xlane.xlu0 %281
      %283 = vadd.xlane.f32.xlu0 %v262
      %v284 = vpop.xlane.xlu0 %283
      %285 = vadd.xlane.f32.xlu0 %v263
      %v286 = vpop.xlane.xlu0 %285
      %287 = vadd.xlane.f32.xlu0 %v264
      %v288 = vpop.xlane.xlu0 %287
      %289 = vadd.xlane.f32.xlu0 %v265
      %v290 = vpop.xlane.xlu0 %289
      %291 = vadd.xlane.f32.xlu0 %v266
      %v292 = vpop.xlane.xlu0 %291
      %293 = vadd.xlane.f32.xlu0 %v267
      %v294 = vpop.xlane.xlu0 %293
      %295 = vadd.xlane.f32.xlu0 %v268
      %v296 = vpop.xlane.xlu0 %295
      %297 = vadd.xlane.f32.xlu0 %v269
      %v298 = vpop.xlane.xlu0 %297
      %299 = vadd.xlane.f32.xlu0 %v270
      %v300 = vpop.xlane.xlu0 %299
      %301 = vadd.xlane.f32.xlu0 %v271
      %v302 = vpop.xlane.xlu0 %301
      %303 = vadd.xlane.f32.xlu0 %v272
      %v304 = vpop.xlane.xlu0 %303
      %v305 = vmul.f32 %v274, %v224
      %v306 = vmul.f32 %v276, %v224
      %v307 = vmul.f32 %v278, %v224
      %v308 = vmul.f32 %v280, %v224
      %v309 = vmul.f32 %v282, %v224
      %v310 = vmul.f32 %v284, %v224
      %v311 = vmul.f32 %v286, %v224
      %v312 = vmul.f32 %v288, %v224
      %v313 = vmul.f32 %v290, %v224
      %v314 = vmul.f32 %v292, %v224
      %v315 = vmul.f32 %v294, %v224
      %v316 = vmul.f32 %v296, %v224
      %v317 = vmul.f32 %v298, %v224
      %v318 = vmul.f32 %v300, %v224
      %v319 = vmul.f32 %v302, %v224
      %v320 = vmul.f32 %v304, %v224
      %v321 = vadd.f32 %v305, 1e-12
      %v322 = vadd.f32 %v306, 1e-12
      %v323 = vadd.f32 %v307, 1e-12
      %v324 = vadd.f32 %v308, 1e-12
      %v325 = vadd.f32 %v309, 1e-12
      %v326 = vadd.f32 %v310, 1e-12
      %v327 = vadd.f32 %v311, 1e-12
      %v328 = vadd.f32 %v312, 1e-12
      %v329 = vadd.f32 %v313, 1e-12
      %v330 = vadd.f32 %v314, 1e-12
      %v331 = vadd.f32 %v315, 1e-12
      %v332 = vadd.f32 %v316, 1e-12
      %v333 = vadd.f32 %v317, 1e-12
      %v334 = vadd.f32 %v318, 1e-12
      %v335 = vadd.f32 %v319, 1e-12
      %v336 = vadd.f32 %v320, 1e-12
      %v337 = vrsqrt.pop %v321
      %v338 = vrsqrt.pop %v322
      %v339 = vrsqrt.pop %v323
      %v340 = vrsqrt.pop %v324
      %v341 = vrsqrt.pop %v325
      %v342 = vrsqrt.pop %v326
      %v343 = vrsqrt.pop %v327
      %v344 = vrsqrt.pop %v328
      %v345 = vrsqrt.pop %v329
      %v346 = vrsqrt.pop %v330
      %v347 = vrsqrt.pop %v331
      %v348 = vrsqrt.pop %v332
      %v349 = vrsqrt.pop %v333
      %v350 = vrsqrt.pop %v334
      %v351 = vrsqrt.pop %v335
      %v352 = vrsqrt.pop %v336
      %v353 = vmul.f32 %v241, %v337
      %v354 = vmul.f32 %v242, %v338
      %v355 = vmul.f32 %v243, %v339
      %v356 = vmul.f32 %v244, %v340
      %v357 = vmul.f32 %v245, %v341
      %v358 = vmul.f32 %v246, %v342
      %v359 = vmul.f32 %v247, %v343
      %v360 = vmul.f32 %v248, %v344
      %v361 = vmul.f32 %v249, %v345
      %v362 = vmul.f32 %v250, %v346
      %v363 = vmul.f32 %v251, %v347
      %v364 = vmul.f32 %v252, %v348
      %v365 = vmul.f32 %v253, %v349
      %v366 = vmul.f32 %v254, %v350
      %v367 = vmul.f32 %v255, %v351
      %v368 = vmul.f32 %v256, %v352
      %v370 = vlaneseq
      %v371 = vshrl.u32 %v370, 7
      %v372 = vsub.s32 0, %v371
      %v373 = vrot.slane %v190, %v372
      %v375 = vmul.f32 %v353, %v373
      %v376 = vmul.f32 %v354, %v373
      %v377 = vmul.f32 %v355, %v373
      %v378 = vmul.f32 %v356, %v373
      %v379 = vmul.f32 %v357, %v373
      %v380 = vmul.f32 %v358, %v373
      %v381 = vmul.f32 %v359, %v373
      %v382 = vmul.f32 %v360, %v373
      %v383 = vmul.f32 %v361, %v373
      %v384 = vmul.f32 %v362, %v373
      %v385 = vmul.f32 %v363, %v373
      %v386 = vmul.f32 %v364, %v373
      %v387 = vmul.f32 %v365, %v373
      %v388 = vmul.f32 %v366, %v373
      %v389 = vmul.f32 %v367, %v373
      %v390 = vmul.f32 %v368, %v373
      %v392 = vlaneseq
      %v393 = vshrl.u32 %v392, 7
      %v394 = vsub.s32 0, %v393
      %v395 = vrot.slane %v191, %v394
      %v397 = vadd.f32 %v375, %v395
      %v398 = vadd.f32 %v376, %v395
      %v399 = vadd.f32 %v377, %v395
      %v400 = vadd.f32 %v378, %v395
      %v401 = vadd.f32 %v379, %v395
      %v402 = vadd.f32 %v380, %v395
      %v403 = vadd.f32 %v381, %v395
      %v404 = vadd.f32 %v382, %v395
      %v405 = vadd.f32 %v383, %v395
      %v406 = vadd.f32 %v384, %v395
      %v407 = vadd.f32 %v385, %v395
      %v408 = vadd.f32 %v386, %v395
      %v409 = vadd.f32 %v387, %v395
      %v410 = vadd.f32 %v388, %v395
      %v411 = vadd.f32 %v389, %v395
      %v412 = vadd.f32 %v390, %v395
      %413 = vst [vmem:[%s172] sm:$0xff] %v397
      %414 = vst [vmem:[%s172 + $0x8] sm:$0xff] %v398
      %415 = vst [vmem:[%s172 + $0x10] sm:$0xff] %v399
      %416 = vst [vmem:[%s172 + $0x18] sm:$0xff] %v400
      %417 = vst [vmem:[%s172 + $0x20] sm:$0xff] %v401
      %418 = vst [vmem:[%s172 + $0x28] sm:$0xff] %v402
      %419 = vst [vmem:[%s172 + $0x30] sm:$0xff] %v403
      %420 = vst [vmem:[%s172 + $0x38] sm:$0xff] %v404
      %421 = vst [vmem:[%s172 + $0x40] sm:$0xff] %v405
      %422 = vst [vmem:[%s172 + $0x48] sm:$0xff] %v406
      %423 = vst [vmem:[%s172 + $0x50] sm:$0xff] %v407
      %424 = vst [vmem:[%s172 + $0x58] sm:$0xff] %v408
      %425 = vst [vmem:[%s172 + $0x60] sm:$0xff] %v409
      %426 = vst [vmem:[%s172 + $0x68] sm:$0xff] %v410
      %427 = vst [vmem:[%s172 + $0x70] sm:$0xff] %v411
      %428 = vst [vmem:[%s172 + $0x78] sm:$0xff] %v412
      %s429 = smul.u32 16, %s14
      %p430 = scmp.lt.s32.totalorder %s429, 31
      %s431 = scalar_select %p430, %s429, 31
      %s432 = smul.addr %s431, 8
      %s433 = scalar_lea.vmem %s3, %s432
      // Predicated region
      $region33: #{bert_forward.5} parent=31 // pred_check
        %p434 = pneg %p100
      $region34: #{bert_forward.5} parent=31 // pred_check_branch
        %436 = sbr.rel (%p434) target = $region36
      $region35: #{bert_forward.5} parent=31 // pred_region
        %s437 = smul.u32 16, %s14
      $region36: #{bert_forward.5} parent=31 // pred_fallthru
        _
    $region32: #{bert_forward.5} parent=5 // pred_fallthru
      _
    %p438 = scmp.le.s32.totalorder 2, %s9
    // Predicated region
    $region37: #{bert_forward.5} parent=5 // pred_check
      %p439 = pneg %p438
    $region38: #{bert_forward.5} parent=5 // pred_check_branch
      %441 = sbr.rel (%p439) target = $region40
    $region39: #{bert_forward.5} parent=5 // pred_region
      %s442 = ssub.s32 %s9, 2
      // Predicated region
      $region41: #{bert_forward.5} parent=39 // pred_check
        %p443 = pneg %p106
      $region42: #{bert_forward.5} parent=39 // pred_check_branch
        %445 = sbr.rel (%p443) target = $region44
      $region43: #{bert_forward.5} parent=39 // pred_region
        %s446 = smul.u32 16, %s15
        %p447 = scmp.lt.s32.totalorder %s446, 31
        %s448 = scalar_select %p447, %s446, 31
        %s449 = smul.addr %s448, 8
        %s450 = scalar_lea.vmem %s3, %s449
      $region44: #{bert_forward.5} parent=39 // pred_fallthru
        _
    $region40: #{bert_forward.5} parent=5 // pred_fallthru
      _
  $region6: #{bert_forward.5} parent=0 // loop_footer
    %s13 = sadd.s32 1, %s9
  $region7: #{bert_forward.5} parent=0 // loop_footer_branch
    %8 = sbr.rel target = $region3
  $region8: #{bert_forward.5} parent=0 // loop_exit
    _

// kernel: bert_forward.7
$region0: #{bert_forward.7}
  #allocation0 [shape = 'u32[]', space=smem, size = 0x4, offset = 0x4, fixed_abs, tag = 'smem constant byte address 0x4 - core index']
  #allocation1 [shape = 'u32[144,128]{1,0:T(1,128)}', space=vmem, size = 0x12000, scoped, tag = 'internal scratch']
  %s0 = inlined_call_operand.vmem [shape: f32[256,128], index: 0, kind: input, shape index: {}]
  %s1 = inlined_call_operand.vmem [shape: bf16[128,512], index: 1, kind: input, shape index: {}]
  %s2 = inlined_call_operand.vmem [shape: f32[1,512], index: 2, kind: input, shape index: {}]
  %s3 = inlined_call_operand.vmem [shape: bf16[512,128], index: 3, kind: input, shape index: {}]
  %s4 = inlined_call_operand.vmem [shape: f32[1,128], index: 4, kind: input, shape index: {}]
  %s5 = inlined_call_operand.vmem [shape: f32[1,128], index: 5, kind: input, shape index: {}]
  %s6 = inlined_call_operand.vmem [shape: f32[1,128], index: 6, kind: input, shape index: {}]
  %s7 = inlined_call_operand.vmem [shape: f32[256,128], index: 7, kind: output, shape index: {}]
  %s8 = sld [smem:[#allocation0]]
  $region61: #{bert_forward.7} parent=0
    _
  %s10 = ssub.s32 1, %s8
  %s11 = scalar_select 0, %s10, %s8
  loop: start=0, step=1, limit=4
  $region2: #{bert_forward.7} parent=0 // loop_pre_header
    _
  $region3: #{bert_forward.7} parent=0 // loop_header
    %s13 = sphi 0, %s17
    %p14 = scmp.ge.s32.totalorder %s13, 4
    %s23 = sphi 0, %s25
    %s26 = sphi 0, %s23
    %s27 = sphi 0, %s26
    %s43 = sphi 0, %s27
    %s47 = sphi 0, %s47
    %s49 = sphi 0, %s47
    %s50 = sphi 0, %s49
    %s64 = sphi 0, %s50
    %s68 = sphi 0, %s68
    %s70 = sphi 0, %s68
    %s71 = sphi 0, %s70
    %s85 = sphi 0, %s71
    %s89 = sphi 0, %s89
    %s91 = sphi 0, %s89
    %s92 = sphi 0, %s91
    %s106 = sphi 0, %s92
    %s110 = sphi 0, %s110
    %s112 = sphi 0, %s110
    %s113 = sphi 0, %s112
    %s127 = sphi 0, %s113
    %s131 = sphi 0, %s131
    %s133 = sphi 0, %s131
    %s134 = sphi 0, %s133
    %s148 = sphi 0, %s134
    %s152 = sphi 0, %s152
    %s154 = sphi 0, %s152
    %s155 = sphi 0, %s154
    %s169 = sphi 0, %s155
    %s175 = sphi 0, %s177
    %s178 = sphi 0, %s175
    %s179 = sphi 0, %s178
    %s195 = sphi 0, %s179
  $region4: #{bert_forward.7} parent=0 // loop_header_branch
    %16 = sbr.rel (%p14) target = $region8
  $region5: #{bert_forward.7} parent=0 // loop_body
    %s18 = ssub.s32 %s13, 1
    %s19 = ssub.s32 %s13, 2
    %s20 = sadd.s32 %s13, 1
    %s21 = ssub.s32 %s13, %s20
    %p22 = scmp.eq.s32.totalorder %s21, 0
    %s24 = sadd.s32 %s23, 1
    %s25 = scalar_select %p22, %s23, %s24
    %p28 = pneg %p22
    %p29 = scmp.eq.s32.totalorder %s13, 1
    %p30 = por %p28, %p29
    %p31 = scmp.ne.s32.totalorder %s23, %s26
    %p32 = scmp.eq.s32.totalorder %s13, 0
    %p33 = por %p31, %p32
    %p34 = scmp.ne.s32.totalorder %s23, %s26
    %p35 = scmp.eq.s32.totalorder %s18, 1
    %p36 = por %p34, %p35
    %p37 = scmp.ne.s32.totalorder %s26, %s27
    %p38 = scmp.eq.s32.totalorder %s18, 0
    %p39 = por %p37, %p38
    %p40 = scmp.ne.s32.totalorder %s26, %s27
    %p41 = scmp.eq.s32.totalorder %s19, 1
    %p42 = por %p40, %p41
    %p44 = scmp.ne.s32.totalorder %s27, %s43
    %p45 = scmp.eq.s32.totalorder %s19, 0
    %p46 = por %p44, %p45
    %s48 = sadd.s32 %s47, 1
    %p51 = scmp.eq.s32.totalorder %s13, 1
    %p52 = scmp.ne.s32.totalorder %s47, %s49
    %p53 = scmp.eq.s32.totalorder %s13, 0
    %p54 = por %p52, %p53
    %p55 = scmp.ne.s32.totalorder %s47, %s49
    %p56 = scmp.eq.s32.totalorder %s18, 1
    %p57 = por %p55, %p56
    %p58 = scmp.ne.s32.totalorder %s49, %s50
    %p59 = scmp.eq.s32.totalorder %s18, 0
    %p60 = por %p58, %p59
    %p61 = scmp.ne.s32.totalorder %s49, %s50
    %p62 = scmp.eq.s32.totalorder %s19, 1
    %p63 = por %p61, %p62
    %p65 = scmp.ne.s32.totalorder %s50, %s64
    %p66 = scmp.eq.s32.totalorder %s19, 0
    %p67 = por %p65, %p66
    %s69 = sadd.s32 %s68, 1
    %p72 = scmp.eq.s32.totalorder %s13, 1
    %p73 = scmp.ne.s32.totalorder %s68, %s70
    %p74 = scmp.eq.s32.totalorder %s13, 0
    %p75 = por %p73, %p74
    %p76 = scmp.ne.s32.totalorder %s68, %s70
    %p77 = scmp.eq.s32.totalorder %s18, 1
    %p78 = por %p76, %p77
    %p79 = scmp.ne.s32.totalorder %s70, %s71
    %p80 = scmp.eq.s32.totalorder %s18, 0
    %p81 = por %p79, %p80
    %p82 = scmp.ne.s32.totalorder %s70, %s71
    %p83 = scmp.eq.s32.totalorder %s19, 1
    %p84 = por %p82, %p83
    %p86 = scmp.ne.s32.totalorder %s71, %s85
    %p87 = scmp.eq.s32.totalorder %s19, 0
    %p88 = por %p86, %p87
    %s90 = sadd.s32 %s89, 1
    %p93 = scmp.eq.s32.totalorder %s13, 1
    %p94 = scmp.ne.s32.totalorder %s89, %s91
    %p95 = scmp.eq.s32.totalorder %s13, 0
    %p96 = por %p94, %p95
    %p97 = scmp.ne.s32.totalorder %s89, %s91
    %p98 = scmp.eq.s32.totalorder %s18, 1
    %p99 = por %p97, %p98
    %p100 = scmp.ne.s32.totalorder %s91, %s92
    %p101 = scmp.eq.s32.totalorder %s18, 0
    %p102 = por %p100, %p101
    %p103 = scmp.ne.s32.totalorder %s91, %s92
    %p104 = scmp.eq.s32.totalorder %s19, 1
    %p105 = por %p103, %p104
    %p107 = scmp.ne.s32.totalorder %s92, %s106
    %p108 = scmp.eq.s32.totalorder %s19, 0
    %p109 = por %p107, %p108
    %s111 = sadd.s32 %s110, 1
    %p114 = scmp.eq.s32.totalorder %s13, 1
    %p115 = scmp.ne.s32.totalorder %s110, %s112
    %p116 = scmp.eq.s32.totalorder %s13, 0
    %p117 = por %p115, %p116
    %p118 = scmp.ne.s32.totalorder %s110, %s112
    %p119 = scmp.eq.s32.totalorder %s18, 1
    %p120 = por %p118, %p119
    %p121 = scmp.ne.s32.totalorder %s112, %s113
    %p122 = scmp.eq.s32.totalorder %s18, 0
    %p123 = por %p121, %p122
    %p124 = scmp.ne.s32.totalorder %s112, %s113
    %p125 = scmp.eq.s32.totalorder %s19, 1
    %p126 = por %p124, %p125
    %p128 = scmp.ne.s32.totalorder %s113, %s127
    %p129 = scmp.eq.s32.totalorder %s19, 0
    %p130 = por %p128, %p129
    %s132 = sadd.s32 %s131, 1
    %p135 = scmp.eq.s32.totalorder %s13, 1
    %p136 = scmp.ne.s32.totalorder %s131, %s133
    %p137 = scmp.eq.s32.totalorder %s13, 0
    %p138 = por %p136, %p137
    %p139 = scmp.ne.s32.totalorder %s131, %s133
    %p140 = scmp.eq.s32.totalorder %s18, 1
    %p141 = por %p139, %p140
    %p142 = scmp.ne.s32.totalorder %s133, %s134
    %p143 = scmp.eq.s32.totalorder %s18, 0
    %p144 = por %p142, %p143
    %p145 = scmp.ne.s32.totalorder %s133, %s134
    %p146 = scmp.eq.s32.totalorder %s19, 1
    %p147 = por %p145, %p146
    %p149 = scmp.ne.s32.totalorder %s134, %s148
    %p150 = scmp.eq.s32.totalorder %s19, 0
    %p151 = por %p149, %p150
    %s153 = sadd.s32 %s152, 1
    %p156 = scmp.eq.s32.totalorder %s13, 1
    %p157 = scmp.ne.s32.totalorder %s152, %s154
    %p158 = scmp.eq.s32.totalorder %s13, 0
    %p159 = por %p157, %p158
    %p160 = scmp.ne.s32.totalorder %s152, %s154
    %p161 = scmp.eq.s32.totalorder %s18, 1
    %p162 = por %p160, %p161
    %p163 = scmp.ne.s32.totalorder %s154, %s155
    %p164 = scmp.eq.s32.totalorder %s18, 0
    %p165 = por %p163, %p164
    %p166 = scmp.ne.s32.totalorder %s154, %s155
    %p167 = scmp.eq.s32.totalorder %s19, 1
    %p168 = por %p166, %p167
    %p170 = scmp.ne.s32.totalorder %s155, %s169
    %p171 = scmp.eq.s32.totalorder %s19, 0
    %p172 = por %p170, %p171
    %s173 = ssub.s32 %s13, %s20
    %p174 = scmp.eq.s32.totalorder %s173, 0
    %s176 = sadd.s32 %s175, 1
    %s177 = scalar_select %p174, %s175, %s176
    %p180 = pneg %p174
    %p181 = scmp.eq.s32.totalorder %s13, 1
    %p182 = por %p180, %p181
    %p183 = scmp.ne.s32.totalorder %s175, %s178
    %p184 = scmp.eq.s32.totalorder %s13, 0
    %p185 = por %p183, %p184
    %p186 = scmp.ne.s32.totalorder %s175, %s178
    %p187 = scmp.eq.s32.totalorder %s18, 1
    %p188 = por %p186, %p187
    %p189 = scmp.ne.s32.totalorder %s178, %s179
    %p190 = scmp.eq.s32.totalorder %s18, 0
    %p191 = por %p189, %p190
    %p192 = scmp.ne.s32.totalorder %s178, %s179
    %p193 = scmp.eq.s32.totalorder %s19, 1
    %p194 = por %p192, %p193
    %p196 = scmp.ne.s32.totalorder %s179, %s195
    %p197 = scmp.eq.s32.totalorder %s19, 0
    %p198 = por %p196, %p197
    %p199 = scmp.le.s32.totalorder 1, %s13
    %p200 = scmp.lt.s32.totalorder %s13, 3
    %p201 = pnand %p199, %p200
    %p202 = pneg %p201
    // Predicated region
    $region9: #{bert_forward.7} parent=5 // pred_check
      _
    $region10: #{bert_forward.7} parent=5 // pred_check_branch
      %204 = sbr.rel (%p201) target = $region12
    $region11: #{bert_forward.7} parent=5 // pred_region
      %s205 = ssub.s32 %s13, 1
      // Predicated region
      $region13: #{bert_forward.7} parent=11 // pred_check
        %p206 = pneg %p60
      $region14: #{bert_forward.7} parent=11 // pred_check_branch
        %208 = sbr.rel (%p206) target = $region16
      $region15: #{bert_forward.7} parent=11 // pred_region
        _
      $region16: #{bert_forward.7} parent=11 // pred_fallthru
        _
      // Predicated region
      $region17: #{bert_forward.7} parent=11 // pred_check
        %p209 = pneg %p81
      $region18: #{bert_forward.7} parent=11 // pred_check_branch
        %211 = sbr.rel (%p209) target = $region20
      $region19: #{bert_forward.7} parent=11 // pred_region
        _
      $region20: #{bert_forward.7} parent=11 // pred_fallthru
        _
      // Predicated region
      $region21: #{bert_forward.7} parent=11 // pred_check
        %p212 = pneg %p102
      $region22: #{bert_forward.7} parent=11 // pred_check_branch
        %214 = sbr.rel (%p212) target = $region24
      $region23: #{bert_forward.7} parent=11 // pred_region
        _
      $region24: #{bert_forward.7} parent=11 // pred_fallthru
        _
      // Predicated region
      $region25: #{bert_forward.7} parent=11 // pred_check
        %p215 = pneg %p123
      $region26: #{bert_forward.7} parent=11 // pred_check_branch
        %217 = sbr.rel (%p215) target = $region28
      $region27: #{bert_forward.7} parent=11 // pred_region
        _
      $region28: #{bert_forward.7} parent=11 // pred_fallthru
        _
      // Predicated region
      $region29: #{bert_forward.7} parent=11 // pred_check
        %p218 = pneg %p144
      $region30: #{bert_forward.7} parent=11 // pred_check_branch
        %220 = sbr.rel (%p218) target = $region32
      $region31: #{bert_forward.7} parent=11 // pred_region
        _
      $region32: #{bert_forward.7} parent=11 // pred_fallthru
        _
      // Predicated region
      $region33: #{bert_forward.7} parent=11 // pred_check
        %p221 = pneg %p165
      $region34: #{bert_forward.7} parent=11 // pred_check_branch
        %223 = sbr.rel (%p221) target = $region36
      $region35: #{bert_forward.7} parent=11 // pred_region
        _
      $region36: #{bert_forward.7} parent=11 // pred_fallthru
        _
    $region12: #{bert_forward.7} parent=5 // pred_fallthru
      _
    %p224 = scmp.lt.s32.totalorder %s13, 2
    // Predicated region
    $region37: #{bert_forward.7} parent=5 // pred_check
      %p225 = pneg %p224
    $region38: #{bert_forward.7} parent=5 // pred_check_branch
      %227 = sbr.rel (%p225) target = $region40
    $region39: #{bert_forward.7} parent=5 // pred_region
      // Predicated region
      $region41: #{bert_forward.7} parent=39 // pred_check
        %p228 = pneg %p33
      $region42: #{bert_forward.7} parent=39 // pred_check_branch
        %230 = sbr.rel (%p228) target = $region44
      $region43: #{bert_forward.7} parent=39 // pred_region
        %s231 = smul.u32 16, %s13
        %p232 = scmp.lt.s32.totalorder %s231, 31
        %s233 = scalar_select %p232, %s231, 31
        %s234 = smul.addr %s233, 8
        %s235 = scalar_lea.vmem %s0, %s234
        %s236 = smul.u32 16, %s13
      $region44: #{bert_forward.7} parent=39 // pred_fallthru
        _
    $region40: #{bert_forward.7} parent=5 // pred_fallthru
      _
    %p237 = scmp.le.s32.totalorder 1, %s13
    %p238 = scmp.lt.s32.totalorder %s13, 3
    %p239 = pnand %p237, %p238
    %p240 = pneg %p239
    // Predicated region
    $region45: #{bert_forward.7} parent=5 // pred_check
      _
    $region46: #{bert_forward.7} parent=5 // pred_check_branch
      %242 = sbr.rel (%p239) target = $region48
    $region47: #{bert_forward.7} parent=5 // pred_region
      %s243 = ssub.s32 %s13, 1
      %s244 = smul.u32 16, %s18
      %p245 = scmp.lt.s32.totalorder %s244, 31
      %s246 = scalar_select %p245, %s244, 31
      %s247 = smul.addr %s246, 8
      %s248 = scalar_lea.vmem %s0, %s247
      %p249 = pneg %p39
      %p250 = pneg %p36
      %p251 = pneg %p60
      %p252 = pneg %p57
      %p253 = pneg %p81
      %p254 = pneg %p78
      %p255 = pneg %p102
      %p256 = pneg %p99
      %p257 = pneg %p123
      %p258 = pneg %p120
      %p259 = pneg %p144
      %p260 = pneg %p141
      %p261 = pneg %p165
      %p262 = pneg %p162
      %p263 = pneg %p191
      %p264 = pneg %p188
      %s265 = smul.u32 16, %s18
      %p266 = scmp.lt.s32.totalorder %s265, 31
      %s267 = scalar_select %p266, %s265, 31
      %s268 = smul.addr %s267, 8
      %s269 = scalar_lea.vmem %s7, %s268
      %s270 = smul.u32 16, %s18
      %p271 = scmp.lt.s32.totalorder %s270, 31
      %s272 = scalar_select %p271, %s270, 31
      %s273 = smul.addr %s272, 8
      %s274 = scalar_lea.vmem %s0, %s273
      %s275 = smul.u32 16, %s18
      %s276 = smul.u32 16, %s18
      %p277 = scmp.lt.s32.totalorder %s276, 31
      %s278 = scalar_select %p277, %s276, 31
      %s279 = smul.addr %s278, 8
      %s280 = scalar_lea.vmem %s7, %s279
      %s281 = smul.u32 16, %s18
      %v283 = vld [vmem:[%s274] sm:$0xff]
      %v284 = vld [vmem:[%s274 + $0x8] sm:$0xff]
      %v285 = vld [vmem:[%s274 + $0x10] sm:$0xff]
      %v286 = vld [vmem:[%s274 + $0x18] sm:$0xff]
      %v287 = vld [vmem:[%s274 + $0x20] sm:$0xff]
      %v288 = vld [vmem:[%s274 + $0x28] sm:$0xff]
      %v289 = vld [vmem:[%s274 + $0x30] sm:$0xff]
      %v290 = vld [vmem:[%s274 + $0x38] sm:$0xff]
      %v291 = vld [vmem:[%s274 + $0x40] sm:$0xff]
      %v292 = vld [vmem:[%s274 + $0x48] sm:$0xff]
      %v293 = vld [vmem:[%s274 + $0x50] sm:$0xff]
      %v294 = vld [vmem:[%s274 + $0x58] sm:$0xff]
      %v295 = vld [vmem:[%s274 + $0x60] sm:$0xff]
      %v296 = vld [vmem:[%s274 + $0x68] sm:$0xff]
      %v297 = vld [vmem:[%s274 + $0x70] sm:$0xff]
      %v298 = vld [vmem:[%s274 + $0x78] sm:$0xff]
      %v299 = vpack.c.bf16 %v284, %v283
      %v300 = vpack.c.bf16 %v286, %v285
      %v301 = vpack.c.bf16 %v288, %v287
      %v302 = vpack.c.bf16 %v290, %v289
      %v303 = vpack.c.bf16 %v292, %v291
      %v304 = vpack.c.bf16 %v294, %v293
      %v305 = vpack.c.bf16 %v296, %v295
      %v306 = vpack.c.bf16 %v298, %v297
      %v307 = vld [vmem:[%s1] sm:$0xff]
      %v308 = vld [vmem:[%s1 + $0x8] sm:$0xff]
      %v309 = vld [vmem:[%s1 + $0x10] sm:$0xff]
      %v310 = vld [vmem:[%s1 + $0x18] sm:$0xff]
      %v311 = vld [vmem:[%s1 + $0x20] sm:$0xff]
      %v312 = vld [vmem:[%s1 + $0x28] sm:$0xff]
      %v313 = vld [vmem:[%s1 + $0x30] sm:$0xff]
      %v314 = vld [vmem:[%s1 + $0x38] sm:$0xff]
      %v315 = vld [vmem:[%s1 + $0x40] sm:$0xff]
      %v316 = vld [vmem:[%s1 + $0x48] sm:$0xff]
      %v317 = vld [vmem:[%s1 + $0x50] sm:$0xff]
      %v318 = vld [vmem:[%s1 + $0x58] sm:$0xff]
      %v319 = vld [vmem:[%s1 + $0x60] sm:$0xff]
      %v320 = vld [vmem:[%s1 + $0x68] sm:$0xff]
      %v321 = vld [vmem:[%s1 + $0x70] sm:$0xff]
      %v322 = vld [vmem:[%s1 + $0x78] sm:$0xff]
      %v323 = vld [vmem:[%s1 + $0x80] sm:$0xff]
      %v324 = vld [vmem:[%s1 + $0x88] sm:$0xff]
      %v325 = vld [vmem:[%s1 + $0x90] sm:$0xff]
      %v326 = vld [vmem:[%s1 + $0x98] sm:$0xff]
      %v327 = vld [vmem:[%s1 + $0xa0] sm:$0xff]
      %v328 = vld [vmem:[%s1 + $0xa8] sm:$0xff]
      %v329 = vld [vmem:[%s1 + $0xb0] sm:$0xff]
      %v330 = vld [vmem:[%s1 + $0xb8] sm:$0xff]
      %v331 = vld [vmem:[%s1 + $0xc0] sm:$0xff]
      %v332 = vld [vmem:[%s1 + $0xc8] sm:$0xff]
      %v333 = vld [vmem:[%s1 + $0xd0] sm:$0xff]
      %v334 = vld [vmem:[%s1 + $0xd8] sm:$0xff]
      %v335 = vld [vmem:[%s1 + $0xe0] sm:$0xff]
      %v336 = vld [vmem:[%s1 + $0xe8] sm:$0xff]
      %v337 = vld [vmem:[%s1 + $0xf0] sm:$0xff]
      %v338 = vld [vmem:[%s1 + $0xf8] sm:$0xff]
      %v339 = vld [vmem:[%s2] sm:$0xf]
      %v341 = vlaneseq
      %v342 = vshrl.u32 %v341, 7
      %v343 = vsub.s32 0, %v342
      %v344 = vrot.slane %v339, %v343
      %v345 = vlaneseq
      %v346 = vshrl.u32 %v345, 7
      %v347 = vsub.s32 1, %v346
      %v348 = vrot.slane %v339, %v347
      %v349 = vlaneseq
      %v350 = vshrl.u32 %v349, 7
      %v351 = vsub.s32 2, %v350
      %v352 = vrot.slane %v339, %v351
      %v353 = vlaneseq
      %v354 = vshrl.u32 %v353, 7
      %v355 = vsub.s32 3, %v354
      %v356 = vrot.slane %v339, %v355
      %v393 = vunpack.c.l.b16 %v307
      %v394 = vunpack.c.h.b16 %v307
      %v395 = vunpack.c.l.b16 %v308
      %v396 = vunpack.c.h.b16 %v308
      %v397 = vunpack.c.l.b16 %v309
      %v398 = vunpack.c.h.b16 %v309
      %v399 = vunpack.c.l.b16 %v310
      %v400 = vunpack.c.h.b16 %v310
      %v401 = vunpack.c.l.b16 %v311
      %v402 = vunpack.c.h.b16 %v311
      %v403 = vunpack.c.l.b16 %v312
      %v404 = vunpack.c.h.b16 %v312
      %v405 = vunpack.c.l.b16 %v313
      %v406 = vunpack.c.h.b16 %v313
      %v407 = vunpack.c.l.b16 %v314
      %v408 = vunpack.c.h.b16 %v314
      %v409 = vunpack.c.l.b16 %v315
      %v410 = vunpack.c.h.b16 %v315
      %v411 = vunpack.c.l.b16 %v316
      %v412 = vunpack.c.h.b16 %v316
      %v413 = vunpack.c.l.b16 %v317
      %v414 = vunpack.c.h.b16 %v317
      %v415 = vunpack.c.l.b16 %v318
      %v416 = vunpack.c.h.b16 %v318
      %v417 = vunpack.c.l.b16 %v319
      %v418 = vunpack.c.h.b16 %v319
      %v419 = vunpack.c.l.b16 %v320
      %v420 = vunpack.c.h.b16 %v320
      %v421 = vunpack.c.l.b16 %v321
      %v422 = vunpack.c.h.b16 %v321
      %v423 = vunpack.c.l.b16 %v322
      %v424 = vunpack.c.h.b16 %v322
      %v425 = vunpack.c.l.b16 %v323
      %v426 = vunpack.c.h.b16 %v323
      %v427 = vunpack.c.l.b16 %v324
      %v428 = vunpack.c.h.b16 %v324
      %v429 = vunpack.c.l.b16 %v325
      %v430 = vunpack.c.h.b16 %v325
      %v431 = vunpack.c.l.b16 %v326
      %v432 = vunpack.c.h.b16 %v326
      %v433 = vunpack.c.l.b16 %v327
      %v434 = vunpack.c.h.b16 %v327
      %v435 = vunpack.c.l.b16 %v328
      %v436 = vunpack.c.h.b16 %v328
      %v437 = vunpack.c.l.b16 %v329
      %v438 = vunpack.c.h.b16 %v329
      %v439 = vunpack.c.l.b16 %v330
      %v440 = vunpack.c.h.b16 %v330
      %v441 = vunpack.c.l.b16 %v331
      %v442 = vunpack.c.h.b16 %v331
      %v443 = vunpack.c.l.b16 %v332
      %v444 = vunpack.c.h.b16 %v332
      %v445 = vunpack.c.l.b16 %v333
      %v446 = vunpack.c.h.b16 %v333
      %v447 = vunpack.c.l.b16 %v334
      %v448 = vunpack.c.h.b16 %v334
      %v449 = vunpack.c.l.b16 %v335
      %v450 = vunpack.c.h.b16 %v335
      %v451 = vunpack.c.l.b16 %v336
      %v452 = vunpack.c.h.b16 %v336
      %v453 = vunpack.c.l.b16 %v337
      %v454 = vunpack.c.h.b16 %v337
      %v455 = vunpack.c.l.b16 %v338
      %v456 = vunpack.c.h.b16 %v338
      %v457 = vpack.c.b16 %v397, %v393
      %v458 = vpack.c.b16 %v398, %v394
      %v459 = vpack.c.b16 %v399, %v395
      %v460 = vpack.c.b16 %v400, %v396
      %v461 = vpack.c.b16 %v405, %v401
      %v462 = vpack.c.b16 %v406, %v402
      %v463 = vpack.c.b16 %v407, %v403
      %v464 = vpack.c.b16 %v408, %v404
      %v465 = vpack.c.b16 %v413, %v409
      %v466 = vpack.c.b16 %v414, %v410
      %v467 = vpack.c.b16 %v415, %v411
      %v468 = vpack.c.b16 %v416, %v412
      %v469 = vpack.c.b16 %v421, %v417
      %v470 = vpack.c.b16 %v422, %v418
      %v471 = vpack.c.b16 %v423, %v419
      %v472 = vpack.c.b16 %v424, %v420
      %v473 = vpack.c.b16 %v429, %v425
      %v474 = vpack.c.b16 %v430, %v426
      %v475 = vpack.c.b16 %v431, %v427
      %v476 = vpack.c.b16 %v432, %v428
      %v477 = vpack.c.b16 %v437, %v433
      %v478 = vpack.c.b16 %v438, %v434
      %v479 = vpack.c.b16 %v439, %v435
      %v480 = vpack.c.b16 %v440, %v436
      %v481 = vpack.c.b16 %v445, %v441
      %v482 = vpack.c.b16 %v446, %v442
      %v483 = vpack.c.b16 %v447, %v443
      %v484 = vpack.c.b16 %v448, %v444
      %v485 = vpack.c.b16 %v453, %v449
      %v486 = vpack.c.b16 %v454, %v450
      %v487 = vpack.c.b16 %v455, %v451
      %v488 = vpack.c.b16 %v456, %v452
      %521 = vmatprep.subr.bf16.mxu0 %v458
      %522 = vmatpush1.bf16.msra.mxu0 %v457
      %523 = vmatprep.subr.bf16.mxu0 %v462
      %524 = vmatpush1.bf16.msra.mxu0 %v461
      %525 = vmatprep.subr.bf16.mxu0 %v466
      %526 = vmatpush1.bf16.msra.mxu0 %v465
      %527 = vmatprep.subr.bf16.mxu0 %v470
      %528 = vmatpush1.bf16.msra.mxu0 %v469
      %529 = vmatprep.subr.bf16.mxu0 %v474
      %530 = vmatpush1.bf16.msra.mxu0 %v473
      %531 = vmatprep.subr.bf16.mxu0 %v478
      %532 = vmatpush1.bf16.msra.mxu0 %v477
      %533 = vmatprep.subr.bf16.mxu0 %v482
      %534 = vmatpush1.bf16.msra.mxu0 %v481
      %535 = vmatprep.subr.bf16.mxu0 %v486
      %536 = vmatpush1.bf16.msra.mxu0 %v485
      %537 = vmatprep.subr.bf16.mxu0 0
      %538 = vmatpush1.bf16.msra.mxu0 0
      %539 = vmatprep.subr.bf16.mxu0 0
      %540 = vmatpush1.bf16.msra.mxu0 0
      %541 = vmatprep.subr.bf16.mxu0 0
      %542 = vmatpush1.bf16.msra.mxu0 0
      %543 = vmatprep.subr.bf16.mxu0 0
      %544 = vmatpush1.bf16.msra.mxu0 0
      %545 = vmatprep.subr.bf16.mxu0 0
      %546 = vmatpush1.bf16.msra.mxu0 0
      %547 = vmatprep.subr.bf16.mxu0 0
      %548 = vmatpush1.bf16.msra.mxu0 0
      %549 = vmatprep.subr.bf16.mxu0 0
      %550 = vmatpush1.bf16.msra.mxu0 0
      %551 = vmatprep.subr.bf16.mxu0 0
      %552 = vmatpush1.bf16.msra.mxu0 0
      %553 = vmatprep.mubr.bf16.mxu0 0
      %554 = vmatmul.mubr.bf16.gmra.mrb[0].mxu0 %v299
      %v555 = vpop.f32.mrb[0].mxu0
      %v556 = vadd.f32 %v344, %v555
      %v557 = vpop.f32.mrb[0].mxu0
      %v558 = vadd.f32 %v348, %v557
      %v559 = vpop.f32.mrb[0].mxu0
      %v560 = vadd.f32 %v344, %v559
      %v561 = vpop.f32.mrb[0].mxu0
      %v562 = vadd.f32 %v348, %v561
      %563 = vmatprep.mubr.bf16.mxu0 0
      %564 = vmatmul.mubr.bf16.gmra.mrb[0].mxu0 %v300
      %v565 = vpop.f32.mrb[0].mxu0
      %v566 = vadd.f32 %v344, %v565
      %v567 = vpop.f32.mrb[0].mxu0
      %v568 = vadd.f32 %v348, %v567
      %v569 = vpop.f32.mrb[0].mxu0
      %v570 = vadd.f32 %v344, %v569
      %v571 = vpop.f32.mrb[0].mxu0
      %v572 = vadd.f32 %v348, %v571
      %573 = vmatprep.mubr.bf16.mxu0 0
      %574 = vmatmul.mubr.bf16.gmra.mrb[0].mxu0 %v301
      %v575 = vpop.f32.mrb[0].mxu0
      %v576 = vadd.f32 %v344, %v575
      %v577 = vpop.f32.mrb[0].mxu0
      %v578 = vadd.f32 %v348, %v577
      %v579 = vpop.f32.mrb[0].mxu0
      %v580 = vadd.f32 %v344, %v579
      %v581 = vpop.f32.mrb[0].mxu0
      %v582 = vadd.f32 %v348, %v581
      %583 = vmatprep.mubr.bf16.mxu0 0
      %584 = vmatmul.mubr.bf16.gmra.mrb[0].mxu0 %v302
      %v585 = vpop.f32.mrb[0].mxu0
      %v586 = vadd.f32 %v344, %v585
      %v587 = vpop.f32.mrb[0].mxu0
      %v588 = vadd.f32 %v348, %v587
      %v589 = vpop.f32.mrb[0].mxu0
      %v590 = vadd.f32 %v344, %v589
      %v591 = vpop.f32.mrb[0].mxu0
      %v592 = vadd.f32 %v348, %v591
      %593 = vmatprep.mubr.bf16.mxu0 0
      %594 = vmatmul.mubr.bf16.gmra.mrb[0].mxu0 %v303
      %v595 = vpop.f32.mrb[0].mxu0
      %v596 = vadd.f32 %v344, %v595
      %v597 = vpop.f32.mrb[0].mxu0
      %v598 = vadd.f32 %v348, %v597
      %v599 = vpop.f32.mrb[0].mxu0
      %v600 = vadd.f32 %v344, %v599
      %v601 = vpop.f32.mrb[0].mxu0
      %v602 = vadd.f32 %v348, %v601
      %603 = vmatprep.mubr.bf16.mxu0 0
      %604 = vmatmul.mubr.bf16.gmra.mrb[0].mxu0 %v304
      %v605 = vpop.f32.mrb[0].mxu0
      %v606 = vadd.f32 %v344, %v605
      %v607 = vpop.f32.mrb[0].mxu0
      %v608 = vadd.f32 %v348, %v607
      %v609 = vpop.f32.mrb[0].mxu0
      %v610 = vadd.f32 %v344, %v609
      %v611 = vpop.f32.mrb[0].mxu0
      %v612 = vadd.f32 %v348, %v611
      %613 = vmatprep.mubr.bf16.mxu0 0
      %614 = vmatmul.mubr.bf16.gmra.mrb[0].mxu0 %v305
      %v615 = vpop.f32.mrb[0].mxu0
      %v616 = vadd.f32 %v344, %v615
      %v617 = vpop.f32.mrb[0].mxu0
      %v618 = vadd.f32 %v348, %v617
      %v619 = vpop.f32.mrb[0].mxu0
      %v620 = vadd.f32 %v344, %v619
      %v621 = vpop.f32.mrb[0].mxu0
      %v622 = vadd.f32 %v348, %v621
      %623 = vmatprep.mubr.bf16.mxu0 0
      %624 = vmatmul.mubr.bf16.gmra.mrb[0].mxu0 %v306
      %v625 = vpop.f32.mrb[0].mxu0
      %v626 = vadd.f32 %v344, %v625
      %v627 = vpop.f32.mrb[0].mxu0
      %v628 = vadd.f32 %v348, %v627
      %v629 = vpop.f32.mrb[0].mxu0
      %v630 = vadd.f32 %v344, %v629
      %v631 = vpop.f32.mrb[0].mxu0
      %v632 = vadd.f32 %v348, %v631
      %633 = vdwg.mxu0
      %634 = vmatprep.subr.bf16.mxu0 %v460
      %635 = vmatpush1.bf16.msra.mxu0 %v459
      %636 = vmatprep.subr.bf16.mxu0 %v464
      %637 = vmatpush1.bf16.msra.mxu0 %v463
      %638 = vmatprep.subr.bf16.mxu0 %v468
      %639 = vmatpush1.bf16.msra.mxu0 %v467
      %640 = vmatprep.subr.bf16.mxu0 %v472
      %641 = vmatpush1.bf16.msra.mxu0 %v471
      %642 = vmatprep.subr.bf16.mxu0 %v476
      %643 = vmatpush1.bf16.msra.mxu0 %v475
      %644 = vmatprep.subr.bf16.mxu0 %v480
      %645 = vmatpush1.bf16.msra.mxu0 %v479
      %646 = vmatprep.subr.bf16.mxu0 %v484
      %647 = vmatpush1.bf16.msra.mxu0 %v483
      %648 = vmatprep.subr.bf16.mxu0 %v488
      %649 = vmatpush1.bf16.msra.mxu0 %v487
      %650 = vmatprep.subr.bf16.mxu0 0
      %651 = vmatpush1.bf16.msra.mxu0 0
      %652 = vmatprep.subr.bf16.mxu0 0
      %653 = vmatpush1.bf16.msra.mxu0 0
      %654 = vmatprep.subr.bf16.mxu0 0
      %655 = vmatpush1.bf16.msra.mxu0 0
      %656 = vmatprep.subr.bf16.mxu0 0
      %657 = vmatpush1.bf16.msra.mxu0 0
      %658 = vmatprep.subr.bf16.mxu0 0
      %659 = vmatpush1.bf16.msra.mxu0 0
      %660 = vmatprep.subr.bf16.mxu0 0
      %661 = vmatpush1.bf16.msra.mxu0 0
      %662 = vmatprep.subr.bf16.mxu0 0
      %663 = vmatpush1.bf16.msra.mxu0 0
      %664 = vmatprep.subr.bf16.mxu0 0
      %665 = vmatpush1.bf16.msra.mxu0 0
      %666 = vmatprep.mubr.bf16.mxu0 0
      %667 = vmatmul.mubr.bf16.gmra.mrb[0].mxu0 %v299
      %v668 = vpop.f32.mrb[0].mxu0
      %v669 = vadd.f32 %v352, %v668
      %v670 = vpop.f32.mrb[0].mxu0
      %v671 = vadd.f32 %v356, %v670
      %v672 = vpop.f32.mrb[0].mxu0
      %v673 = vadd.f32 %v352, %v672
      %v674 = vpop.f32.mrb[0].mxu0
      %v675 = vadd.f32 %v356, %v674
      %676 = vmatprep.mubr.bf16.mxu0 0
      %677 = vmatmul.mubr.bf16.gmra.mrb[0].mxu0 %v300
      %v678 = vpop.f32.mrb[0].mxu0
      %v679 = vadd.f32 %v352, %v678
      %v680 = vpop.f32.mrb[0].mxu0
      %v681 = vadd.f32 %v356, %v680
      %v682 = vpop.f32.mrb[0].mxu0
      %v683 = vadd.f32 %v352, %v682
      %v684 = vpop.f32.mrb[0].mxu0
      %v685 = vadd.f32 %v356, %v684
      %686 = vmatprep.mubr.bf16.mxu0 0
      %687 = vmatmul.mubr.bf16.gmra.mrb[0].mxu0 %v301
      %v688 = vpop.f32.mrb[0].mxu0
      %v689 = vadd.f32 %v352, %v688
      %v690 = vpop.f32.mrb[0].mxu0
      %v691 = vadd.f32 %v356, %v690
      %v692 = vpop.f32.mrb[0].mxu0
      %v693 = vadd.f32 %v352, %v692
      %v694 = vpop.f32.mrb[0].mxu0
      %v695 = vadd.f32 %v356, %v694
      %696 = vmatprep.mubr.bf16.mxu0 0
      %697 = vmatmul.mubr.bf16.gmra.mrb[0].mxu0 %v302
      %v698 = vpop.f32.mrb[0].mxu0
      %v699 = vadd.f32 %v352, %v698
      %v700 = vpop.f32.mrb[0].mxu0
      %v701 = vadd.f32 %v356, %v700
      %v702 = vpop.f32.mrb[0].mxu0
      %v703 = vadd.f32 %v352, %v702
      %v704 = vpop.f32.mrb[0].mxu0
      %v705 = vadd.f32 %v356, %v704
      %706 = vmatprep.mubr.bf16.mxu0 0
      %707 = vmatmul.mubr.bf16.gmra.mrb[0].mxu0 %v303
      %v708 = vpop.f32.mrb[0].mxu0
      %v709 = vadd.f32 %v352, %v708
      %v710 = vpop.f32.mrb[0].mxu0
      %v711 = vadd.f32 %v356, %v710
      %v712 = vpop.f32.mrb[0].mxu0
      %v713 = vadd.f32 %v352, %v712
      %v714 = vpop.f32.mrb[0].mxu0
      %v715 = vadd.f32 %v356, %v714
      %716 = vmatprep.mubr.bf16.mxu0 0
      %717 = vmatmul.mubr.bf16.gmra.mrb[0].mxu0 %v304
      %v718 = vpop.f32.mrb[0].mxu0
      %v719 = vadd.f32 %v352, %v718
      %v720 = vpop.f32.mrb[0].mxu0
      %v721 = vadd.f32 %v356, %v720
      %v722 = vpop.f32.mrb[0].mxu0
      %v723 = vadd.f32 %v352, %v722
      %v724 = vpop.f32.mrb[0].mxu0
      %v725 = vadd.f32 %v356, %v724
      %726 = vmatprep.mubr.bf16.mxu0 0
      %727 = vmatmul.mubr.bf16.gmra.mrb[0].mxu0 %v305
      %v728 = vpop.f32.mrb[0].mxu0
      %v729 = vadd.f32 %v352, %v728
      %v730 = vpop.f32.mrb[0].mxu0
      %v731 = vadd.f32 %v356, %v730
      %v732 = vpop.f32.mrb[0].mxu0
      %v733 = vadd.f32 %v352, %v732
      %v734 = vpop.f32.mrb[0].mxu0
      %v735 = vadd.f32 %v356, %v734
      %736 = vmatprep.mubr.bf16.mxu0 0
      %737 = vmatmul.mubr.bf16.gmra.mrb[0].mxu0 %v306
      %v738 = vpop.f32.mrb[0].mxu0
      %v739 = vadd.f32 %v352, %v738
      %v740 = vpop.f32.mrb[0].mxu0
      %v741 = vadd.f32 %v356, %v740
      %v742 = vpop.f32.mrb[0].mxu0
      %v743 = vadd.f32 %v352, %v742
      %v744 = vpop.f32.mrb[0].mxu0
      %v745 = vadd.f32 %v356, %v744
      %746 = vdwg.mxu0
      %v747 = vmul.f32 %v556, 0.5
      %v748 = vmul.f32 %v558, 0.5
      %v749 = vmul.f32 %v669, 0.5
      %v750 = vmul.f32 %v671, 0.5
      %v751 = vmul.f32 %v560, 0.5
      %v752 = vmul.f32 %v562, 0.5
      %v753 = vmul.f32 %v673, 0.5
      %v754 = vmul.f32 %v675, 0.5
      %v755 = vmul.f32 %v566, 0.5
      %v756 = vmul.f32 %v568, 0.5
      %v757 = vmul.f32 %v679, 0.5
      %v758 = vmul.f32 %v681, 0.5
      %v759 = vmul.f32 %v570, 0.5
      %v760 = vmul.f32 %v572, 0.5
      %v761 = vmul.f32 %v683, 0.5
      %v762 = vmul.f32 %v685, 0.5
      %v763 = vmul.f32 %v576, 0.5
      %v764 = vmul.f32 %v578, 0.5
      %v765 = vmul.f32 %v689, 0.5
      %v766 = vmul.f32 %v691, 0.5
      %v767 = vmul.f32 %v580, 0.5
      %v768 = vmul.f32 %v582, 0.5
      %v769 = vmul.f32 %v693, 0.5
      %v770 = vmul.f32 %v695, 0.5
      %v771 = vmul.f32 %v586, 0.5
      %v772 = vmul.f32 %v588, 0.5
      %v773 = vmul.f32 %v699, 0.5
      %v774 = vmul.f32 %v701, 0.5
      %v775 = vmul.f32 %v590, 0.5
      %v776 = vmul.f32 %v592, 0.5
      %v777 = vmul.f32 %v703, 0.5
      %v778 = vmul.f32 %v705, 0.5
      %v779 = vmul.f32 %v596, 0.5
      %v780 = vmul.f32 %v598, 0.5
      %v781 = vmul.f32 %v709, 0.5
      %v782 = vmul.f32 %v711, 0.5
      %v783 = vmul.f32 %v600, 0.5
      %v784 = vmul.f32 %v602, 0.5
      %v785 = vmul.f32 %v713, 0.5
      %v786 = vmul.f32 %v715, 0.5
      %v787 = vmul.f32 %v606, 0.5
      %v788 = vmul.f32 %v608, 0.5
      %v789 = vmul.f32 %v719, 0.5
      %v790 = vmul.f32 %v721, 0.5
      %v791 = vmul.f32 %v610, 0.5
      %v792 = vmul.f32 %v612, 0.5
      %v793 = vmul.f32 %v723, 0.5
      %v794 = vmul.f32 %v725, 0.5
      %v795 = vmul.f32 %v616, 0.5
      %v796 = vmul.f32 %v618, 0.5
      %v797 = vmul.f32 %v729, 0.5
      %v798 = vmul.f32 %v731, 0.5
      %v799 = vmul.f32 %v620, 0.5
      %v800 = vmul.f32 %v622, 0.5
      %v801 = vmul.f32 %v733, 0.5
      %v802 = vmul.f32 %v735, 0.5
      %v803 = vmul.f32 %v626, 0.5
      %v804 = vmul.f32 %v628, 0.5
      %v805 = vmul.f32 %v739, 0.5
      %v806 = vmul.f32 %v741, 0.5
      %v807 = vmul.f32 %v630, 0.5
      %v808 = vmul.f32 %v632, 0.5
      %v809 = vmul.f32 %v743, 0.5
      %v810 = vmul.f32 %v745, 0.5
      %v811 = vmul.f32 %v556, 0.70710677
      %v812 = vmul.f32 %v558, 0.70710677
      %v813 = vmul.f32 %v669, 0.70710677
      %v814 = vmul.f32 %v671, 0.70710677
      %v815 = vmul.f32 %v560, 0.70710677
      %v816 = vmul.f32 %v562, 0.70710677
      %v817 = vmul.f32 %v673, 0.70710677
      %v818 = vmul.f32 %v675, 0.70710677
      %v819 = vmul.f32 %v566, 0.70710677
      %v820 = vmul.f32 %v568, 0.70710677
      %v821 = vmul.f32 %v679, 0.70710677
      %v822 = vmul.f32 %v681, 0.70710677
      %v823 = vmul.f32 %v570, 0.70710677
      %v824 = vmul.f32 %v572, 0.70710677
      %v825 = vmul.f32 %v683, 0.70710677
      %v826 = vmul.f32 %v685, 0.70710677
      %v827 = vmul.f32 %v576, 0.70710677
      %v828 = vmul.f32 %v578, 0.70710677
      %v829 = vmul.f32 %v689, 0.70710677
      %v830 = vmul.f32 %v691, 0.70710677
      %v831 = vmul.f32 %v580, 0.70710677
      %v832 = vmul.f32 %v582, 0.70710677
      %v833 = vmul.f32 %v693, 0.70710677
      %v834 = vmul.f32 %v695, 0.70710677
      %v835 = vmul.f32 %v586, 0.70710677
      %v836 = vmul.f32 %v588, 0.70710677
      %v837 = vmul.f32 %v699, 0.70710677
      %v838 = vmul.f32 %v701, 0.70710677
      %v839 = vmul.f32 %v590, 0.70710677
      %v840 = vmul.f32 %v592, 0.70710677
      %v841 = vmul.f32 %v703, 0.70710677
      %v842 = vmul.f32 %v705, 0.70710677
      %v843 = vmul.f32 %v596, 0.70710677
      %v844 = vmul.f32 %v598, 0.70710677
      %v845 = vmul.f32 %v709, 0.70710677
      %v846 = vmul.f32 %v711, 0.70710677
      %v847 = vmul.f32 %v600, 0.70710677
      %v848 = vmul.f32 %v602, 0.70710677
      %v849 = vmul.f32 %v713, 0.70710677
      %v850 = vmul.f32 %v715, 0.70710677
      %v851 = vmul.f32 %v606, 0.70710677
      %v852 = vmul.f32 %v608, 0.70710677
      %v853 = vmul.f32 %v719, 0.70710677
      %v854 = vmul.f32 %v721, 0.70710677
      %v855 = vmul.f32 %v610, 0.70710677
      %v856 = vmul.f32 %v612, 0.70710677
      %v857 = vmul.f32 %v723, 0.70710677
      %v858 = vmul.f32 %v725, 0.70710677
      %v859 = vmul.f32 %v616, 0.70710677
      %v860 = vmul.f32 %v618, 0.70710677
      %v861 = vmul.f32 %v729, 0.70710677
      %v862 = vmul.f32 %v731, 0.70710677
      %v863 = vmul.f32 %v620, 0.70710677
      %v864 = vmul.f32 %v622, 0.70710677
      %v865 = vmul.f32 %v733, 0.70710677
      %v866 = vmul.f32 %v735, 0.70710677
      %v867 = vmul.f32 %v626, 0.70710677
      %v868 = vmul.f32 %v628, 0.70710677
      %v869 = vmul.f32 %v739, 0.70710677
      %v870 = vmul.f32 %v741, 0.70710677
      %v871 = vmul.f32 %v630, 0.70710677
      %v872 = vmul.f32 %v632, 0.70710677
      %v873 = vmul.f32 %v743, 0.70710677
      %v874 = vmul.f32 %v745, 0.70710677
      %v875 = verf.f32.pop %v811
      %v876 = verf.f32.pop %v812
      %v877 = verf.f32.pop %v813
      %v878 = verf.f32.pop %v814
      %v879 = verf.f32.pop %v815
      %v880 = verf.f32.pop %v816
      %v881 = verf.f32.pop %v817
      %v882 = verf.f32.pop %v818
      %v883 = verf.f32.pop %v819
      %v884 = verf.f32.pop %v820
      %v885 = verf.f32.pop %v821
      %v886 = verf.f32.pop %v822
      %v887 = verf.f32.pop %v823
      %v888 = verf.f32.pop %v824
      %v889 = verf.f32.pop %v825
      %v890 = verf.f32.pop %v826
      %v891 = verf.f32.pop %v827
      %v892 = verf.f32.pop %v828
      %v893 = verf.f32.pop %v829
      %v894 = verf.f32.pop %v830
      %v895 = verf.f32.pop %v831
      %v896 = verf.f32.pop %v832
      %v897 = verf.f32.pop %v833
      %v898 = verf.f32.pop %v834
      %v899 = verf.f32.pop %v835
      %v900 = verf.f32.pop %v836
      %v901 = verf.f32.pop %v837
      %v902 = verf.f32.pop %v838
      %v903 = verf.f32.pop %v839
      %v904 = verf.f32.pop %v840
      %v905 = verf.f32.pop %v841
      %v906 = verf.f32.pop %v842
      %v907 = verf.f32.pop %v843
      %v908 = verf.f32.pop %v844
      %v909 = verf.f32.pop %v845
      %v910 = verf.f32.pop %v846
      %v911 = verf.f32.pop %v847
      %v912 = verf.f32.pop %v848
      %v913 = verf.f32.pop %v849
      %v914 = verf.f32.pop %v850
      %v915 = verf.f32.pop %v851
      %v916 = verf.f32.pop %v852
      %v917 = verf.f32.pop %v853
      %v918 = verf.f32.pop %v854
      %v919 = verf.f32.pop %v855
      %v920 = verf.f32.pop %v856
      %v921 = verf.f32.pop %v857
      %v922 = verf.f32.pop %v858
      %v923 = verf.f32.pop %v859
      %v924 = verf.f32.pop %v860
      %v925 = verf.f32.pop %v861
      %v926 = verf.f32.pop %v862
      %v927 = verf.f32.pop %v863
      %v928 = verf.f32.pop %v864
      %v929 = verf.f32.pop %v865
      %v930 = verf.f32.pop %v866
      %v931 = verf.f32.pop %v867
      %v932 = verf.f32.pop %v868
      %v933 = verf.f32.pop %v869
      %v934 = verf.f32.pop %v870
      %v935 = verf.f32.pop %v871
      %v936 = verf.f32.pop %v872
      %v937 = verf.f32.pop %v873
      %v938 = verf.f32.pop %v874
      %v939 = vadd.f32 %v875, 1.0
      %v940 = vadd.f32 %v876, 1.0
      %v941 = vadd.f32 %v877, 1.0
      %v942 = vadd.f32 %v878, 1.0
      %v943 = vadd.f32 %v879, 1.0
      %v944 = vadd.f32 %v880, 1.0
      %v945 = vadd.f32 %v881, 1.0
      %v946 = vadd.f32 %v882, 1.0
      %v947 = vadd.f32 %v883, 1.0
      %v948 = vadd.f32 %v884, 1.0
      %v949 = vadd.f32 %v885, 1.0
      %v950 = vadd.f32 %v886, 1.0
      %v951 = vadd.f32 %v887, 1.0
      %v952 = vadd.f32 %v888, 1.0
      %v953 = vadd.f32 %v889, 1.0
      %v954 = vadd.f32 %v890, 1.0
      %v955 = vadd.f32 %v891, 1.0
      %v956 = vadd.f32 %v892, 1.0
      %v957 = vadd.f32 %v893, 1.0
      %v958 = vadd.f32 %v894, 1.0
      %v959 = vadd.f32 %v895, 1.0
      %v960 = vadd.f32 %v896, 1.0
      %v961 = vadd.f32 %v897, 1.0
      %v962 = vadd.f32 %v898, 1.0
      %v963 = vadd.f32 %v899, 1.0
      %v964 = vadd.f32 %v900, 1.0
      %v965 = vadd.f32 %v901, 1.0
      %v966 = vadd.f32 %v902, 1.0
      %v967 = vadd.f32 %v903, 1.0
      %v968 = vadd.f32 %v904, 1.0
      %v969 = vadd.f32 %v905, 1.0
      %v970 = vadd.f32 %v906, 1.0
      %v971 = vadd.f32 %v907, 1.0
      %v972 = vadd.f32 %v908, 1.0
      %v973 = vadd.f32 %v909, 1.0
      %v974 = vadd.f32 %v910, 1.0
      %v975 = vadd.f32 %v911, 1.0
      %v976 = vadd.f32 %v912, 1.0
      %v977 = vadd.f32 %v913, 1.0
      %v978 = vadd.f32 %v914, 1.0
      %v979 = vadd.f32 %v915, 1.0
      %v980 = vadd.f32 %v916, 1.0
      %v981 = vadd.f32 %v917, 1.0
      %v982 = vadd.f32 %v918, 1.0
      %v983 = vadd.f32 %v919, 1.0
      %v984 = vadd.f32 %v920, 1.0
      %v985 = vadd.f32 %v921, 1.0
      %v986 = vadd.f32 %v922, 1.0
      %v987 = vadd.f32 %v923, 1.0
      %v988 = vadd.f32 %v924, 1.0
      %v989 = vadd.f32 %v925, 1.0
      %v990 = vadd.f32 %v926, 1.0
      %v991 = vadd.f32 %v927, 1.0
      %v992 = vadd.f32 %v928, 1.0
      %v993 = vadd.f32 %v929, 1.0
      %v994 = vadd.f32 %v930, 1.0
      %v995 = vadd.f32 %v931, 1.0
      %v996 = vadd.f32 %v932, 1.0
      %v997 = vadd.f32 %v933, 1.0
      %v998 = vadd.f32 %v934, 1.0
      %v999 = vadd.f32 %v935, 1.0
      %v1000 = vadd.f32 %v936, 1.0
      %v1001 = vadd.f32 %v937, 1.0
      %v1002 = vadd.f32 %v938, 1.0
      %v1003 = vmul.f32 %v747, %v939
      %v1004 = vmul.f32 %v748, %v940
      %v1005 = vmul.f32 %v749, %v941
      %v1006 = vmul.f32 %v750, %v942
      %v1007 = vmul.f32 %v751, %v943
      %v1008 = vmul.f32 %v752, %v944
      %v1009 = vmul.f32 %v753, %v945
      %v1010 = vmul.f32 %v754, %v946
      %v1011 = vmul.f32 %v755, %v947
      %v1012 = vmul.f32 %v756, %v948
      %v1013 = vmul.f32 %v757, %v949
      %v1014 = vmul.f32 %v758, %v950
      %v1015 = vmul.f32 %v759, %v951
      %v1016 = vmul.f32 %v760, %v952
      %v1017 = vmul.f32 %v761, %v953
      %v1018 = vmul.f32 %v762, %v954
      %v1019 = vmul.f32 %v763, %v955
      %v1020 = vmul.f32 %v764, %v956
      %v1021 = vmul.f32 %v765, %v957
      %v1022 = vmul.f32 %v766, %v958
      %v1023 = vmul.f32 %v767, %v959
      %v1024 = vmul.f32 %v768, %v960
      %v1025 = vmul.f32 %v769, %v961
      %v1026 = vmul.f32 %v770, %v962
      %v1027 = vmul.f32 %v771, %v963
      %v1028 = vmul.f32 %v772, %v964
      %v1029 = vmul.f32 %v773, %v965
      %v1030 = vmul.f32 %v774, %v966
      %v1031 = vmul.f32 %v775, %v967
      %v1032 = vmul.f32 %v776, %v968
      %v1033 = vmul.f32 %v777, %v969
      %v1034 = vmul.f32 %v778, %v970
      %v1035 = vmul.f32 %v779, %v971
      %v1036 = vmul.f32 %v780, %v972
      %v1037 = vmul.f32 %v781, %v973
      %v1038 = vmul.f32 %v782, %v974
      %v1039 = vmul.f32 %v783, %v975
      %v1040 = vmul.f32 %v784, %v976
      %v1041 = vmul.f32 %v785, %v977
      %v1042 = vmul.f32 %v786, %v978
      %v1043 = vmul.f32 %v787, %v979
      %v1044 = vmul.f32 %v788, %v980
      %v1045 = vmul.f32 %v789, %v981
      %v1046 = vmul.f32 %v790, %v982
      %v1047 = vmul.f32 %v791, %v983
      %v1048 = vmul.f32 %v792, %v984
      %v1049 = vmul.f32 %v793, %v985
      %v1050 = vmul.f32 %v794, %v986
      %v1051 = vmul.f32 %v795, %v987
      %v1052 = vmul.f32 %v796, %v988
      %v1053 = vmul.f32 %v797, %v989
      %v1054 = vmul.f32 %v798, %v990
      %v1055 = vmul.f32 %v799, %v991
      %v1056 = vmul.f32 %v800, %v992
      %v1057 = vmul.f32 %v801, %v993
      %v1058 = vmul.f32 %v802, %v994
      %v1059 = vmul.f32 %v803, %v995
      %v1060 = vmul.f32 %v804, %v996
      %v1061 = vmul.f32 %v805, %v997
      %v1062 = vmul.f32 %v806, %v998
      %v1063 = vmul.f32 %v807, %v999
      %v1064 = vmul.f32 %v808, %v1000
      %v1065 = vmul.f32 %v809, %v1001
      %v1066 = vmul.f32 %v810, %v1002
      %v1067 = vpack.c.bf16 %v1007, %v1003
      %v1068 = vpack.c.bf16 %v1008, %v1004
      %v1069 = vpack.c.bf16 %v1009, %v1005
      %v1070 = vpack.c.bf16 %v1010, %v1006
      %v1071 = vpack.c.bf16 %v1015, %v1011
      %v1072 = vpack.c.bf16 %v1016, %v1012
      %v1073 = vpack.c.bf16 %v1017, %v1013
      %v1074 = vpack.c.bf16 %v1018, %v1014
      %v1075 = vpack.c.bf16 %v1023, %v1019
      %v1076 = vpack.c.bf16 %v1024, %v1020
      %v1077 = vpack.c.bf16 %v1025, %v1021
      %v1078 = vpack.c.bf16 %v1026, %v1022
      %v1079 = vpack.c.bf16 %v1031, %v1027
      %v1080 = vpack.c.bf16 %v1032, %v1028
      %v1081 = vpack.c.bf16 %v1033, %v1029
      %v1082 = vpack.c.bf16 %v1034, %v1030
      %v1083 = vpack.c.bf16 %v1039, %v1035
      %v1084 = vpack.c.bf16 %v1040, %v1036
      %v1085 = vpack.c.bf16 %v1041, %v1037
      %v1086 = vpack.c.bf16 %v1042, %v1038
      %v1087 = vpack.c.bf16 %v1047, %v1043
      %v1088 = vpack.c.bf16 %v1048, %v1044
      %v1089 = vpack.c.bf16 %v1049, %v1045
      %v1090 = vpack.c.bf16 %v1050, %v1046
      %v1091 = vpack.c.bf16 %v1055, %v1051
      %v1092 = vpack.c.bf16 %v1056, %v1052
      %v1093 = vpack.c.bf16 %v1057, %v1053
      %v1094 = vpack.c.bf16 %v1058, %v1054
      %v1095 = vpack.c.bf16 %v1063, %v1059
      %v1096 = vpack.c.bf16 %v1064, %v1060
      %v1097 = vpack.c.bf16 %v1065, %v1061
      %v1098 = vpack.c.bf16 %v1066, %v1062
      %v1099 = vld [vmem:[%s3] sm:$0xf]
      %v1100 = vld [vmem:[%s3 + $0x4] sm:$0xf]
      %v1101 = vld [vmem:[%s3 + $0x8] sm:$0xf]
      %v1102 = vld [vmem:[%s3 + $0xc] sm:$0xf]
      %v1103 = vld [vmem:[%s3 + $0x10] sm:$0xf]
      %v1104 = vld [vmem:[%s3 + $0x14] sm:$0xf]
      %v1105 = vld [vmem:[%s3 + $0x18] sm:$0xf]
      %v1106 = vld [vmem:[%s3 + $0x1c] sm:$0xf]
      %v1107 = vld [vmem:[%s3 + $0x20] sm:$0xf]
      %v1108 = vld [vmem:[%s3 + $0x24] sm:$0xf]
      %v1109 = vld [vmem:[%s3 + $0x28] sm:$0xf]
      %v1110 = vld [vmem:[%s3 + $0x2c] sm:$0xf]
      %v1111 = vld [vmem:[%s3 + $0x30] sm:$0xf]
      %v1112 = vld [vmem:[%s3 + $0x34] sm:$0xf]
      %v1113 = vld [vmem:[%s3 + $0x38] sm:$0xf]
      %v1114 = vld [vmem:[%s3 + $0x3c] sm:$0xf]
      %v1115 = vld [vmem:[%s3 + $0x40] sm:$0xf]
      %v1116 = vld [vmem:[%s3 + $0x44] sm:$0xf]
      %v1117 = vld [vmem:[%s3 + $0x48] sm:$0xf]
      %v1118 = vld [vmem:[%s3 + $0x4c] sm:$0xf]
      %v1119 = vld [vmem:[%s3 + $0x50] sm:$0xf]
      %v1120 = vld [vmem:[%s3 + $0x54] sm:$0xf]
      %v1121 = vld [vmem:[%s3 + $0x58] sm:$0xf]
      %v1122 = vld [vmem:[%s3 + $0x5c] sm:$0xf]
      %v1123 = vld [vmem:[%s3 + $0x60] sm:$0xf]
      %v1124 = vld [vmem:[%s3 + $0x64] sm:$0xf]
      %v1125 = vld [vmem:[%s3 + $0x68] sm:$0xf]
      %v1126 = vld [vmem:[%s3 + $0x6c] sm:$0xf]
      %v1127 = vld [vmem:[%s3 + $0x70] sm:$0xf]
      %v1128 = vld [vmem:[%s3 + $0x74] sm:$0xf]
      %v1129 = vld [vmem:[%s3 + $0x78] sm:$0xf]
      %v1130 = vld [vmem:[%s3 + $0x7c] sm:$0xf]
      %v1131 = vld [vmem:[%s3 + $0x80] sm:$0xf]
      %v1132 = vld [vmem:[%s3 + $0x84] sm:$0xf]
      %v1133 = vld [vmem:[%s3 + $0x88] sm:$0xf]
      %v1134 = vld [vmem:[%s3 + $0x8c] sm:$0xf]
      %v1135 = vld [vmem:[%s3 + $0x90] sm:$0xf]
      %v1136 = vld [vmem:[%s3 + $0x94] sm:$0xf]
      %v1137 = vld [vmem:[%s3 + $0x98] sm:$0xf]
      %v1138 = vld [vmem:[%s3 + $0x9c] sm:$0xf]
      %v1139 = vld [vmem:[%s3 + $0xa0] sm:$0xf]
      %v1140 = vld [vmem:[%s3 + $0xa4] sm:$0xf]
      %v1141 = vld [vmem:[%s3 + $0xa8] sm:$0xf]
      %v1142 = vld [vmem:[%s3 + $0xac] sm:$0xf]
      %v1143 = vld [vmem:[%s3 + $0xb0] sm:$0xf]
      %v1144 = vld [vmem:[%s3 + $0xb4] sm:$0xf]
      %v1145 = vld [vmem:[%s3 + $0xb8] sm:$0xf]
      %v1146 = vld [vmem:[%s3 + $0xbc] sm:$0xf]
      %v1147 = vld [vmem:[%s3 + $0xc0] sm:$0xf]
      %v1148 = vld [vmem:[%s3 + $0xc4] sm:$0xf]
      %v1149 = vld [vmem:[%s3 + $0xc8] sm:$0xf]
      %v1150 = vld [vmem:[%s3 + $0xcc] sm:$0xf]
      %v1151 = vld [vmem:[%s3 + $0xd0] sm:$0xf]
      %v1152 = vld [vmem:[%s3 + $0xd4] sm:$0xf]
      %v1153 = vld [vmem:[%s3 + $0xd8] sm:$0xf]
      %v1154 = vld [vmem:[%s3 + $0xdc] sm:$0xf]
      %v1155 = vld [vmem:[%s3 + $0xe0] sm:$0xf]
      %v1156 = vld [vmem:[%s3 + $0xe4] sm:$0xf]
      %v1157 = vld [vmem:[%s3 + $0xe8] sm:$0xf]
      %v1158 = vld [vmem:[%s3 + $0xec] sm:$0xf]
      %v1159 = vld [vmem:[%s3 + $0xf0] sm:$0xf]
      %v1160 = vld [vmem:[%s3 + $0xf4] sm:$0xf]
      %v1161 = vld [vmem:[%s3 + $0xf8] sm:$0xf]
      %v1162 = vld [vmem:[%s3 + $0xfc] sm:$0xf]
      %v1163 = vld [vmem:[%s4] sm:$0x1]
      %v1165 = vlaneseq
      %v1166 = vshrl.u32 %v1165, 7
      %v1167 = vsub.s32 0, %v1166
      %v1168 = vrot.slane %v1163, %v1167
      %v1234 = vunpack.c.l.b16 %v1099
      %v1235 = vunpack.c.l.b16 %v1100
      %v1236 = vunpack.c.l.b16 %v1101
      %v1237 = vunpack.c.l.b16 %v1102
      %v1238 = vunpack.c.l.b16 %v1103
      %v1239 = vunpack.c.l.b16 %v1104
      %v1240 = vunpack.c.l.b16 %v1105
      %v1241 = vunpack.c.l.b16 %v1106
      %v1242 = vunpack.c.l.b16 %v1107
      %v1243 = vunpack.c.l.b16 %v1108
      %v1244 = vunpack.c.l.b16 %v1109
      %v1245 = vunpack.c.l.b16 %v1110
      %v1246 = vunpack.c.l.b16 %v1111
      %v1247 = vunpack.c.l.b16 %v1112
      %v1248 = vunpack.c.l.b16 %v1113
      %v1249 = vunpack.c.l.b16 %v1114
      %v1250 = vunpack.c.l.b16 %v1115
      %v1251 = vunpack.c.l.b16 %v1116
      %v1252 = vunpack.c.l.b16 %v1117
      %v1253 = vunpack.c.l.b16 %v1118
      %v1254 = vunpack.c.l.b16 %v1119
      %v1255 = vunpack.c.l.b16 %v1120
      %v1256 = vunpack.c.l.b16 %v1121
      %v1257 = vunpack.c.l.b16 %v1122
      %v1258 = vunpack.c.l.b16 %v1123
      %v1259 = vunpack.c.l.b16 %v1124
      %v1260 = vunpack.c.l.b16 %v1125
      %v1261 = vunpack.c.l.b16 %v1126
      %v1262 = vunpack.c.l.b16 %v1127
      %v1263 = vunpack.c.l.b16 %v1128
      %v1264 = vunpack.c.l.b16 %v1129
      %v1265 = vunpack.c.l.b16 %v1130
      %v1266 = vunpack.c.l.b16 %v1131
      %v1267 = vunpack.c.l.b16 %v1132
      %v1268 = vunpack.c.l.b16 %v1133
      %v1269 = vunpack.c.l.b16 %v1134
      %v1270 = vunpack.c.l.b16 %v1135
      %v1271 = vunpack.c.l.b16 %v1136
      %v1272 = vunpack.c.l.b16 %v1137
      %v1273 = vunpack.c.l.b16 %v1138
      %v1274 = vunpack.c.l.b16 %v1139
      %v1275 = vunpack.c.l.b16 %v1140
      %v1276 = vunpack.c.l.b16 %v1141
      %v1277 = vunpack.c.l.b16 %v1142
      %v1278 = vunpack.c.l.b16 %v1143
      %v1279 = vunpack.c.l.b16 %v1144
      %v1280 = vunpack.c.l.b16 %v1145
      %v1281 = vunpack.c.l.b16 %v1146
      %v1282 = vunpack.c.l.b16 %v1147
      %v1283 = vunpack.c.l.b16 %v1148
      %v1284 = vunpack.c.l.b16 %v1149
      %v1285 = vunpack.c.l.b16 %v1150
      %v1286 = vunpack.c.l.b16 %v1151
      %v1287 = vunpack.c.l.b16 %v1152
      %v1288 = vunpack.c.l.b16 %v1153
      %v1289 = vunpack.c.l.b16 %v1154
      %v1290 = vunpack.c.l.b16 %v1155
      %v1291 = vunpack.c.l.b16 %v1156
      %v1292 = vunpack.c.l.b16 %v1157
      %v1293 = vunpack.c.l.b16 %v1158
      %v1294 = vunpack.c.l.b16 %v1159
      %v1295 = vunpack.c.l.b16 %v1160
      %v1296 = vunpack.c.l.b16 %v1161
      %v1297 = vunpack.c.l.b16 %v1162
      %v1298 = vpack.c.b16 %v1235, %v1234
      %v1299 = vpack.c.b16 %v1237, %v1236
      %v1300 = vpack.c.b16 %v1239, %v1238
      %v1301 = vpack.c.b16 %v1241, %v1240
      %v1302 = vpack.c.b16 %v1243, %v1242
      %v1303 = vpack.c.b16 %v1245, %v1244
      %v1304 = vpack.c.b16 %v1247, %v1246
      %v1305 = vpack.c.b16 %v1249, %v1248
      %v1306 = vpack.c.b16 %v1251, %v1250
      %v1307 = vpack.c.b16 %v1253, %v1252
      %v1308 = vpack.c.b16 %v1255, %v1254
      %v1309 = vpack.c.b16 %v1257, %v1256
      %v1310 = vpack.c.b16 %v1259, %v1258
      %v1311 = vpack.c.b16 %v1261, %v1260
      %v1312 = vpack.c.b16 %v1263, %v1262
      %v1313 = vpack.c.b16 %v1265, %v1264
      %v1314 = vpack.c.b16 %v1267, %v1266
      %v1315 = vpack.c.b16 %v1269, %v1268
      %v1316 = vpack.c.b16 %v1271, %v1270
      %v1317 = vpack.c.b16 %v1273, %v1272
      %v1318 = vpack.c.b16 %v1275, %v1274
      %v1319 = vpack.c.b16 %v1277, %v1276
      %v1320 = vpack.c.b16 %v1279, %v1278
      %v1321 = vpack.c.b16 %v1281, %v1280
      %v1322 = vpack.c.b16 %v1283, %v1282
      %v1323 = vpack.c.b16 %v1285, %v1284
      %v1324 = vpack.c.b16 %v1287, %v1286
      %v1325 = vpack.c.b16 %v1289, %v1288
      %v1326 = vpack.c.b16 %v1291, %v1290
      %v1327 = vpack.c.b16 %v1293, %v1292
      %v1328 = vpack.c.b16 %v1295, %v1294
      %v1329 = vpack.c.b16 %v1297, %v1296
      %1362 = vmatprep.subr.bf16.mxu0 0
      %1363 = vmatpush1.bf16.msra.mxu0 %v1298
      %1364 = vmatprep.subr.bf16.mxu0 0
      %1365 = vmatpush1.bf16.msra.mxu0 %v1299
      %1366 = vmatprep.subr.bf16.mxu0 0
      %1367 = vmatpush1.bf16.msra.mxu0 %v1300
      %1368 = vmatprep.subr.bf16.mxu0 0
      %1369 = vmatpush1.bf16.msra.mxu0 %v1301
      %1370 = vmatprep.subr.bf16.mxu0 0
      %1371 = vmatpush1.bf16.msra.mxu0 %v1302
      %1372 = vmatprep.subr.bf16.mxu0 0
      %1373 = vmatpush1.bf16.msra.mxu0 %v1303
      %1374 = vmatprep.subr.bf16.mxu0 0
      %1375 = vmatpush1.bf16.msra.mxu0 %v1304
      %1376 = vmatprep.subr.bf16.mxu0 0
      %1377 = vmatpush1.bf16.msra.mxu0 %v1305
      %1378 = vmatprep.subr.bf16.mxu0 0
      %1379 = vmatpush1.bf16.msra.mxu0 %v1306
      %1380 = vmatprep.subr.bf16.mxu0 0
      %1381 = vmatpush1.bf16.msra.mxu0 %v1307
      %1382 = vmatprep.subr.bf16.mxu0 0
      %1383 = vmatpush1.bf16.msra.mxu0 %v1308
      %1384 = vmatprep.subr.bf16.mxu0 0
      %1385 = vmatpush1.bf16.msra.mxu0 %v1309
      %1386 = vmatprep.subr.bf16.mxu0 0
      %1387 = vmatpush1.bf16.msra.mxu0 %v1310
      %1388 = vmatprep.subr.bf16.mxu0 0
      %1389 = vmatpush1.bf16.msra.mxu0 %v1311
      %1390 = vmatprep.subr.bf16.mxu0 0
      %1391 = vmatpush1.bf16.msra.mxu0 %v1312
      %1392 = vmatprep.subr.bf16.mxu0 0
      %1393 = vmatpush1.bf16.msra.mxu0 %v1313
      %1394 = vmatprep.mubr.bf16.mxu0 %v1068
      %1395 = vmatmul.mubr.bf16.gmra.mrb[0].mxu0 %v1067
      %v1396 = vpop.f32.mrb[0].mxu0
      %v1397 = vadd.f32 %v1168, %v1396
      %v1398 = vpop.f32.mrb[0].mxu0
      %v1399 = vpop.f32.mrb[0].mxu0
      %v1400 = vadd.f32 %v1168, %v1399
      %v1401 = vpop.f32.mrb[0].mxu0
      %1402 = vmatprep.mubr.bf16.mxu0 %v1072
      %1403 = vmatmul.mubr.bf16.gmra.mrb[0].mxu0 %v1071
      %v1404 = vpop.f32.mrb[0].mxu0
      %v1405 = vadd.f32 %v1168, %v1404
      %v1406 = vpop.f32.mrb[0].mxu0
      %v1407 = vpop.f32.mrb[0].mxu0
      %v1408 = vadd.f32 %v1168, %v1407
      %v1409 = vpop.f32.mrb[0].mxu0
      %1410 = vmatprep.mubr.bf16.mxu0 %v1076
      %1411 = vmatmul.mubr.bf16.gmra.mrb[0].mxu0 %v1075
      %v1412 = vpop.f32.mrb[0].mxu0
      %v1413 = vadd.f32 %v1168, %v1412
      %v1414 = vpop.f32.mrb[0].mxu0
      %v1415 = vpop.f32.mrb[0].mxu0
      %v1416 = vadd.f32 %v1168, %v1415
      %v1417 = vpop.f32.mrb[0].mxu0
      %1418 = vmatprep.mubr.bf16.mxu0 %v1080
      %1419 = vmatmul.mubr.bf16.gmra.mrb[0].mxu0 %v1079
      %v1420 = vpop.f32.mrb[0].mxu0
      %v1421 = vadd.f32 %v1168, %v1420
      %v1422 = vpop.f32.mrb[0].mxu0
      %v1423 = vpop.f32.mrb[0].mxu0
      %v1424 = vadd.f32 %v1168, %v1423
      %v1425 = vpop.f32.mrb[0].mxu0
      %1426 = vmatprep.mubr.bf16.mxu0 %v1084
      %1427 = vmatmul.mubr.bf16.gmra.mrb[0].mxu0 %v1083
      %v1428 = vpop.f32.mrb[0].mxu0
      %v1429 = vadd.f32 %v1168, %v1428
      %v1430 = vpop.f32.mrb[0].mxu0
      %v1431 = vpop.f32.mrb[0].mxu0
      %v1432 = vadd.f32 %v1168, %v1431
      %v1433 = vpop.f32.mrb[0].mxu0
      %1434 = vmatprep.mubr.bf16.mxu0 %v1088
      %1435 = vmatmul.mubr.bf16.gmra.mrb[0].mxu0 %v1087
      %v1436 = vpop.f32.mrb[0].mxu0
      %v1437 = vadd.f32 %v1168, %v1436
      %v1438 = vpop.f32.mrb[0].mxu0
      %v1439 = vpop.f32.mrb[0].mxu0
      %v1440 = vadd.f32 %v1168, %v1439
      %v1441 = vpop.f32.mrb[0].mxu0
      %1442 = vmatprep.mubr.bf16.mxu0 %v1092
      %1443 = vmatmul.mubr.bf16.gmra.mrb[0].mxu0 %v1091
      %v1444 = vpop.f32.mrb[0].mxu0
      %v1445 = vadd.f32 %v1168, %v1444
      %v1446 = vpop.f32.mrb[0].mxu0
      %v1447 = vpop.f32.mrb[0].mxu0
      %v1448 = vadd.f32 %v1168, %v1447
      %v1449 = vpop.f32.mrb[0].mxu0
      %1450 = vmatprep.mubr.bf16.mxu0 %v1096
      %1451 = vmatmul.mubr.bf16.gmra.mrb[0].mxu0 %v1095
      %v1452 = vpop.f32.mrb[0].mxu0
      %v1453 = vadd.f32 %v1168, %v1452
      %v1454 = vpop.f32.mrb[0].mxu0
      %v1455 = vpop.f32.mrb[0].mxu0
      %v1456 = vadd.f32 %v1168, %v1455
      %v1457 = vpop.f32.mrb[0].mxu0
      %1458 = vdwg.mxu0
      %1459 = vmatprep.subr.bf16.mxu0 0
      %1460 = vmatpush1.bf16.msra.mxu0 %v1314
      %1461 = vmatprep.subr.bf16.mxu0 0
      %1462 = vmatpush1.bf16.msra.mxu0 %v1315
      %1463 = vmatprep.subr.bf16.mxu0 0
      %1464 = vmatpush1.bf16.msra.mxu0 %v1316
      %1465 = vmatprep.subr.bf16.mxu0 0
      %1466 = vmatpush1.bf16.msra.mxu0 %v1317
      %1467 = vmatprep.subr.bf16.mxu0 0
      %1468 = vmatpush1.bf16.msra.mxu0 %v1318
      %1469 = vmatprep.subr.bf16.mxu0 0
      %1470 = vmatpush1.bf16.msra.mxu0 %v1319
      %1471 = vmatprep.subr.bf16.mxu0 0
      %1472 = vmatpush1.bf16.msra.mxu0 %v1320
      %1473 = vmatprep.subr.bf16.mxu0 0
      %1474 = vmatpush1.bf16.msra.mxu0 %v1321
      %1475 = vmatprep.subr.bf16.mxu0 0
      %1476 = vmatpush1.bf16.msra.mxu0 %v1322
      %1477 = vmatprep.subr.bf16.mxu0 0
      %1478 = vmatpush1.bf16.msra.mxu0 %v1323
      %1479 = vmatprep.subr.bf16.mxu0 0
      %1480 = vmatpush1.bf16.msra.mxu0 %v1324
      %1481 = vmatprep.subr.bf16.mxu0 0
      %1482 = vmatpush1.bf16.msra.mxu0 %v1325
      %1483 = vmatprep.subr.bf16.mxu0 0
      %1484 = vmatpush1.bf16.msra.mxu0 %v1326
      %1485 = vmatprep.subr.bf16.mxu0 0
      %1486 = vmatpush1.bf16.msra.mxu0 %v1327
      %1487 = vmatprep.subr.bf16.mxu0 0
      %1488 = vmatpush1.bf16.msra.mxu0 %v1328
      %1489 = vmatprep.subr.bf16.mxu0 0
      %1490 = vmatpush1.bf16.msra.mxu0 %v1329
      %1491 = vmatprep.mubr.bf16.mxu0 %v1070
      %1492 = vmatmul.mubr.bf16.gmra.mrb[0].mxu0 %v1069
      %v1493 = vpop.f32.mrb[0].mxu0
      %v1494 = vadd.f32 %v1397, %v1493
      %v1495 = vpop.f32.mrb[0].mxu0
      %v1496 = vpop.f32.mrb[0].mxu0
      %v1497 = vadd.f32 %v1400, %v1496
      %v1498 = vpop.f32.mrb[0].mxu0
      %1499 = vmatprep.mubr.bf16.mxu0 %v1074
      %1500 = vmatmul.mubr.bf16.gmra.mrb[0].mxu0 %v1073
      %v1501 = vpop.f32.mrb[0].mxu0
      %v1502 = vadd.f32 %v1405, %v1501
      %v1503 = vpop.f32.mrb[0].mxu0
      %v1504 = vpop.f32.mrb[0].mxu0
      %v1505 = vadd.f32 %v1408, %v1504
      %v1506 = vpop.f32.mrb[0].mxu0
      %1507 = vmatprep.mubr.bf16.mxu0 %v1078
      %1508 = vmatmul.mubr.bf16.gmra.mrb[0].mxu0 %v1077
      %v1509 = vpop.f32.mrb[0].mxu0
      %v1510 = vadd.f32 %v1413, %v1509
      %v1511 = vpop.f32.mrb[0].mxu0
      %v1512 = vpop.f32.mrb[0].mxu0
      %v1513 = vadd.f32 %v1416, %v1512
      %v1514 = vpop.f32.mrb[0].mxu0
      %1515 = vmatprep.mubr.bf16.mxu0 %v1082
      %1516 = vmatmul.mubr.bf16.gmra.mrb[0].mxu0 %v1081
      %v1517 = vpop.f32.mrb[0].mxu0
      %v1518 = vadd.f32 %v1421, %v1517
      %v1519 = vpop.f32.mrb[0].mxu0
      %v1520 = vpop.f32.mrb[0].mxu0
      %v1521 = vadd.f32 %v1424, %v1520
      %v1522 = vpop.f32.mrb[0].mxu0
      %1523 = vmatprep.mubr.bf16.mxu0 %v1086
      %1524 = vmatmul.mubr.bf16.gmra.mrb[0].mxu0 %v1085
      %v1525 = vpop.f32.mrb[0].mxu0
      %v1526 = vadd.f32 %v1429, %v1525
      %v1527 = vpop.f32.mrb[0].mxu0
      %v1528 = vpop.f32.mrb[0].mxu0
      %v1529 = vadd.f32 %v1432, %v1528
      %v1530 = vpop.f32.mrb[0].mxu0
      %1531 = vmatprep.mubr.bf16.mxu0 %v1090
      %1532 = vmatmul.mubr.bf16.gmra.mrb[0].mxu0 %v1089
      %v1533 = vpop.f32.mrb[0].mxu0
      %v1534 = vadd.f32 %v1437, %v1533
      %v1535 = vpop.f32.mrb[0].mxu0
      %v1536 = vpop.f32.mrb[0].mxu0
      %v1537 = vadd.f32 %v1440, %v1536
      %v1538 = vpop.f32.mrb[0].mxu0
      %1539 = vmatprep.mubr.bf16.mxu0 %v1094
      %1540 = vmatmul.mubr.bf16.gmra.mrb[0].mxu0 %v1093
      %v1541 = vpop.f32.mrb[0].mxu0
      %v1542 = vadd.f32 %v1445, %v1541
      %v1543 = vpop.f32.mrb[0].mxu0
      %v1544 = vpop.f32.mrb[0].mxu0
      %v1545 = vadd.f32 %v1448, %v1544
      %v1546 = vpop.f32.mrb[0].mxu0
      %1547 = vmatprep.mubr.bf16.mxu0 %v1098
      %1548 = vmatmul.mubr.bf16.gmra.mrb[0].mxu0 %v1097
      %v1549 = vpop.f32.mrb[0].mxu0
      %v1550 = vadd.f32 %v1453, %v1549
      %v1551 = vpop.f32.mrb[0].mxu0
      %v1552 = vpop.f32.mrb[0].mxu0
      %v1553 = vadd.f32 %v1456, %v1552
      %v1554 = vpop.f32.mrb[0].mxu0
      %1555 = vdwg.mxu0
      %v1556 = vadd.f32 %v1494, %v283
      %v1557 = vadd.f32 %v1497, %v284
      %v1558 = vadd.f32 %v1502, %v285
      %v1559 = vadd.f32 %v1505, %v286
      %v1560 = vadd.f32 %v1510, %v287
      %v1561 = vadd.f32 %v1513, %v288
      %v1562 = vadd.f32 %v1518, %v289
      %v1563 = vadd.f32 %v1521, %v290
      %v1564 = vadd.f32 %v1526, %v291
      %v1565 = vadd.f32 %v1529, %v292
      %v1566 = vadd.f32 %v1534, %v293
      %v1567 = vadd.f32 %v1537, %v294
      %v1568 = vadd.f32 %v1542, %v295
      %v1569 = vadd.f32 %v1545, %v296
      %v1570 = vadd.f32 %v1550, %v297
      %v1571 = vadd.f32 %v1553, %v298
      %v1572 = vld [vmem:[%s5] sm:$0x1]
      %v1573 = vld [vmem:[%s6] sm:$0x1]
      %1574 = vadd.xlane.f32.xlu0 %v1556
      %v1575 = vpop.xlane.xlu0 %1574
      %1576 = vadd.xlane.f32.xlu0 %v1557
      %v1577 = vpop.xlane.xlu0 %1576
      %1578 = vadd.xlane.f32.xlu0 %v1558
      %v1579 = vpop.xlane.xlu0 %1578
      %1580 = vadd.xlane.f32.xlu0 %v1559
      %v1581 = vpop.xlane.xlu0 %1580
      %1582 = vadd.xlane.f32.xlu0 %v1560
      %v1583 = vpop.xlane.xlu0 %1582
      %1584 = vadd.xlane.f32.xlu0 %v1561
      %v1585 = vpop.xlane.xlu0 %1584
      %1586 = vadd.xlane.f32.xlu0 %v1562
      %v1587 = vpop.xlane.xlu0 %1586
      %1588 = vadd.xlane.f32.xlu0 %v1563
      %v1589 = vpop.xlane.xlu0 %1588
      %1590 = vadd.xlane.f32.xlu0 %v1564
      %v1591 = vpop.xlane.xlu0 %1590
      %1592 = vadd.xlane.f32.xlu0 %v1565
      %v1593 = vpop.xlane.xlu0 %1592
      %1594 = vadd.xlane.f32.xlu0 %v1566
      %v1595 = vpop.xlane.xlu0 %1594
      %1596 = vadd.xlane.f32.xlu0 %v1567
      %v1597 = vpop.xlane.xlu0 %1596
      %1598 = vadd.xlane.f32.xlu0 %v1568
      %v1599 = vpop.xlane.xlu0 %1598
      %1600 = vadd.xlane.f32.xlu0 %v1569
      %v1601 = vpop.xlane.xlu0 %1600
      %1602 = vadd.xlane.f32.xlu0 %v1570
      %v1603 = vpop.xlane.xlu0 %1602
      %1604 = vadd.xlane.f32.xlu0 %v1571
      %v1605 = vpop.xlane.xlu0 %1604
      %v1606 = vrcp.pop 128.0
      %v1607 = vmul.f32 %v1575, %v1606
      %v1608 = vmul.f32 %v1577, %v1606
      %v1609 = vmul.f32 %v1579, %v1606
      %v1610 = vmul.f32 %v1581, %v1606
      %v1611 = vmul.f32 %v1583, %v1606
      %v1612 = vmul.f32 %v1585, %v1606
      %v1613 = vmul.f32 %v1587, %v1606
      %v1614 = vmul.f32 %v1589, %v1606
      %v1615 = vmul.f32 %v1591, %v1606
      %v1616 = vmul.f32 %v1593, %v1606
      %v1617 = vmul.f32 %v1595, %v1606
      %v1618 = vmul.f32 %v1597, %v1606
      %v1619 = vmul.f32 %v1599, %v1606
      %v1620 = vmul.f32 %v1601, %v1606
      %v1621 = vmul.f32 %v1603, %v1606
      %v1622 = vmul.f32 %v1605, %v1606
      %v1623 = vsub.f32 %v1556, %v1607
      %v1624 = vsub.f32 %v1557, %v1608
      %v1625 = vsub.f32 %v1558, %v1609
      %v1626 = vsub.f32 %v1559, %v1610
      %v1627 = vsub.f32 %v1560, %v1611
      %v1628 = vsub.f32 %v1561, %v1612
      %v1629 = vsub.f32 %v1562, %v1613
      %v1630 = vsub.f32 %v1563, %v1614
      %v1631 = vsub.f32 %v1564, %v1615
      %v1632 = vsub.f32 %v1565, %v1616
      %v1633 = vsub.f32 %v1566, %v1617
      %v1634 = vsub.f32 %v1567, %v1618
      %v1635 = vsub.f32 %v1568, %v1619
      %v1636 = vsub.f32 %v1569, %v1620
      %v1637 = vsub.f32 %v1570, %v1621
      %v1638 = vsub.f32 %v1571, %v1622
      %v1639 = vmul.f32 %v1623, %v1623
      %v1640 = vmul.f32 %v1624, %v1624
      %v1641 = vmul.f32 %v1625, %v1625
      %v1642 = vmul.f32 %v1626, %v1626
      %v1643 = vmul.f32 %v1627, %v1627
      %v1644 = vmul.f32 %v1628, %v1628
      %v1645 = vmul.f32 %v1629, %v1629
      %v1646 = vmul.f32 %v1630, %v1630
      %v1647 = vmul.f32 %v1631, %v1631
      %v1648 = vmul.f32 %v1632, %v1632
      %v1649 = vmul.f32 %v1633, %v1633
      %v1650 = vmul.f32 %v1634, %v1634
      %v1651 = vmul.f32 %v1635, %v1635
      %v1652 = vmul.f32 %v1636, %v1636
      %v1653 = vmul.f32 %v1637, %v1637
      %v1654 = vmul.f32 %v1638, %v1638
      %1655 = vadd.xlane.f32.xlu0 %v1639
      %v1656 = vpop.xlane.xlu0 %1655
      %1657 = vadd.xlane.f32.xlu0 %v1640
      %v1658 = vpop.xlane.xlu0 %1657
      %1659 = vadd.xlane.f32.xlu0 %v1641
      %v1660 = vpop.xlane.xlu0 %1659
      %1661 = vadd.xlane.f32.xlu0 %v1642
      %v1662 = vpop.xlane.xlu0 %1661
      %1663 = vadd.xlane.f32.xlu0 %v1643
      %v1664 = vpop.xlane.xlu0 %1663
      %1665 = vadd.xlane.f32.xlu0 %v1644
      %v1666 = vpop.xlane.xlu0 %1665
      %1667 = vadd.xlane.f32.xlu0 %v1645
      %v1668 = vpop.xlane.xlu0 %1667
      %1669 = vadd.xlane.f32.xlu0 %v1646
      %v1670 = vpop.xlane.xlu0 %1669
      %1671 = vadd.xlane.f32.xlu0 %v1647
      %v1672 = vpop.xlane.xlu0 %1671
      %1673 = vadd.xlane.f32.xlu0 %v1648
      %v1674 = vpop.xlane.xlu0 %1673
      %1675 = vadd.xlane.f32.xlu0 %v1649
      %v1676 = vpop.xlane.xlu0 %1675
      %1677 = vadd.xlane.f32.xlu0 %v1650
      %v1678 = vpop.xlane.xlu0 %1677
      %1679 = vadd.xlane.f32.xlu0 %v1651
      %v1680 = vpop.xlane.xlu0 %1679
      %1681 = vadd.xlane.f32.xlu0 %v1652
      %v1682 = vpop.xlane.xlu0 %1681
      %1683 = vadd.xlane.f32.xlu0 %v1653
      %v1684 = vpop.xlane.xlu0 %1683
      %1685 = vadd.xlane.f32.xlu0 %v1654
      %v1686 = vpop.xlane.xlu0 %1685
      %v1687 = vmul.f32 %v1656, %v1606
      %v1688 = vmul.f32 %v1658, %v1606
      %v1689 = vmul.f32 %v1660, %v1606
      %v1690 = vmul.f32 %v1662, %v1606
      %v1691 = vmul.f32 %v1664, %v1606
      %v1692 = vmul.f32 %v1666, %v1606
      %v1693 = vmul.f32 %v1668, %v1606
      %v1694 = vmul.f32 %v1670, %v1606
      %v1695 = vmul.f32 %v1672, %v1606
      %v1696 = vmul.f32 %v1674, %v1606
      %v1697 = vmul.f32 %v1676, %v1606
      %v1698 = vmul.f32 %v1678, %v1606
      %v1699 = vmul.f32 %v1680, %v1606
      %v1700 = vmul.f32 %v1682, %v1606
      %v1701 = vmul.f32 %v1684, %v1606
      %v1702 = vmul.f32 %v1686, %v1606
      %v1703 = vadd.f32 %v1687, 1e-12
      %v1704 = vadd.f32 %v1688, 1e-12
      %v1705 = vadd.f32 %v1689, 1e-12
      %v1706 = vadd.f32 %v1690, 1e-12
      %v1707 = vadd.f32 %v1691, 1e-12
      %v1708 = vadd.f32 %v1692, 1e-12
      %v1709 = vadd.f32 %v1693, 1e-12
      %v1710 = vadd.f32 %v1694, 1e-12
      %v1711 = vadd.f32 %v1695, 1e-12
      %v1712 = vadd.f32 %v1696, 1e-12
      %v1713 = vadd.f32 %v1697, 1e-12
      %v1714 = vadd.f32 %v1698, 1e-12
      %v1715 = vadd.f32 %v1699, 1e-12
      %v1716 = vadd.f32 %v1700, 1e-12
      %v1717 = vadd.f32 %v1701, 1e-12
      %v1718 = vadd.f32 %v1702, 1e-12
      %v1719 = vrsqrt.pop %v1703
      %v1720 = vrsqrt.pop %v1704
      %v1721 = vrsqrt.pop %v1705
      %v1722 = vrsqrt.pop %v1706
      %v1723 = vrsqrt.pop %v1707
      %v1724 = vrsqrt.pop %v1708
      %v1725 = vrsqrt.pop %v1709
      %v1726 = vrsqrt.pop %v1710
      %v1727 = vrsqrt.pop %v1711
      %v1728 = vrsqrt.pop %v1712
      %v1729 = vrsqrt.pop %v1713
      %v1730 = vrsqrt.pop %v1714
      %v1731 = vrsqrt.pop %v1715
      %v1732 = vrsqrt.pop %v1716
      %v1733 = vrsqrt.pop %v1717
      %v1734 = vrsqrt.pop %v1718
      %v1735 = vmul.f32 %v1623, %v1719
      %v1736 = vmul.f32 %v1624, %v1720
      %v1737 = vmul.f32 %v1625, %v1721
      %v1738 = vmul.f32 %v1626, %v1722
      %v1739 = vmul.f32 %v1627, %v1723
      %v1740 = vmul.f32 %v1628, %v1724
      %v1741 = vmul.f32 %v1629, %v1725
      %v1742 = vmul.f32 %v1630, %v1726
      %v1743 = vmul.f32 %v1631, %v1727
      %v1744 = vmul.f32 %v1632, %v1728
      %v1745 = vmul.f32 %v1633, %v1729
      %v1746 = vmul.f32 %v1634, %v1730
      %v1747 = vmul.f32 %v1635, %v1731
      %v1748 = vmul.f32 %v1636, %v1732
      %v1749 = vmul.f32 %v1637, %v1733
      %v1750 = vmul.f32 %v1638, %v1734
      %v1752 = vlaneseq
      %v1753 = vshrl.u32 %v1752, 7
      %v1754 = vsub.s32 0, %v1753
      %v1755 = vrot.slane %v1572, %v1754
      %v1757 = vmul.f32 %v1735, %v1755
      %v1758 = vmul.f32 %v1736, %v1755
      %v1759 = vmul.f32 %v1737, %v1755
      %v1760 = vmul.f32 %v1738, %v1755
      %v1761 = vmul.f32 %v1739, %v1755
      %v1762 = vmul.f32 %v1740, %v1755
      %v1763 = vmul.f32 %v1741, %v1755
      %v1764 = vmul.f32 %v1742, %v1755
      %v1765 = vmul.f32 %v1743, %v1755
      %v1766 = vmul.f32 %v1744, %v1755
      %v1767 = vmul.f32 %v1745, %v1755
      %v1768 = vmul.f32 %v1746, %v1755
      %v1769 = vmul.f32 %v1747, %v1755
      %v1770 = vmul.f32 %v1748, %v1755
      %v1771 = vmul.f32 %v1749, %v1755
      %v1772 = vmul.f32 %v1750, %v1755
      %v1774 = vlaneseq
      %v1775 = vshrl.u32 %v1774, 7
      %v1776 = vsub.s32 0, %v1775
      %v1777 = vrot.slane %v1573, %v1776
      %v1779 = vadd.f32 %v1757, %v1777
      %v1780 = vadd.f32 %v1758, %v1777
      %v1781 = vadd.f32 %v1759, %v1777
      %v1782 = vadd.f32 %v1760, %v1777
      %v1783 = vadd.f32 %v1761, %v1777
      %v1784 = vadd.f32 %v1762, %v1777
      %v1785 = vadd.f32 %v1763, %v1777
      %v1786 = vadd.f32 %v1764, %v1777
      %v1787 = vadd.f32 %v1765, %v1777
      %v1788 = vadd.f32 %v1766, %v1777
      %v1789 = vadd.f32 %v1767, %v1777
      %v1790 = vadd.f32 %v1768, %v1777
      %v1791 = vadd.f32 %v1769, %v1777
      %v1792 = vadd.f32 %v1770, %v1777
      %v1793 = vadd.f32 %v1771, %v1777
      %v1794 = vadd.f32 %v1772, %v1777
      %1795 = vst [vmem:[%s280] sm:$0xff] %v1779
      %1796 = vst [vmem:[%s280 + $0x8] sm:$0xff] %v1780
      %1797 = vst [vmem:[%s280 + $0x10] sm:$0xff] %v1781
      %1798 = vst [vmem:[%s280 + $0x18] sm:$0xff] %v1782
      %1799 = vst [vmem:[%s280 + $0x20] sm:$0xff] %v1783
      %1800 = vst [vmem:[%s280 + $0x28] sm:$0xff] %v1784
      %1801 = vst [vmem:[%s280 + $0x30] sm:$0xff] %v1785
      %1802 = vst [vmem:[%s280 + $0x38] sm:$0xff] %v1786
      %1803 = vst [vmem:[%s280 + $0x40] sm:$0xff] %v1787
      %1804 = vst [vmem:[%s280 + $0x48] sm:$0xff] %v1788
      %1805 = vst [vmem:[%s280 + $0x50] sm:$0xff] %v1789
      %1806 = vst [vmem:[%s280 + $0x58] sm:$0xff] %v1790
      %1807 = vst [vmem:[%s280 + $0x60] sm:$0xff] %v1791
      %1808 = vst [vmem:[%s280 + $0x68] sm:$0xff] %v1792
      %1809 = vst [vmem:[%s280 + $0x70] sm:$0xff] %v1793
      %1810 = vst [vmem:[%s280 + $0x78] sm:$0xff] %v1794
      %s1811 = smul.u32 16, %s18
      %p1812 = scmp.lt.s32.totalorder %s1811, 31
      %s1813 = scalar_select %p1812, %s1811, 31
      %s1814 = smul.addr %s1813, 8
      %s1815 = scalar_lea.vmem %s7, %s1814
      // Predicated region
      $region49: #{bert_forward.7} parent=47 // pred_check
        %p1816 = pneg %p188
      $region50: #{bert_forward.7} parent=47 // pred_check_branch
        %1818 = sbr.rel (%p1816) target = $region52
      $region51: #{bert_forward.7} parent=47 // pred_region
        %s1819 = smul.u32 16, %s18
      $region52: #{bert_forward.7} parent=47 // pred_fallthru
        _
    $region48: #{bert_forward.7} parent=5 // pred_fallthru
      _
    %p1820 = scmp.le.s32.totalorder 2, %s13
    // Predicated region
    $region53: #{bert_forward.7} parent=5 // pred_check
      %p1821 = pneg %p1820
    $region54: #{bert_forward.7} parent=5 // pred_check_branch
      %1823 = sbr.rel (%p1821) target = $region56
    $region55: #{bert_forward.7} parent=5 // pred_region
      %s1824 = ssub.s32 %s13, 2
      // Predicated region
      $region57: #{bert_forward.7} parent=55 // pred_check
        %p1825 = pneg %p194
      $region58: #{bert_forward.7} parent=55 // pred_check_branch
        %1827 = sbr.rel (%p1825) target = $region60
      $region59: #{bert_forward.7} parent=55 // pred_region
        %s1828 = smul.u32 16, %s19
        %p1829 = scmp.lt.s32.totalorder %s1828, 31
        %s1830 = scalar_select %p1829, %s1828, 31
        %s1831 = smul.addr %s1830, 8
        %s1832 = scalar_lea.vmem %s7, %s1831
      $region60: #{bert_forward.7} parent=55 // pred_fallthru
        _
    $region56: #{bert_forward.7} parent=5 // pred_fallthru
      _
  $region6: #{bert_forward.7} parent=0 // loop_footer
    %s17 = sadd.s32 1, %s13
  $region7: #{bert_forward.7} parent=0 // loop_footer_branch
    %12 = sbr.rel target = $region3
  $region8: #{bert_forward.7} parent=0 // loop_exit
    _

// kernel: bert_forward.6
$region0: #{bert_forward.6}
  #allocation0 [shape = 'u32[]', space=smem, size = 0x4, offset = 0x4, fixed_abs, tag = 'smem constant byte address 0x4 - core index']
  #allocation1 [shape = 'u32[144,128]{1,0:T(1,128)}', space=vmem, size = 0x12000, scoped, tag = 'internal scratch']
  %s0 = inlined_call_operand.vmem [shape: f32[256,128], index: 0, kind: input, shape index: {}]
  %s1 = inlined_call_operand.vmem [shape: f32[2,128], index: 1, kind: input, shape index: {}]
  %s2 = inlined_call_operand.vmem [shape: bf16[128,384], index: 2, kind: input, shape index: {}]
  %s3 = inlined_call_operand.vmem [shape: f32[1,384], index: 3, kind: input, shape index: {}]
  %s4 = inlined_call_operand.vmem [shape: bf16[128,128], index: 4, kind: input, shape index: {}]
  %s5 = inlined_call_operand.vmem [shape: f32[1,128], index: 5, kind: input, shape index: {}]
  %s6 = inlined_call_operand.vmem [shape: f32[1,128], index: 6, kind: input, shape index: {}]
  %s7 = inlined_call_operand.vmem [shape: f32[1,128], index: 7, kind: input, shape index: {}]
  %s8 = inlined_call_operand.vmem [shape: f32[256,128], index: 8, kind: output, shape index: {}]
  %s9 = sld [smem:[#allocation0]]
  $region65: #{bert_forward.6} parent=0
    _
  %s11 = ssub.s32 1, %s9
  %s12 = scalar_select 0, %s11, %s9
  loop: start=0, step=1, limit=4
  $region2: #{bert_forward.6} parent=0 // loop_pre_header
    _
  $region3: #{bert_forward.6} parent=0 // loop_header
    %s14 = sphi 0, %s18
    %p15 = scmp.ge.s32.totalorder %s14, 4
    %s24 = sphi 0, %s26
    %s27 = sphi 0, %s24
    %s28 = sphi 0, %s27
    %s44 = sphi 0, %s28
    %s48 = sphi 0, %s48
    %s50 = sphi 0, %s48
    %s51 = sphi 0, %s50
    %s65 = sphi 0, %s51
    %s69 = sphi 0, %s69
    %s71 = sphi 0, %s69
    %s72 = sphi 0, %s71
    %s86 = sphi 0, %s72
    %s90 = sphi 0, %s90
    %s92 = sphi 0, %s90
    %s93 = sphi 0, %s92
    %s107 = sphi 0, %s93
    %s111 = sphi 0, %s111
    %s113 = sphi 0, %s111
    %s114 = sphi 0, %s113
    %s128 = sphi 0, %s114
    %s132 = sphi 0, %s132
    %s134 = sphi 0, %s132
    %s135 = sphi 0, %s134
    %s149 = sphi 0, %s135
    %s153 = sphi 0, %s153
    %s155 = sphi 0, %s153
    %s156 = sphi 0, %s155
    %s170 = sphi 0, %s156
    %s174 = sphi 0, %s174
    %s176 = sphi 0, %s174
    %s177 = sphi 0, %s176
    %s191 = sphi 0, %s177
    %s197 = sphi 0, %s199
    %s200 = sphi 0, %s197
    %s201 = sphi 0, %s200
    %s217 = sphi 0, %s201
  $region4: #{bert_forward.6} parent=0 // loop_header_branch
    %17 = sbr.rel (%p15) target = $region8
  $region5: #{bert_forward.6} parent=0 // loop_body
    %s19 = ssub.s32 %s14, 1
    %s20 = ssub.s32 %s14, 2
    %s21 = sadd.s32 %s14, 1
    %s22 = ssub.s32 %s14, %s21
    %p23 = scmp.eq.s32.totalorder %s22, 0
    %s25 = sadd.s32 %s24, 1
    %s26 = scalar_select %p23, %s24, %s25
    %p29 = pneg %p23
    %p30 = scmp.eq.s32.totalorder %s14, 1
    %p31 = por %p29, %p30
    %p32 = scmp.ne.s32.totalorder %s24, %s27
    %p33 = scmp.eq.s32.totalorder %s14, 0
    %p34 = por %p32, %p33
    %p35 = scmp.ne.s32.totalorder %s24, %s27
    %p36 = scmp.eq.s32.totalorder %s19, 1
    %p37 = por %p35, %p36
    %p38 = scmp.ne.s32.totalorder %s27, %s28
    %p39 = scmp.eq.s32.totalorder %s19, 0
    %p40 = por %p38, %p39
    %p41 = scmp.ne.s32.totalorder %s27, %s28
    %p42 = scmp.eq.s32.totalorder %s20, 1
    %p43 = por %p41, %p42
    %p45 = scmp.ne.s32.totalorder %s28, %s44
    %p46 = scmp.eq.s32.totalorder %s20, 0
    %p47 = por %p45, %p46
    %s49 = sadd.s32 %s48, 1
    %p52 = scmp.eq.s32.totalorder %s14, 1
    %p53 = scmp.ne.s32.totalorder %s48, %s50
    %p54 = scmp.eq.s32.totalorder %s14, 0
    %p55 = por %p53, %p54
    %p56 = scmp.ne.s32.totalorder %s48, %s50
    %p57 = scmp.eq.s32.totalorder %s19, 1
    %p58 = por %p56, %p57
    %p59 = scmp.ne.s32.totalorder %s50, %s51
    %p60 = scmp.eq.s32.totalorder %s19, 0
    %p61 = por %p59, %p60
    %p62 = scmp.ne.s32.totalorder %s50, %s51
    %p63 = scmp.eq.s32.totalorder %s20, 1
    %p64 = por %p62, %p63
    %p66 = scmp.ne.s32.totalorder %s51, %s65
    %p67 = scmp.eq.s32.totalorder %s20, 0
    %p68 = por %p66, %p67
    %s70 = sadd.s32 %s69, 1
    %p73 = scmp.eq.s32.totalorder %s14, 1
    %p74 = scmp.ne.s32.totalorder %s69, %s71
    %p75 = scmp.eq.s32.totalorder %s14, 0
    %p76 = por %p74, %p75
    %p77 = scmp.ne.s32.totalorder %s69, %s71
    %p78 = scmp.eq.s32.totalorder %s19, 1
    %p79 = por %p77, %p78
    %p80 = scmp.ne.s32.totalorder %s71, %s72
    %p81 = scmp.eq.s32.totalorder %s19, 0
    %p82 = por %p80, %p81
    %p83 = scmp.ne.s32.totalorder %s71, %s72
    %p84 = scmp.eq.s32.totalorder %s20, 1
    %p85 = por %p83, %p84
    %p87 = scmp.ne.s32.totalorder %s72, %s86
    %p88 = scmp.eq.s32.totalorder %s20, 0
    %p89 = por %p87, %p88
    %s91 = sadd.s32 %s90, 1
    %p94 = scmp.eq.s32.totalorder %s14, 1
    %p95 = scmp.ne.s32.totalorder %s90, %s92
    %p96 = scmp.eq.s32.totalorder %s14, 0
    %p97 = por %p95, %p96
    %p98 = scmp.ne.s32.totalorder %s90, %s92
    %p99 = scmp.eq.s32.totalorder %s19, 1
    %p100 = por %p98, %p99
    %p101 = scmp.ne.s32.totalorder %s92, %s93
    %p102 = scmp.eq.s32.totalorder %s19, 0
    %p103 = por %p101, %p102
    %p104 = scmp.ne.s32.totalorder %s92, %s93
    %p105 = scmp.eq.s32.totalorder %s20, 1
    %p106 = por %p104, %p105
    %p108 = scmp.ne.s32.totalorder %s93, %s107
    %p109 = scmp.eq.s32.totalorder %s20, 0
    %p110 = por %p108, %p109
    %s112 = sadd.s32 %s111, 1
    %p115 = scmp.eq.s32.totalorder %s14, 1
    %p116 = scmp.ne.s32.totalorder %s111, %s113
    %p117 = scmp.eq.s32.totalorder %s14, 0
    %p118 = por %p116, %p117
    %p119 = scmp.ne.s32.totalorder %s111, %s113
    %p120 = scmp.eq.s32.totalorder %s19, 1
    %p121 = por %p119, %p120
    %p122 = scmp.ne.s32.totalorder %s113, %s114
    %p123 = scmp.eq.s32.totalorder %s19, 0
    %p124 = por %p122, %p123
    %p125 = scmp.ne.s32.totalorder %s113, %s114
    %p126 = scmp.eq.s32.totalorder %s20, 1
    %p127 = por %p125, %p126
    %p129 = scmp.ne.s32.totalorder %s114, %s128
    %p130 = scmp.eq.s32.totalorder %s20, 0
    %p131 = por %p129, %p130
    %s133 = sadd.s32 %s132, 1
    %p136 = scmp.eq.s32.totalorder %s14, 1
    %p137 = scmp.ne.s32.totalorder %s132, %s134
    %p138 = scmp.eq.s32.totalorder %s14, 0
    %p139 = por %p137, %p138
    %p140 = scmp.ne.s32.totalorder %s132, %s134
    %p141 = scmp.eq.s32.totalorder %s19, 1
    %p142 = por %p140, %p141
    %p143 = scmp.ne.s32.totalorder %s134, %s135
    %p144 = scmp.eq.s32.totalorder %s19, 0
    %p145 = por %p143, %p144
    %p146 = scmp.ne.s32.totalorder %s134, %s135
    %p147 = scmp.eq.s32.totalorder %s20, 1
    %p148 = por %p146, %p147
    %p150 = scmp.ne.s32.totalorder %s135, %s149
    %p151 = scmp.eq.s32.totalorder %s20, 0
    %p152 = por %p150, %p151
    %s154 = sadd.s32 %s153, 1
    %p157 = scmp.eq.s32.totalorder %s14, 1
    %p158 = scmp.ne.s32.totalorder %s153, %s155
    %p159 = scmp.eq.s32.totalorder %s14, 0
    %p160 = por %p158, %p159
    %p161 = scmp.ne.s32.totalorder %s153, %s155
    %p162 = scmp.eq.s32.totalorder %s19, 1
    %p163 = por %p161, %p162
    %p164 = scmp.ne.s32.totalorder %s155, %s156
    %p165 = scmp.eq.s32.totalorder %s19, 0
    %p166 = por %p164, %p165
    %p167 = scmp.ne.s32.totalorder %s155, %s156
    %p168 = scmp.eq.s32.totalorder %s20, 1
    %p169 = por %p167, %p168
    %p171 = scmp.ne.s32.totalorder %s156, %s170
    %p172 = scmp.eq.s32.totalorder %s20, 0
    %p173 = por %p171, %p172
    %s175 = sadd.s32 %s174, 1
    %p178 = scmp.eq.s32.totalorder %s14, 1
    %p179 = scmp.ne.s32.totalorder %s174, %s176
    %p180 = scmp.eq.s32.totalorder %s14, 0
    %p181 = por %p179, %p180
    %p182 = scmp.ne.s32.totalorder %s174, %s176
    %p183 = scmp.eq.s32.totalorder %s19, 1
    %p184 = por %p182, %p183
    %p185 = scmp.ne.s32.totalorder %s176, %s177
    %p186 = scmp.eq.s32.totalorder %s19, 0
    %p187 = por %p185, %p186
    %p188 = scmp.ne.s32.totalorder %s176, %s177
    %p189 = scmp.eq.s32.totalorder %s20, 1
    %p190 = por %p188, %p189
    %p192 = scmp.ne.s32.totalorder %s177, %s191
    %p193 = scmp.eq.s32.totalorder %s20, 0
    %p194 = por %p192, %p193
    %s195 = ssub.s32 %s14, %s21
    %p196 = scmp.eq.s32.totalorder %s195, 0
    %s198 = sadd.s32 %s197, 1
    %s199 = scalar_select %p196, %s197, %s198
    %p202 = pneg %p196
    %p203 = scmp.eq.s32.totalorder %s14, 1
    %p204 = por %p202, %p203
    %p205 = scmp.ne.s32.totalorder %s197, %s200
    %p206 = scmp.eq.s32.totalorder %s14, 0
    %p207 = por %p205, %p206
    %p208 = scmp.ne.s32.totalorder %s197, %s200
    %p209 = scmp.eq.s32.totalorder %s19, 1
    %p210 = por %p208, %p209
    %p211 = scmp.ne.s32.totalorder %s200, %s201
    %p212 = scmp.eq.s32.totalorder %s19, 0
    %p213 = por %p211, %p212
    %p214 = scmp.ne.s32.totalorder %s200, %s201
    %p215 = scmp.eq.s32.totalorder %s20, 1
    %p216 = por %p214, %p215
    %p218 = scmp.ne.s32.totalorder %s201, %s217
    %p219 = scmp.eq.s32.totalorder %s20, 0
    %p220 = por %p218, %p219
    %p221 = scmp.le.s32.totalorder 1, %s14
    %p222 = scmp.lt.s32.totalorder %s14, 3
    %p223 = pnand %p221, %p222
    %p224 = pneg %p223
    // Predicated region
    $region9: #{bert_forward.6} parent=5 // pred_check
      _
    $region10: #{bert_forward.6} parent=5 // pred_check_branch
      %226 = sbr.rel (%p223) target = $region12
    $region11: #{bert_forward.6} parent=5 // pred_region
      %s227 = ssub.s32 %s14, 1
      // Predicated region
      $region13: #{bert_forward.6} parent=11 // pred_check
        %p228 = pneg %p61
      $region14: #{bert_forward.6} parent=11 // pred_check_branch
        %230 = sbr.rel (%p228) target = $region16
      $region15: #{bert_forward.6} parent=11 // pred_region
        _
      $region16: #{bert_forward.6} parent=11 // pred_fallthru
        _
      // Predicated region
      $region17: #{bert_forward.6} parent=11 // pred_check
        %p231 = pneg %p82
      $region18: #{bert_forward.6} parent=11 // pred_check_branch
        %233 = sbr.rel (%p231) target = $region20
      $region19: #{bert_forward.6} parent=11 // pred_region
        _
      $region20: #{bert_forward.6} parent=11 // pred_fallthru
        _
      // Predicated region
      $region21: #{bert_forward.6} parent=11 // pred_check
        %p234 = pneg %p103
      $region22: #{bert_forward.6} parent=11 // pred_check_branch
        %236 = sbr.rel (%p234) target = $region24
      $region23: #{bert_forward.6} parent=11 // pred_region
        _
      $region24: #{bert_forward.6} parent=11 // pred_fallthru
        _
      // Predicated region
      $region25: #{bert_forward.6} parent=11 // pred_check
        %p237 = pneg %p124
      $region26: #{bert_forward.6} parent=11 // pred_check_branch
        %239 = sbr.rel (%p237) target = $region28
      $region27: #{bert_forward.6} parent=11 // pred_region
        _
      $region28: #{bert_forward.6} parent=11 // pred_fallthru
        _
      // Predicated region
      $region29: #{bert_forward.6} parent=11 // pred_check
        %p240 = pneg %p145
      $region30: #{bert_forward.6} parent=11 // pred_check_branch
        %242 = sbr.rel (%p240) target = $region32
      $region31: #{bert_forward.6} parent=11 // pred_region
        _
      $region32: #{bert_forward.6} parent=11 // pred_fallthru
        _
      // Predicated region
      $region33: #{bert_forward.6} parent=11 // pred_check
        %p243 = pneg %p166
      $region34: #{bert_forward.6} parent=11 // pred_check_branch
        %245 = sbr.rel (%p243) target = $region36
      $region35: #{bert_forward.6} parent=11 // pred_region
        _
      $region36: #{bert_forward.6} parent=11 // pred_fallthru
        _
      // Predicated region
      $region37: #{bert_forward.6} parent=11 // pred_check
        %p246 = pneg %p187
      $region38: #{bert_forward.6} parent=11 // pred_check_branch
        %248 = sbr.rel (%p246) target = $region40
      $region39: #{bert_forward.6} parent=11 // pred_region
        _
      $region40: #{bert_forward.6} parent=11 // pred_fallthru
        _
    $region12: #{bert_forward.6} parent=5 // pred_fallthru
      _
    %p249 = scmp.lt.s32.totalorder %s14, 2
    // Predicated region
    $region41: #{bert_forward.6} parent=5 // pred_check
      %p250 = pneg %p249
    $region42: #{bert_forward.6} parent=5 // pred_check_branch
      %252 = sbr.rel (%p250) target = $region44
    $region43: #{bert_forward.6} parent=5 // pred_region
      // Predicated region
      $region45: #{bert_forward.6} parent=43 // pred_check
        %p253 = pneg %p34
      $region46: #{bert_forward.6} parent=43 // pred_check_branch
        %255 = sbr.rel (%p253) target = $region48
      $region47: #{bert_forward.6} parent=43 // pred_region
        %s256 = smul.u32 16, %s14
        %p257 = scmp.lt.s32.totalorder %s256, 31
        %s258 = scalar_select %p257, %s256, 31
        %s259 = smul.addr %s258, 8
        %s260 = scalar_lea.vmem %s0, %s259
        %s261 = smul.u32 16, %s14
      $region48: #{bert_forward.6} parent=43 // pred_fallthru
        _
    $region44: #{bert_forward.6} parent=5 // pred_fallthru
      _
    %p262 = scmp.le.s32.totalorder 1, %s14
    %p263 = scmp.lt.s32.totalorder %s14, 3
    %p264 = pnand %p262, %p263
    %p265 = pneg %p264
    // Predicated region
    $region49: #{bert_forward.6} parent=5 // pred_check
      _
    $region50: #{bert_forward.6} parent=5 // pred_check_branch
      %267 = sbr.rel (%p264) target = $region52
    $region51: #{bert_forward.6} parent=5 // pred_region
      %s268 = ssub.s32 %s14, 1
      %s269 = smul.u32 16, %s19
      %p270 = scmp.lt.s32.totalorder %s269, 31
      %s271 = scalar_select %p270, %s269, 31
      %s272 = smul.addr %s271, 8
      %s273 = scalar_lea.vmem %s0, %s272
      %p274 = pneg %p40
      %p275 = pneg %p37
      %p276 = pneg %p61
      %p277 = pneg %p58
      %p278 = pneg %p82
      %p279 = pneg %p79
      %p280 = pneg %p103
      %p281 = pneg %p100
      %p282 = pneg %p124
      %p283 = pneg %p121
      %p284 = pneg %p145
      %p285 = pneg %p142
      %p286 = pneg %p166
      %p287 = pneg %p163
      %p288 = pneg %p187
      %p289 = pneg %p184
      %p290 = pneg %p213
      %p291 = pneg %p210
      %s292 = smul.u32 16, %s19
      %p293 = scmp.lt.s32.totalorder %s292, 31
      %s294 = scalar_select %p293, %s292, 31
      %s295 = smul.addr %s294, 8
      %s296 = scalar_lea.vmem %s8, %s295
      %s297 = smul.u32 16, %s19
      %p298 = scmp.lt.s32.totalorder %s297, 31
      %s299 = scalar_select %p298, %s297, 31
      %s300 = smul.addr %s299, 8
      %s301 = scalar_lea.vmem %s0, %s300
      %s302 = smul.u32 16, %s19
      %s303 = smul.u32 16, %s19
      %p304 = scmp.lt.s32.totalorder %s303, 31
      %s305 = scalar_select %p304, %s303, 31
      %s306 = smul.addr %s305, 8
      %s307 = scalar_lea.vmem %s8, %s306
      %s308 = smul.u32 16, %s19
      %v310 = vld [vmem:[%s301] sm:$0xff]
      %v311 = vld [vmem:[%s301 + $0x8] sm:$0xff]
      %v312 = vld [vmem:[%s301 + $0x10] sm:$0xff]
      %v313 = vld [vmem:[%s301 + $0x18] sm:$0xff]
      %v314 = vld [vmem:[%s301 + $0x20] sm:$0xff]
      %v315 = vld [vmem:[%s301 + $0x28] sm:$0xff]
      %v316 = vld [vmem:[%s301 + $0x30] sm:$0xff]
      %v317 = vld [vmem:[%s301 + $0x38] sm:$0xff]
      %v318 = vld [vmem:[%s301 + $0x40] sm:$0xff]
      %v319 = vld [vmem:[%s301 + $0x48] sm:$0xff]
      %v320 = vld [vmem:[%s301 + $0x50] sm:$0xff]
      %v321 = vld [vmem:[%s301 + $0x58] sm:$0xff]
      %v322 = vld [vmem:[%s301 + $0x60] sm:$0xff]
      %v323 = vld [vmem:[%s301 + $0x68] sm:$0xff]
      %v324 = vld [vmem:[%s301 + $0x70] sm:$0xff]
      %v325 = vld [vmem:[%s301 + $0x78] sm:$0xff]
      %v326 = vpack.c.bf16 %v311, %v310
      %v327 = vpack.c.bf16 %v313, %v312
      %v328 = vpack.c.bf16 %v315, %v314
      %v329 = vpack.c.bf16 %v317, %v316
      %v330 = vpack.c.bf16 %v319, %v318
      %v331 = vpack.c.bf16 %v321, %v320
      %v332 = vpack.c.bf16 %v323, %v322
      %v333 = vpack.c.bf16 %v325, %v324
      %v334 = vld [vmem:[%s2] sm:$0xff]
      %v335 = vld [vmem:[%s2 + $0x8] sm:$0xf]
      %v336 = vld [vmem:[%s2 + $0xc] sm:$0xff]
      %v337 = vld [vmem:[%s2 + $0x14] sm:$0xf]
      %v338 = vld [vmem:[%s2 + $0x18] sm:$0xff]
      %v339 = vld [vmem:[%s2 + $0x20] sm:$0xf]
      %v340 = vld [vmem:[%s2 + $0x24] sm:$0xff]
      %v341 = vld [vmem:[%s2 + $0x2c] sm:$0xf]
      %v342 = vld [vmem:[%s2 + $0x30] sm:$0xff]
      %v343 = vld [vmem:[%s2 + $0x38] sm:$0xf]
      %v344 = vld [vmem:[%s2 + $0x3c] sm:$0xff]
      %v345 = vld [vmem:[%s2 + $0x44] sm:$0xf]
      %v346 = vld [vmem:[%s2 + $0x48] sm:$0xff]
      %v347 = vld [vmem:[%s2 + $0x50] sm:$0xf]
      %v348 = vld [vmem:[%s2 + $0x54] sm:$0xff]
      %v349 = vld [vmem:[%s2 + $0x5c] sm:$0xf]
      %v350 = vld [vmem:[%s2 + $0x60] sm:$0xff]
      %v351 = vld [vmem:[%s2 + $0x68] sm:$0xf]
      %v352 = vld [vmem:[%s2 + $0x6c] sm:$0xff]
      %v353 = vld [vmem:[%s2 + $0x74] sm:$0xf]
      %v354 = vld [vmem:[%s2 + $0x78] sm:$0xff]
      %v355 = vld [vmem:[%s2 + $0x80] sm:$0xf]
      %v356 = vld [vmem:[%s2 + $0x84] sm:$0xff]
      %v357 = vld [vmem:[%s2 + $0x8c] sm:$0xf]
      %v358 = vld [vmem:[%s2 + $0x90] sm:$0xff]
      %v359 = vld [vmem:[%s2 + $0x98] sm:$0xf]
      %v360 = vld [vmem:[%s2 + $0x9c] sm:$0xff]
      %v361 = vld [vmem:[%s2 + $0xa4] sm:$0xf]
      %v362 = vld [vmem:[%s2 + $0xa8] sm:$0xff]
      %v363 = vld [vmem:[%s2 + $0xb0] sm:$0xf]
      %v364 = vld [vmem:[%s2 + $0xb4] sm:$0xff]
      %v365 = vld [vmem:[%s2 + $0xbc] sm:$0xf]
      %v366 = vld [vmem:[%s3] sm:$0x7]
      %v368 = vlaneseq
      %v369 = vshrl.u32 %v368, 7
      %v370 = vsub.s32 0, %v369
      %v371 = vrot.slane %v366, %v370
      %v372 = vlaneseq
      %v373 = vshrl.u32 %v372, 7
      %v374 = vsub.s32 1, %v373
      %v375 = vrot.slane %v366, %v374
      %v376 = vlaneseq
      %v377 = vshrl.u32 %v376, 7
      %v378 = vsub.s32 2, %v377
      %v379 = vrot.slane %v366, %v378
      %v415 = vunpack.c.l.b16 %v334
      %v416 = vunpack.c.h.b16 %v334
      %v417 = vunpack.c.l.b16 %v335
      %v418 = vunpack.c.l.b16 %v336
      %v419 = vunpack.c.h.b16 %v336
      %v420 = vunpack.c.l.b16 %v337
      %v421 = vunpack.c.l.b16 %v338
      %v422 = vunpack.c.h.b16 %v338
      %v423 = vunpack.c.l.b16 %v339
      %v424 = vunpack.c.l.b16 %v340
      %v425 = vunpack.c.h.b16 %v340
      %v426 = vunpack.c.l.b16 %v341
      %v427 = vunpack.c.l.b16 %v342
      %v428 = vunpack.c.h.b16 %v342
      %v429 = vunpack.c.l.b16 %v343
      %v430 = vunpack.c.l.b16 %v344
      %v431 = vunpack.c.h.b16 %v344
      %v432 = vunpack.c.l.b16 %v345
      %v433 = vunpack.c.l.b16 %v346
      %v434 = vunpack.c.h.b16 %v346
      %v435 = vunpack.c.l.b16 %v347
      %v436 = vunpack.c.l.b16 %v348
      %v437 = vunpack.c.h.b16 %v348
      %v438 = vunpack.c.l.b16 %v349
      %v439 = vunpack.c.l.b16 %v350
      %v440 = vunpack.c.h.b16 %v350
      %v441 = vunpack.c.l.b16 %v351
      %v442 = vunpack.c.l.b16 %v352
      %v443 = vunpack.c.h.b16 %v352
      %v444 = vunpack.c.l.b16 %v353
      %v445 = vunpack.c.l.b16 %v354
      %v446 = vunpack.c.h.b16 %v354
      %v447 = vunpack.c.l.b16 %v355
      %v448 = vunpack.c.l.b16 %v356
      %v449 = vunpack.c.h.b16 %v356
      %v450 = vunpack.c.l.b16 %v357
      %v451 = vunpack.c.l.b16 %v358
      %v452 = vunpack.c.h.b16 %v358
      %v453 = vunpack.c.l.b16 %v359
      %v454 = vunpack.c.l.b16 %v360
      %v455 = vunpack.c.h.b16 %v360
      %v456 = vunpack.c.l.b16 %v361
      %v457 = vunpack.c.l.b16 %v362
      %v458 = vunpack.c.h.b16 %v362
      %v459 = vunpack.c.l.b16 %v363
      %v460 = vunpack.c.l.b16 %v364
      %v461 = vunpack.c.h.b16 %v364
      %v462 = vunpack.c.l.b16 %v365
      %v463 = vpack.c.b16 %v418, %v415
      %v464 = vpack.c.b16 %v419, %v416
      %v465 = vpack.c.b16 %v420, %v417
      %v466 = vpack.c.b16 %v424, %v421
      %v467 = vpack.c.b16 %v425, %v422
      %v468 = vpack.c.b16 %v426, %v423
      %v469 = vpack.c.b16 %v430, %v427
      %v470 = vpack.c.b16 %v431, %v428
      %v471 = vpack.c.b16 %v432, %v429
      %v472 = vpack.c.b16 %v436, %v433
      %v473 = vpack.c.b16 %v437, %v434
      %v474 = vpack.c.b16 %v438, %v435
      %v475 = vpack.c.b16 %v442, %v439
      %v476 = vpack.c.b16 %v443, %v440
      %v477 = vpack.c.b16 %v444, %v441
      %v478 = vpack.c.b16 %v448, %v445
      %v479 = vpack.c.b16 %v449, %v446
      %v480 = vpack.c.b16 %v450, %v447
      %v481 = vpack.c.b16 %v454, %v451
      %v482 = vpack.c.b16 %v455, %v452
      %v483 = vpack.c.b16 %v456, %v453
      %v484 = vpack.c.b16 %v460, %v457
      %v485 = vpack.c.b16 %v461, %v458
      %v486 = vpack.c.b16 %v462, %v459
      %511 = vmatprep.subr.bf16.mxu0 %v464
      %512 = vmatpush1.bf16.msra.mxu0 %v463
      %513 = vmatprep.subr.bf16.mxu0 %v467
      %514 = vmatpush1.bf16.msra.mxu0 %v466
      %515 = vmatprep.subr.bf16.mxu0 %v470
      %516 = vmatpush1.bf16.msra.mxu0 %v469
      %517 = vmatprep.subr.bf16.mxu0 %v473
      %518 = vmatpush1.bf16.msra.mxu0 %v472
      %519 = vmatprep.subr.bf16.mxu0 %v476
      %520 = vmatpush1.bf16.msra.mxu0 %v475
      %521 = vmatprep.subr.bf16.mxu0 %v479
      %522 = vmatpush1.bf16.msra.mxu0 %v478
      %523 = vmatprep.subr.bf16.mxu0 %v482
      %524 = vmatpush1.bf16.msra.mxu0 %v481
      %525 = vmatprep.subr.bf16.mxu0 %v485
      %526 = vmatpush1.bf16.msra.mxu0 %v484
      %527 = vmatprep.subr.bf16.mxu0 0
      %528 = vmatpush1.bf16.msra.mxu0 0
      %529 = vmatprep.subr.bf16.mxu0 0
      %530 = vmatpush1.bf16.msra.mxu0 0
      %531 = vmatprep.subr.bf16.mxu0 0
      %532 = vmatpush1.bf16.msra.mxu0 0
      %533 = vmatprep.subr.bf16.mxu0 0
      %534 = vmatpush1.bf16.msra.mxu0 0
      %535 = vmatprep.subr.bf16.mxu0 0
      %536 = vmatpush1.bf16.msra.mxu0 0
      %537 = vmatprep.subr.bf16.mxu0 0
      %538 = vmatpush1.bf16.msra.mxu0 0
      %539 = vmatprep.subr.bf16.mxu0 0
      %540 = vmatpush1.bf16.msra.mxu0 0
      %541 = vmatprep.subr.bf16.mxu0 0
      %542 = vmatpush1.bf16.msra.mxu0 0
      %543 = vmatprep.mubr.bf16.mxu0 0
      %544 = vmatmul.mubr.bf16.gmra.mrb[0].mxu0 %v326
      %v545 = vpop.f32.mrb[0].mxu0
      %v546 = vadd.f32 %v371, %v545
      %v547 = vpop.f32.mrb[0].mxu0
      %v548 = vadd.f32 %v375, %v547
      %v549 = vpop.f32.mrb[0].mxu0
      %v550 = vadd.f32 %v371, %v549
      %v551 = vpop.f32.mrb[0].mxu0
      %v552 = vadd.f32 %v375, %v551
      %553 = vmatprep.mubr.bf16.mxu0 0
      %554 = vmatmul.mubr.bf16.gmra.mrb[0].mxu0 %v327
      %v555 = vpop.f32.mrb[0].mxu0
      %v556 = vadd.f32 %v371, %v555
      %v557 = vpop.f32.mrb[0].mxu0
      %v558 = vadd.f32 %v375, %v557
      %v559 = vpop.f32.mrb[0].mxu0
      %v560 = vadd.f32 %v371, %v559
      %v561 = vpop.f32.mrb[0].mxu0
      %v562 = vadd.f32 %v375, %v561
      %563 = vmatprep.mubr.bf16.mxu0 0
      %564 = vmatmul.mubr.bf16.gmra.mrb[0].mxu0 %v328
      %v565 = vpop.f32.mrb[0].mxu0
      %v566 = vadd.f32 %v371, %v565
      %v567 = vpop.f32.mrb[0].mxu0
      %v568 = vadd.f32 %v375, %v567
      %v569 = vpop.f32.mrb[0].mxu0
      %v570 = vadd.f32 %v371, %v569
      %v571 = vpop.f32.mrb[0].mxu0
      %v572 = vadd.f32 %v375, %v571
      %573 = vmatprep.mubr.bf16.mxu0 0
      %574 = vmatmul.mubr.bf16.gmra.mrb[0].mxu0 %v329
      %v575 = vpop.f32.mrb[0].mxu0
      %v576 = vadd.f32 %v371, %v575
      %v577 = vpop.f32.mrb[0].mxu0
      %v578 = vadd.f32 %v375, %v577
      %v579 = vpop.f32.mrb[0].mxu0
      %v580 = vadd.f32 %v371, %v579
      %v581 = vpop.f32.mrb[0].mxu0
      %v582 = vadd.f32 %v375, %v581
      %583 = vmatprep.mubr.bf16.mxu0 0
      %584 = vmatmul.mubr.bf16.gmra.mrb[0].mxu0 %v330
      %v585 = vpop.f32.mrb[0].mxu0
      %v586 = vadd.f32 %v371, %v585
      %v587 = vpop.f32.mrb[0].mxu0
      %v588 = vadd.f32 %v375, %v587
      %v589 = vpop.f32.mrb[0].mxu0
      %v590 = vadd.f32 %v371, %v589
      %v591 = vpop.f32.mrb[0].mxu0
      %v592 = vadd.f32 %v375, %v591
      %593 = vmatprep.mubr.bf16.mxu0 0
      %594 = vmatmul.mubr.bf16.gmra.mrb[0].mxu0 %v331
      %v595 = vpop.f32.mrb[0].mxu0
      %v596 = vadd.f32 %v371, %v595
      %v597 = vpop.f32.mrb[0].mxu0
      %v598 = vadd.f32 %v375, %v597
      %v599 = vpop.f32.mrb[0].mxu0
      %v600 = vadd.f32 %v371, %v599
      %v601 = vpop.f32.mrb[0].mxu0
      %v602 = vadd.f32 %v375, %v601
      %603 = vmatprep.mubr.bf16.mxu0 0
      %604 = vmatmul.mubr.bf16.gmra.mrb[0].mxu0 %v332
      %v605 = vpop.f32.mrb[0].mxu0
      %v606 = vadd.f32 %v371, %v605
      %v607 = vpop.f32.mrb[0].mxu0
      %v608 = vadd.f32 %v375, %v607
      %v609 = vpop.f32.mrb[0].mxu0
      %v610 = vadd.f32 %v371, %v609
      %v611 = vpop.f32.mrb[0].mxu0
      %v612 = vadd.f32 %v375, %v611
      %613 = vmatprep.mubr.bf16.mxu0 0
      %614 = vmatmul.mubr.bf16.gmra.mrb[0].mxu0 %v333
      %v615 = vpop.f32.mrb[0].mxu0
      %v616 = vadd.f32 %v371, %v615
      %v617 = vpop.f32.mrb[0].mxu0
      %v618 = vadd.f32 %v375, %v617
      %v619 = vpop.f32.mrb[0].mxu0
      %v620 = vadd.f32 %v371, %v619
      %v621 = vpop.f32.mrb[0].mxu0
      %v622 = vadd.f32 %v375, %v621
      %623 = vdwg.mxu0
      %624 = vmatprep.subr.bf16.mxu0 0
      %625 = vmatpush1.bf16.msra.mxu0 %v465
      %626 = vmatprep.subr.bf16.mxu0 0
      %627 = vmatpush1.bf16.msra.mxu0 %v468
      %628 = vmatprep.subr.bf16.mxu0 0
      %629 = vmatpush1.bf16.msra.mxu0 %v471
      %630 = vmatprep.subr.bf16.mxu0 0
      %631 = vmatpush1.bf16.msra.mxu0 %v474
      %632 = vmatprep.subr.bf16.mxu0 0
      %633 = vmatpush1.bf16.msra.mxu0 %v477
      %634 = vmatprep.subr.bf16.mxu0 0
      %635 = vmatpush1.bf16.msra.mxu0 %v480
      %636 = vmatprep.subr.bf16.mxu0 0
      %637 = vmatpush1.bf16.msra.mxu0 %v483
      %638 = vmatprep.subr.bf16.mxu0 0
      %639 = vmatpush1.bf16.msra.mxu0 %v486
      %640 = vmatprep.subr.bf16.mxu0 0
      %641 = vmatpush1.bf16.msra.mxu0 0
      %642 = vmatprep.subr.bf16.mxu0 0
      %643 = vmatpush1.bf16.msra.mxu0 0
      %644 = vmatprep.subr.bf16.mxu0 0
      %645 = vmatpush1.bf16.msra.mxu0 0
      %646 = vmatprep.subr.bf16.mxu0 0
      %647 = vmatpush1.bf16.msra.mxu0 0
      %648 = vmatprep.subr.bf16.mxu0 0
      %649 = vmatpush1.bf16.msra.mxu0 0
      %650 = vmatprep.subr.bf16.mxu0 0
      %651 = vmatpush1.bf16.msra.mxu0 0
      %652 = vmatprep.subr.bf16.mxu0 0
      %653 = vmatpush1.bf16.msra.mxu0 0
      %654 = vmatprep.subr.bf16.mxu0 0
      %655 = vmatpush1.bf16.msra.mxu0 0
      %656 = vmatprep.mubr.bf16.mxu0 0
      %657 = vmatmul.mubr.bf16.gmra.mrb[0].mxu0 %v326
      %v658 = vpop.f32.mrb[0].mxu0
      %v659 = vadd.f32 %v379, %v658
      %v660 = vpop.f32.mrb[0].mxu0
      %v661 = vpop.f32.mrb[0].mxu0
      %v662 = vadd.f32 %v379, %v661
      %v663 = vpop.f32.mrb[0].mxu0
      %664 = vmatprep.mubr.bf16.mxu0 0
      %665 = vmatmul.mubr.bf16.gmra.mrb[0].mxu0 %v327
      %v666 = vpop.f32.mrb[0].mxu0
      %v667 = vadd.f32 %v379, %v666
      %v668 = vpop.f32.mrb[0].mxu0
      %v669 = vpop.f32.mrb[0].mxu0
      %v670 = vadd.f32 %v379, %v669
      %v671 = vpop.f32.mrb[0].mxu0
      %672 = vmatprep.mubr.bf16.mxu0 0
      %673 = vmatmul.mubr.bf16.gmra.mrb[0].mxu0 %v328
      %v674 = vpop.f32.mrb[0].mxu0
      %v675 = vadd.f32 %v379, %v674
      %v676 = vpop.f32.mrb[0].mxu0
      %v677 = vpop.f32.mrb[0].mxu0
      %v678 = vadd.f32 %v379, %v677
      %v679 = vpop.f32.mrb[0].mxu0
      %680 = vmatprep.mubr.bf16.mxu0 0
      %681 = vmatmul.mubr.bf16.gmra.mrb[0].mxu0 %v329
      %v682 = vpop.f32.mrb[0].mxu0
      %v683 = vadd.f32 %v379, %v682
      %v684 = vpop.f32.mrb[0].mxu0
      %v685 = vpop.f32.mrb[0].mxu0
      %v686 = vadd.f32 %v379, %v685
      %v687 = vpop.f32.mrb[0].mxu0
      %688 = vmatprep.mubr.bf16.mxu0 0
      %689 = vmatmul.mubr.bf16.gmra.mrb[0].mxu0 %v330
      %v690 = vpop.f32.mrb[0].mxu0
      %v691 = vadd.f32 %v379, %v690
      %v692 = vpop.f32.mrb[0].mxu0
      %v693 = vpop.f32.mrb[0].mxu0
      %v694 = vadd.f32 %v379, %v693
      %v695 = vpop.f32.mrb[0].mxu0
      %696 = vmatprep.mubr.bf16.mxu0 0
      %697 = vmatmul.mubr.bf16.gmra.mrb[0].mxu0 %v331
      %v698 = vpop.f32.mrb[0].mxu0
      %v699 = vadd.f32 %v379, %v698
      %v700 = vpop.f32.mrb[0].mxu0
      %v701 = vpop.f32.mrb[0].mxu0
      %v702 = vadd.f32 %v379, %v701
      %v703 = vpop.f32.mrb[0].mxu0
      %704 = vmatprep.mubr.bf16.mxu0 0
      %705 = vmatmul.mubr.bf16.gmra.mrb[0].mxu0 %v332
      %v706 = vpop.f32.mrb[0].mxu0
      %v707 = vadd.f32 %v379, %v706
      %v708 = vpop.f32.mrb[0].mxu0
      %v709 = vpop.f32.mrb[0].mxu0
      %v710 = vadd.f32 %v379, %v709
      %v711 = vpop.f32.mrb[0].mxu0
      %712 = vmatprep.mubr.bf16.mxu0 0
      %713 = vmatmul.mubr.bf16.gmra.mrb[0].mxu0 %v333
      %v714 = vpop.f32.mrb[0].mxu0
      %v715 = vadd.f32 %v379, %v714
      %v716 = vpop.f32.mrb[0].mxu0
      %v717 = vpop.f32.mrb[0].mxu0
      %v718 = vadd.f32 %v379, %v717
      %v719 = vpop.f32.mrb[0].mxu0
      %720 = vdwg.mxu0
      %s721 = scalar_lea.vmem %s1, %s19
      %v722 = vld [vmem:[%s721] sm:$0x1]
      %v723 = vsub.f32 1.0, %v722
      %v724 = vmul.f32 %v723, -10000.0
      %v725 = vpack.c.bf16 %v550, %v546
      %v726 = vpack.c.bf16 %v560, %v556
      %v727 = vpack.c.bf16 %v570, %v566
      %v728 = vpack.c.bf16 %v580, %v576
      %v729 = vpack.c.bf16 %v590, %v586
      %v730 = vpack.c.bf16 %v600, %v596
      %v731 = vpack.c.bf16 %v610, %v606
      %v732 = vpack.c.bf16 %v620, %v616
      %v733 = vpack.c.bf16 %v552, %v548
      %v734 = vpack.c.bf16 %v562, %v558
      %v735 = vpack.c.bf16 %v572, %v568
      %v736 = vpack.c.bf16 %v582, %v578
      %v737 = vpack.c.bf16 %v592, %v588
      %v738 = vpack.c.bf16 %v602, %v598
      %v739 = vpack.c.bf16 %v612, %v608
      %v740 = vpack.c.bf16 %v622, %v618
      %v741 = vpack.c.bf16 %v662, %v659
      %v742 = vpack.c.bf16 %v670, %v667
      %v743 = vpack.c.bf16 %v678, %v675
      %v744 = vpack.c.bf16 %v686, %v683
      %v745 = vpack.c.bf16 %v694, %v691
      %v746 = vpack.c.bf16 %v702, %v699
      %v747 = vpack.c.bf16 %v710, %v707
      %v748 = vpack.c.bf16 %v718, %v715
      %vm749 = vcmask 261120
      %v751 = vsel %vm749, %v725, 0
      %v754 = vsel %vm749, %v726, 0
      %v757 = vsel %vm749, %v727, 0
      %v760 = vsel %vm749, %v728, 0
      %v763 = vsel %vm749, %v729, 0
      %v766 = vsel %vm749, %v730, 0
      %v769 = vsel %vm749, %v731, 0
      %v772 = vsel %vm749, %v732, 0
      %v775 = vsel %vm749, %v733, 0
      %v778 = vsel %vm749, %v734, 0
      %v781 = vsel %vm749, %v735, 0
      %v784 = vsel %vm749, %v736, 0
      %v787 = vsel %vm749, %v737, 0
      %v790 = vsel %vm749, %v738, 0
      %v793 = vsel %vm749, %v739, 0
      %v796 = vsel %vm749, %v740, 0
      %798 = vmatprep.subr.bf16.mxu0 0
      %799 = vmatpush1.bf16.xpose.msra.mxu0 %v775
      %800 = vmatprep.subr.bf16.mxu0 0
      %801 = vmatpush1.bf16.xpose.msra.mxu0 %v778
      %802 = vmatprep.subr.bf16.mxu0 0
      %803 = vmatpush1.bf16.xpose.msra.mxu0 %v781
      %804 = vmatprep.subr.bf16.mxu0 0
      %805 = vmatpush1.bf16.xpose.msra.mxu0 %v784
      %806 = vmatprep.subr.bf16.mxu0 0
      %807 = vmatpush1.bf16.xpose.msra.mxu0 %v787
      %808 = vmatprep.subr.bf16.mxu0 0
      %809 = vmatpush1.bf16.xpose.msra.mxu0 %v790
      %810 = vmatprep.subr.bf16.mxu0 0
      %811 = vmatpush1.bf16.xpose.msra.mxu0 %v793
      %812 = vmatprep.subr.bf16.mxu0 0
      %813 = vmatpush1.bf16.xpose.msra.mxu0 %v796
      %814 = vmatprep.subr.bf16.mxu0 0
      %815 = vmatpush1.bf16.xpose.msra.mxu0 0
      %816 = vmatprep.subr.bf16.mxu0 0
      %817 = vmatpush1.bf16.xpose.msra.mxu0 0
      %818 = vmatprep.subr.bf16.mxu0 0
      %819 = vmatpush1.bf16.xpose.msra.mxu0 0
      %820 = vmatprep.subr.bf16.mxu0 0
      %821 = vmatpush1.bf16.xpose.msra.mxu0 0
      %822 = vmatprep.subr.bf16.mxu0 0
      %823 = vmatpush1.bf16.xpose.msra.mxu0 0
      %824 = vmatprep.subr.bf16.mxu0 0
      %825 = vmatpush1.bf16.xpose.msra.mxu0 0
      %826 = vmatprep.subr.bf16.mxu0 0
      %827 = vmatpush1.bf16.xpose.msra.mxu0 0
      %828 = vmatprep.subr.bf16.mxu0 0
      %829 = vmatpush1.bf16.xpose.msra.mxu0 0
      %830 = vmatprep.mubr.bf16.mxu0 0
      %831 = vmatmul.mubr.bf16.gmra.mrb[0].mxu0 %v751
      %v832 = vpop.f32.mrb[0].mxu0
      %v833 = vadd.f32 0.0, %v832
      %v834 = vpop.f32.mrb[0].mxu0
      %v835 = vpop.f32.mrb[0].mxu0
      %v836 = vadd.f32 0.0, %v835
      %v837 = vpop.f32.mrb[0].mxu0
      %838 = vmatprep.mubr.bf16.mxu0 0
      %839 = vmatmul.mubr.bf16.gmra.mrb[0].mxu0 %v754
      %v840 = vpop.f32.mrb[0].mxu0
      %v841 = vadd.f32 0.0, %v840
      %v842 = vpop.f32.mrb[0].mxu0
      %v843 = vpop.f32.mrb[0].mxu0
      %v844 = vadd.f32 0.0, %v843
      %v845 = vpop.f32.mrb[0].mxu0
      %846 = vmatprep.mubr.bf16.mxu0 0
      %847 = vmatmul.mubr.bf16.gmra.mrb[0].mxu0 %v757
      %v848 = vpop.f32.mrb[0].mxu0
      %v849 = vadd.f32 0.0, %v848
      %v850 = vpop.f32.mrb[0].mxu0
      %v851 = vpop.f32.mrb[0].mxu0
      %v852 = vadd.f32 0.0, %v851
      %v853 = vpop.f32.mrb[0].mxu0
      %854 = vmatprep.mubr.bf16.mxu0 0
      %855 = vmatmul.mubr.bf16.gmra.mrb[0].mxu0 %v760
      %v856 = vpop.f32.mrb[0].mxu0
      %v857 = vadd.f32 0.0, %v856
      %v858 = vpop.f32.mrb[0].mxu0
      %v859 = vpop.f32.mrb[0].mxu0
      %v860 = vadd.f32 0.0, %v859
      %v861 = vpop.f32.mrb[0].mxu0
      %862 = vmatprep.mubr.bf16.mxu0 0
      %863 = vmatmul.mubr.bf16.gmra.mrb[0].mxu0 %v763
      %v864 = vpop.f32.mrb[0].mxu0
      %v865 = vadd.f32 0.0, %v864
      %v866 = vpop.f32.mrb[0].mxu0
      %v867 = vpop.f32.mrb[0].mxu0
      %v868 = vadd.f32 0.0, %v867
      %v869 = vpop.f32.mrb[0].mxu0
      %870 = vmatprep.mubr.bf16.mxu0 0
      %871 = vmatmul.mubr.bf16.gmra.mrb[0].mxu0 %v766
      %v872 = vpop.f32.mrb[0].mxu0
      %v873 = vadd.f32 0.0, %v872
      %v874 = vpop.f32.mrb[0].mxu0
      %v875 = vpop.f32.mrb[0].mxu0
      %v876 = vadd.f32 0.0, %v875
      %v877 = vpop.f32.mrb[0].mxu0
      %878 = vmatprep.mubr.bf16.mxu0 0
      %879 = vmatmul.mubr.bf16.gmra.mrb[0].mxu0 %v769
      %v880 = vpop.f32.mrb[0].mxu0
      %v881 = vadd.f32 0.0, %v880
      %v882 = vpop.f32.mrb[0].mxu0
      %v883 = vpop.f32.mrb[0].mxu0
      %v884 = vadd.f32 0.0, %v883
      %v885 = vpop.f32.mrb[0].mxu0
      %886 = vmatprep.mubr.bf16.mxu0 0
      %887 = vmatmul.mubr.bf16.gmra.mrb[0].mxu0 %v772
      %v888 = vpop.f32.mrb[0].mxu0
      %v889 = vadd.f32 0.0, %v888
      %v890 = vpop.f32.mrb[0].mxu0
      %v891 = vpop.f32.mrb[0].mxu0
      %v892 = vadd.f32 0.0, %v891
      %v893 = vpop.f32.mrb[0].mxu0
      %894 = vdwg.mxu0
      %v895 = vmul.f32 %v833, 0.17677669
      %v896 = vmul.f32 %v836, 0.17677669
      %v897 = vmul.f32 %v841, 0.17677669
      %v898 = vmul.f32 %v844, 0.17677669
      %v899 = vmul.f32 %v849, 0.17677669
      %v900 = vmul.f32 %v852, 0.17677669
      %v901 = vmul.f32 %v857, 0.17677669
      %v902 = vmul.f32 %v860, 0.17677669
      %v903 = vmul.f32 %v865, 0.17677669
      %v904 = vmul.f32 %v868, 0.17677669
      %v905 = vmul.f32 %v873, 0.17677669
      %v906 = vmul.f32 %v876, 0.17677669
      %v907 = vmul.f32 %v881, 0.17677669
      %v908 = vmul.f32 %v884, 0.17677669
      %v909 = vmul.f32 %v889, 0.17677669
      %v910 = vmul.f32 %v892, 0.17677669
      %v911 = vlaneseq
      %v912 = vshrl.u32 %v911, 7
      %v913 = vsub.s32 0, %v912
      %v914 = vrot.slane %v724, %v913
      %v915 = vadd.f32 %v895, %v914
      %v916 = vadd.f32 %v896, %v914
      %v917 = vadd.f32 %v897, %v914
      %v918 = vadd.f32 %v898, %v914
      %v919 = vadd.f32 %v899, %v914
      %v920 = vadd.f32 %v900, %v914
      %v921 = vadd.f32 %v901, %v914
      %v922 = vadd.f32 %v902, %v914
      %v923 = vadd.f32 %v903, %v914
      %v924 = vadd.f32 %v904, %v914
      %v925 = vadd.f32 %v905, %v914
      %v926 = vadd.f32 %v906, %v914
      %v927 = vadd.f32 %v907, %v914
      %v928 = vadd.f32 %v908, %v914
      %v929 = vadd.f32 %v909, %v914
      %v930 = vadd.f32 %v910, %v914
      %931 = vmax.xlane.f32.xlu0 %v915
      %v932 = vpop.xlane.xlu0 %931
      %933 = vmax.xlane.f32.xlu0 %v916
      %v934 = vpop.xlane.xlu0 %933
      %935 = vmax.xlane.f32.xlu0 %v917
      %v936 = vpop.xlane.xlu0 %935
      %937 = vmax.xlane.f32.xlu0 %v918
      %v938 = vpop.xlane.xlu0 %937
      %939 = vmax.xlane.f32.xlu0 %v919
      %v940 = vpop.xlane.xlu0 %939
      %941 = vmax.xlane.f32.xlu0 %v920
      %v942 = vpop.xlane.xlu0 %941
      %943 = vmax.xlane.f32.xlu0 %v921
      %v944 = vpop.xlane.xlu0 %943
      %945 = vmax.xlane.f32.xlu0 %v922
      %v946 = vpop.xlane.xlu0 %945
      %947 = vmax.xlane.f32.xlu0 %v923
      %v948 = vpop.xlane.xlu0 %947
      %949 = vmax.xlane.f32.xlu0 %v924
      %v950 = vpop.xlane.xlu0 %949
      %951 = vmax.xlane.f32.xlu0 %v925
      %v952 = vpop.xlane.xlu0 %951
      %953 = vmax.xlane.f32.xlu0 %v926
      %v954 = vpop.xlane.xlu0 %953
      %955 = vmax.xlane.f32.xlu0 %v927
      %v956 = vpop.xlane.xlu0 %955
      %957 = vmax.xlane.f32.xlu0 %v928
      %v958 = vpop.xlane.xlu0 %957
      %959 = vmax.xlane.f32.xlu0 %v929
      %v960 = vpop.xlane.xlu0 %959
      %961 = vmax.xlane.f32.xlu0 %v930
      %v962 = vpop.xlane.xlu0 %961
      %v963 = vsub.f32 %v915, %v932
      %v964 = vsub.f32 %v916, %v934
      %v965 = vsub.f32 %v917, %v936
      %v966 = vsub.f32 %v918, %v938
      %v967 = vsub.f32 %v919, %v940
      %v968 = vsub.f32 %v920, %v942
      %v969 = vsub.f32 %v921, %v944
      %v970 = vsub.f32 %v922, %v946
      %v971 = vsub.f32 %v923, %v948
      %v972 = vsub.f32 %v924, %v950
      %v973 = vsub.f32 %v925, %v952
      %v974 = vsub.f32 %v926, %v954
      %v975 = vsub.f32 %v927, %v956
      %v976 = vsub.f32 %v928, %v958
      %v977 = vsub.f32 %v929, %v960
      %v978 = vsub.f32 %v930, %v962
      %v979 = vmul.f32 %v963, 1.442695
      %v980 = vpow.pop %v979
      %v981 = vmul.f32 %v964, 1.442695
      %v982 = vpow.pop %v981
      %v983 = vmul.f32 %v965, 1.442695
      %v984 = vpow.pop %v983
      %v985 = vmul.f32 %v966, 1.442695
      %v986 = vpow.pop %v985
      %v987 = vmul.f32 %v967, 1.442695
      %v988 = vpow.pop %v987
      %v989 = vmul.f32 %v968, 1.442695
      %v990 = vpow.pop %v989
      %v991 = vmul.f32 %v969, 1.442695
      %v992 = vpow.pop %v991
      %v993 = vmul.f32 %v970, 1.442695
      %v994 = vpow.pop %v993
      %v995 = vmul.f32 %v971, 1.442695
      %v996 = vpow.pop %v995
      %v997 = vmul.f32 %v972, 1.442695
      %v998 = vpow.pop %v997
      %v999 = vmul.f32 %v973, 1.442695
      %v1000 = vpow.pop %v999
      %v1001 = vmul.f32 %v974, 1.442695
      %v1002 = vpow.pop %v1001
      %v1003 = vmul.f32 %v975, 1.442695
      %v1004 = vpow.pop %v1003
      %v1005 = vmul.f32 %v976, 1.442695
      %v1006 = vpow.pop %v1005
      %v1007 = vmul.f32 %v977, 1.442695
      %v1008 = vpow.pop %v1007
      %v1009 = vmul.f32 %v978, 1.442695
      %v1010 = vpow.pop %v1009
      %1011 = vadd.xlane.f32.xlu0 %v980
      %v1012 = vpop.xlane.xlu0 %1011
      %1013 = vadd.xlane.f32.xlu0 %v982
      %v1014 = vpop.xlane.xlu0 %1013
      %1015 = vadd.xlane.f32.xlu0 %v984
      %v1016 = vpop.xlane.xlu0 %1015
      %1017 = vadd.xlane.f32.xlu0 %v986
      %v1018 = vpop.xlane.xlu0 %1017
      %1019 = vadd.xlane.f32.xlu0 %v988
      %v1020 = vpop.xlane.xlu0 %1019
      %1021 = vadd.xlane.f32.xlu0 %v990
      %v1022 = vpop.xlane.xlu0 %1021
      %1023 = vadd.xlane.f32.xlu0 %v992
      %v1024 = vpop.xlane.xlu0 %1023
      %1025 = vadd.xlane.f32.xlu0 %v994
      %v1026 = vpop.xlane.xlu0 %1025
      %1027 = vadd.xlane.f32.xlu0 %v996
      %v1028 = vpop.xlane.xlu0 %1027
      %1029 = vadd.xlane.f32.xlu0 %v998
      %v1030 = vpop.xlane.xlu0 %1029
      %1031 = vadd.xlane.f32.xlu0 %v1000
      %v1032 = vpop.xlane.xlu0 %1031
      %1033 = vadd.xlane.f32.xlu0 %v1002
      %v1034 = vpop.xlane.xlu0 %1033
      %1035 = vadd.xlane.f32.xlu0 %v1004
      %v1036 = vpop.xlane.xlu0 %1035
      %1037 = vadd.xlane.f32.xlu0 %v1006
      %v1038 = vpop.xlane.xlu0 %1037
      %1039 = vadd.xlane.f32.xlu0 %v1008
      %v1040 = vpop.xlane.xlu0 %1039
      %1041 = vadd.xlane.f32.xlu0 %v1010
      %v1042 = vpop.xlane.xlu0 %1041
      %v1043 = vrcp.pop %v1012
      %v1044 = vrcp.pop %v1014
      %v1045 = vrcp.pop %v1016
      %v1046 = vrcp.pop %v1018
      %v1047 = vrcp.pop %v1020
      %v1048 = vrcp.pop %v1022
      %v1049 = vrcp.pop %v1024
      %v1050 = vrcp.pop %v1026
      %v1051 = vrcp.pop %v1028
      %v1052 = vrcp.pop %v1030
      %v1053 = vrcp.pop %v1032
      %v1054 = vrcp.pop %v1034
      %v1055 = vrcp.pop %v1036
      %v1056 = vrcp.pop %v1038
      %v1057 = vrcp.pop %v1040
      %v1058 = vrcp.pop %v1042
      %v1059 = vmul.f32 %v980, %v1043
      %v1060 = vmul.f32 %v982, %v1044
      %v1061 = vmul.f32 %v984, %v1045
      %v1062 = vmul.f32 %v986, %v1046
      %v1063 = vmul.f32 %v988, %v1047
      %v1064 = vmul.f32 %v990, %v1048
      %v1065 = vmul.f32 %v992, %v1049
      %v1066 = vmul.f32 %v994, %v1050
      %v1067 = vmul.f32 %v996, %v1051
      %v1068 = vmul.f32 %v998, %v1052
      %v1069 = vmul.f32 %v1000, %v1053
      %v1070 = vmul.f32 %v1002, %v1054
      %v1071 = vmul.f32 %v1004, %v1055
      %v1072 = vmul.f32 %v1006, %v1056
      %v1073 = vmul.f32 %v1008, %v1057
      %v1074 = vmul.f32 %v1010, %v1058
      %v1075 = vpack.c.bf16 %v1060, %v1059
      %v1076 = vpack.c.bf16 %v1062, %v1061
      %v1077 = vpack.c.bf16 %v1064, %v1063
      %v1078 = vpack.c.bf16 %v1066, %v1065
      %v1079 = vpack.c.bf16 %v1068, %v1067
      %v1080 = vpack.c.bf16 %v1070, %v1069
      %v1081 = vpack.c.bf16 %v1072, %v1071
      %v1082 = vpack.c.bf16 %v1074, %v1073
      %1083 = vmatprep.subr.bf16.mxu0 0
      %1084 = vmatpush1.bf16.msra.mxu0 %v741
      %1085 = vmatprep.subr.bf16.mxu0 0
      %1086 = vmatpush1.bf16.msra.mxu0 %v742
      %1087 = vmatprep.subr.bf16.mxu0 0
      %1088 = vmatpush1.bf16.msra.mxu0 %v743
      %1089 = vmatprep.subr.bf16.mxu0 0
      %1090 = vmatpush1.bf16.msra.mxu0 %v744
      %1091 = vmatprep.subr.bf16.mxu0 0
      %1092 = vmatpush1.bf16.msra.mxu0 %v745
      %1093 = vmatprep.subr.bf16.mxu0 0
      %1094 = vmatpush1.bf16.msra.mxu0 %v746
      %1095 = vmatprep.subr.bf16.mxu0 0
      %1096 = vmatpush1.bf16.msra.mxu0 %v747
      %1097 = vmatprep.subr.bf16.mxu0 0
      %1098 = vmatpush1.bf16.msra.mxu0 %v748
      %1099 = vmatprep.subr.bf16.mxu0 0
      %1100 = vmatpush1.bf16.msra.mxu0 0
      %1101 = vmatprep.subr.bf16.mxu0 0
      %1102 = vmatpush1.bf16.msra.mxu0 0
      %1103 = vmatprep.subr.bf16.mxu0 0
      %1104 = vmatpush1.bf16.msra.mxu0 0
      %1105 = vmatprep.subr.bf16.mxu0 0
      %1106 = vmatpush1.bf16.msra.mxu0 0
      %1107 = vmatprep.subr.bf16.mxu0 0
      %1108 = vmatpush1.bf16.msra.mxu0 0
      %1109 = vmatprep.subr.bf16.mxu0 0
      %1110 = vmatpush1.bf16.msra.mxu0 0
      %1111 = vmatprep.subr.bf16.mxu0 0
      %1112 = vmatpush1.bf16.msra.mxu0 0
      %1113 = vmatprep.subr.bf16.mxu0 0
      %1114 = vmatpush1.bf16.msra.mxu0 0
      %1115 = vmatprep.mubr.bf16.mxu0 0
      %1116 = vmatmul.mubr.bf16.gmra.mrb[0].mxu0 %v1075
      %v1117 = vpop.f32.mrb[0].mxu0
      %v1118 = vadd.f32 0.0, %v1117
      %v1119 = vpop.f32.mrb[0].mxu0
      %v1120 = vpop.f32.mrb[0].mxu0
      %v1121 = vadd.f32 0.0, %v1120
      %v1122 = vpop.f32.mrb[0].mxu0
      %1123 = vmatprep.mubr.bf16.mxu0 0
      %1124 = vmatmul.mubr.bf16.gmra.mrb[0].mxu0 %v1076
      %v1125 = vpop.f32.mrb[0].mxu0
      %v1126 = vadd.f32 0.0, %v1125
      %v1127 = vpop.f32.mrb[0].mxu0
      %v1128 = vpop.f32.mrb[0].mxu0
      %v1129 = vadd.f32 0.0, %v1128
      %v1130 = vpop.f32.mrb[0].mxu0
      %1131 = vmatprep.mubr.bf16.mxu0 0
      %1132 = vmatmul.mubr.bf16.gmra.mrb[0].mxu0 %v1077
      %v1133 = vpop.f32.mrb[0].mxu0
      %v1134 = vadd.f32 0.0, %v1133
      %v1135 = vpop.f32.mrb[0].mxu0
      %v1136 = vpop.f32.mrb[0].mxu0
      %v1137 = vadd.f32 0.0, %v1136
      %v1138 = vpop.f32.mrb[0].mxu0
      %1139 = vmatprep.mubr.bf16.mxu0 0
      %1140 = vmatmul.mubr.bf16.gmra.mrb[0].mxu0 %v1078
      %v1141 = vpop.f32.mrb[0].mxu0
      %v1142 = vadd.f32 0.0, %v1141
      %v1143 = vpop.f32.mrb[0].mxu0
      %v1144 = vpop.f32.mrb[0].mxu0
      %v1145 = vadd.f32 0.0, %v1144
      %v1146 = vpop.f32.mrb[0].mxu0
      %1147 = vmatprep.mubr.bf16.mxu0 0
      %1148 = vmatmul.mubr.bf16.gmra.mrb[0].mxu0 %v1079
      %v1149 = vpop.f32.mrb[0].mxu0
      %v1150 = vadd.f32 0.0, %v1149
      %v1151 = vpop.f32.mrb[0].mxu0
      %v1152 = vpop.f32.mrb[0].mxu0
      %v1153 = vadd.f32 0.0, %v1152
      %v1154 = vpop.f32.mrb[0].mxu0
      %1155 = vmatprep.mubr.bf16.mxu0 0
      %1156 = vmatmul.mubr.bf16.gmra.mrb[0].mxu0 %v1080
      %v1157 = vpop.f32.mrb[0].mxu0
      %v1158 = vadd.f32 0.0, %v1157
      %v1159 = vpop.f32.mrb[0].mxu0
      %v1160 = vpop.f32.mrb[0].mxu0
      %v1161 = vadd.f32 0.0, %v1160
      %v1162 = vpop.f32.mrb[0].mxu0
      %1163 = vmatprep.mubr.bf16.mxu0 0
      %1164 = vmatmul.mubr.bf16.gmra.mrb[0].mxu0 %v1081
      %v1165 = vpop.f32.mrb[0].mxu0
      %v1166 = vadd.f32 0.0, %v1165
      %v1167 = vpop.f32.mrb[0].mxu0
      %v1168 = vpop.f32.mrb[0].mxu0
      %v1169 = vadd.f32 0.0, %v1168
      %v1170 = vpop.f32.mrb[0].mxu0
      %1171 = vmatprep.mubr.bf16.mxu0 0
      %1172 = vmatmul.mubr.bf16.gmra.mrb[0].mxu0 %v1082
      %v1173 = vpop.f32.mrb[0].mxu0
      %v1174 = vadd.f32 0.0, %v1173
      %v1175 = vpop.f32.mrb[0].mxu0
      %v1176 = vpop.f32.mrb[0].mxu0
      %v1177 = vadd.f32 0.0, %v1176
      %v1178 = vpop.f32.mrb[0].mxu0
      %1179 = vdwg.mxu0
      %v1180 = vpack.c.bf16 %v1121, %v1118
      %v1181 = vpack.c.bf16 %v1129, %v1126
      %v1182 = vpack.c.bf16 %v1137, %v1134
      %v1183 = vpack.c.bf16 %v1145, %v1142
      %v1184 = vpack.c.bf16 %v1153, %v1150
      %v1185 = vpack.c.bf16 %v1161, %v1158
      %v1186 = vpack.c.bf16 %v1169, %v1166
      %v1187 = vpack.c.bf16 %v1177, %v1174
      %v1188 = vld [vmem:[%s4] sm:$0xf]
      %v1189 = vld [vmem:[%s4 + $0x4] sm:$0xf]
      %v1190 = vld [vmem:[%s4 + $0x8] sm:$0xf]
      %v1191 = vld [vmem:[%s4 + $0xc] sm:$0xf]
      %1200 = vrot.lane.b32.xlu0 %v725, 96
      %v1201 = vpop.permute.xlu0 %1200
      %1202 = vrot.lane.b32.xlu0 %v726, 96
      %v1203 = vpop.permute.xlu0 %1202
      %1204 = vrot.lane.b32.xlu0 %v727, 96
      %v1205 = vpop.permute.xlu0 %1204
      %1206 = vrot.lane.b32.xlu0 %v728, 96
      %v1207 = vpop.permute.xlu0 %1206
      %1208 = vrot.lane.b32.xlu0 %v729, 96
      %v1209 = vpop.permute.xlu0 %1208
      %1210 = vrot.lane.b32.xlu0 %v730, 96
      %v1211 = vpop.permute.xlu0 %1210
      %1212 = vrot.lane.b32.xlu0 %v731, 96
      %v1213 = vpop.permute.xlu0 %1212
      %1214 = vrot.lane.b32.xlu0 %v732, 96
      %v1215 = vpop.permute.xlu0 %1214
      %1224 = vrot.lane.b32.xlu0 %v733, 96
      %v1225 = vpop.permute.xlu0 %1224
      %1226 = vrot.lane.b32.xlu0 %v734, 96
      %v1227 = vpop.permute.xlu0 %1226
      %1228 = vrot.lane.b32.xlu0 %v735, 96
      %v1229 = vpop.permute.xlu0 %1228
      %1230 = vrot.lane.b32.xlu0 %v736, 96
      %v1231 = vpop.permute.xlu0 %1230
      %1232 = vrot.lane.b32.xlu0 %v737, 96
      %v1233 = vpop.permute.xlu0 %1232
      %1234 = vrot.lane.b32.xlu0 %v738, 96
      %v1235 = vpop.permute.xlu0 %1234
      %1236 = vrot.lane.b32.xlu0 %v739, 96
      %v1237 = vpop.permute.xlu0 %1236
      %1238 = vrot.lane.b32.xlu0 %v740, 96
      %v1239 = vpop.permute.xlu0 %1238
      %v1241 = vsel %vm749, %v1201, 0
      %v1244 = vsel %vm749, %v1203, 0
      %v1247 = vsel %vm749, %v1205, 0
      %v1250 = vsel %vm749, %v1207, 0
      %v1253 = vsel %vm749, %v1209, 0
      %v1256 = vsel %vm749, %v1211, 0
      %v1259 = vsel %vm749, %v1213, 0
      %v1262 = vsel %vm749, %v1215, 0
      %v1265 = vsel %vm749, %v1225, 0
      %v1268 = vsel %vm749, %v1227, 0
      %v1271 = vsel %vm749, %v1229, 0
      %v1274 = vsel %vm749, %v1231, 0
      %v1277 = vsel %vm749, %v1233, 0
      %v1280 = vsel %vm749, %v1235, 0
      %v1283 = vsel %vm749, %v1237, 0
      %v1286 = vsel %vm749, %v1239, 0
      %1288 = vmatprep.subr.bf16.mxu0 0
      %1289 = vmatpush1.bf16.xpose.msra.mxu0 %v1265
      %1290 = vmatprep.subr.bf16.mxu0 0
      %1291 = vmatpush1.bf16.xpose.msra.mxu0 %v1268
      %1292 = vmatprep.subr.bf16.mxu0 0
      %1293 = vmatpush1.bf16.xpose.msra.mxu0 %v1271
      %1294 = vmatprep.subr.bf16.mxu0 0
      %1295 = vmatpush1.bf16.xpose.msra.mxu0 %v1274
      %1296 = vmatprep.subr.bf16.mxu0 0
      %1297 = vmatpush1.bf16.xpose.msra.mxu0 %v1277
      %1298 = vmatprep.subr.bf16.mxu0 0
      %1299 = vmatpush1.bf16.xpose.msra.mxu0 %v1280
      %1300 = vmatprep.subr.bf16.mxu0 0
      %1301 = vmatpush1.bf16.xpose.msra.mxu0 %v1283
      %1302 = vmatprep.subr.bf16.mxu0 0
      %1303 = vmatpush1.bf16.xpose.msra.mxu0 %v1286
      %1304 = vmatprep.subr.bf16.mxu0 0
      %1305 = vmatpush1.bf16.xpose.msra.mxu0 0
      %1306 = vmatprep.subr.bf16.mxu0 0
      %1307 = vmatpush1.bf16.xpose.msra.mxu0 0
      %1308 = vmatprep.subr.bf16.mxu0 0
      %1309 = vmatpush1.bf16.xpose.msra.mxu0 0
      %1310 = vmatprep.subr.bf16.mxu0 0
      %1311 = vmatpush1.bf16.xpose.msra.mxu0 0
      %1312 = vmatprep.subr.bf16.mxu0 0
      %1313 = vmatpush1.bf16.xpose.msra.mxu0 0
      %1314 = vmatprep.subr.bf16.mxu0 0
      %1315 = vmatpush1.bf16.xpose.msra.mxu0 0
      %1316 = vmatprep.subr.bf16.mxu0 0
      %1317 = vmatpush1.bf16.xpose.msra.mxu0 0
      %1318 = vmatprep.subr.bf16.mxu0 0
      %1319 = vmatpush1.bf16.xpose.msra.mxu0 0
      %1320 = vmatprep.mubr.bf16.mxu0 0
      %1321 = vmatmul.mubr.bf16.gmra.mrb[0].mxu0 %v1241
      %v1322 = vpop.f32.mrb[0].mxu0
      %v1323 = vadd.f32 0.0, %v1322
      %v1324 = vpop.f32.mrb[0].mxu0
      %v1325 = vpop.f32.mrb[0].mxu0
      %v1326 = vadd.f32 0.0, %v1325
      %v1327 = vpop.f32.mrb[0].mxu0
      %1328 = vmatprep.mubr.bf16.mxu0 0
      %1329 = vmatmul.mubr.bf16.gmra.mrb[0].mxu0 %v1244
      %v1330 = vpop.f32.mrb[0].mxu0
      %v1331 = vadd.f32 0.0, %v1330
      %v1332 = vpop.f32.mrb[0].mxu0
      %v1333 = vpop.f32.mrb[0].mxu0
      %v1334 = vadd.f32 0.0, %v1333
      %v1335 = vpop.f32.mrb[0].mxu0
      %1336 = vmatprep.mubr.bf16.mxu0 0
      %1337 = vmatmul.mubr.bf16.gmra.mrb[0].mxu0 %v1247
      %v1338 = vpop.f32.mrb[0].mxu0
      %v1339 = vadd.f32 0.0, %v1338
      %v1340 = vpop.f32.mrb[0].mxu0
      %v1341 = vpop.f32.mrb[0].mxu0
      %v1342 = vadd.f32 0.0, %v1341
      %v1343 = vpop.f32.mrb[0].mxu0
      %1344 = vmatprep.mubr.bf16.mxu0 0
      %1345 = vmatmul.mubr.bf16.gmra.mrb[0].mxu0 %v1250
      %v1346 = vpop.f32.mrb[0].mxu0
      %v1347 = vadd.f32 0.0, %v1346
      %v1348 = vpop.f32.mrb[0].mxu0
      %v1349 = vpop.f32.mrb[0].mxu0
      %v1350 = vadd.f32 0.0, %v1349
      %v1351 = vpop.f32.mrb[0].mxu0
      %1352 = vmatprep.mubr.bf16.mxu0 0
      %1353 = vmatmul.mubr.bf16.gmra.mrb[0].mxu0 %v1253
      %v1354 = vpop.f32.mrb[0].mxu0
      %v1355 = vadd.f32 0.0, %v1354
      %v1356 = vpop.f32.mrb[0].mxu0
      %v1357 = vpop.f32.mrb[0].mxu0
      %v1358 = vadd.f32 0.0, %v1357
      %v1359 = vpop.f32.mrb[0].mxu0
      %1360 = vmatprep.mubr.bf16.mxu0 0
      %1361 = vmatmul.mubr.bf16.gmra.mrb[0].mxu0 %v1256
      %v1362 = vpop.f32.mrb[0].mxu0
      %v1363 = vadd.f32 0.0, %v1362
      %v1364 = vpop.f32.mrb[0].mxu0
      %v1365 = vpop.f32.mrb[0].mxu0
      %v1366 = vadd.f32 0.0, %v1365
      %v1367 = vpop.f32.mrb[0].mxu0
      %1368 = vmatprep.mubr.bf16.mxu0 0
      %1369 = vmatmul.mubr.bf16.gmra.mrb[0].mxu0 %v1259
      %v1370 = vpop.f32.mrb[0].mxu0
      %v1371 = vadd.f32 0.0, %v1370
      %v1372 = vpop.f32.mrb[0].mxu0
      %v1373 = vpop.f32.mrb[0].mxu0
      %v1374 = vadd.f32 0.0, %v1373
      %v1375 = vpop.f32.mrb[0].mxu0
      %1376 = vmatprep.mubr.bf16.mxu0 0
      %1377 = vmatmul.mubr.bf16.gmra.mrb[0].mxu0 %v1262
      %v1378 = vpop.f32.mrb[0].mxu0
      %v1379 = vadd.f32 0.0, %v1378
      %v1380 = vpop.f32.mrb[0].mxu0
      %v1381 = vpop.f32.mrb[0].mxu0
      %v1382 = vadd.f32 0.0, %v1381
      %v1383 = vpop.f32.mrb[0].mxu0
      %1384 = vdwg.mxu0
      %v1385 = vmul.f32 %v1323, 0.17677669
      %v1386 = vmul.f32 %v1326, 0.17677669
      %v1387 = vmul.f32 %v1331, 0.17677669
      %v1388 = vmul.f32 %v1334, 0.17677669
      %v1389 = vmul.f32 %v1339, 0.17677669
      %v1390 = vmul.f32 %v1342, 0.17677669
      %v1391 = vmul.f32 %v1347, 0.17677669
      %v1392 = vmul.f32 %v1350, 0.17677669
      %v1393 = vmul.f32 %v1355, 0.17677669
      %v1394 = vmul.f32 %v1358, 0.17677669
      %v1395 = vmul.f32 %v1363, 0.17677669
      %v1396 = vmul.f32 %v1366, 0.17677669
      %v1397 = vmul.f32 %v1371, 0.17677669
      %v1398 = vmul.f32 %v1374, 0.17677669
      %v1399 = vmul.f32 %v1379, 0.17677669
      %v1400 = vmul.f32 %v1382, 0.17677669
      %v1401 = vadd.f32 %v1385, %v914
      %v1402 = vadd.f32 %v1386, %v914
      %v1403 = vadd.f32 %v1387, %v914
      %v1404 = vadd.f32 %v1388, %v914
      %v1405 = vadd.f32 %v1389, %v914
      %v1406 = vadd.f32 %v1390, %v914
      %v1407 = vadd.f32 %v1391, %v914
      %v1408 = vadd.f32 %v1392, %v914
      %v1409 = vadd.f32 %v1393, %v914
      %v1410 = vadd.f32 %v1394, %v914
      %v1411 = vadd.f32 %v1395, %v914
      %v1412 = vadd.f32 %v1396, %v914
      %v1413 = vadd.f32 %v1397, %v914
      %v1414 = vadd.f32 %v1398, %v914
      %v1415 = vadd.f32 %v1399, %v914
      %v1416 = vadd.f32 %v1400, %v914
      %1417 = vmax.xlane.f32.xlu0 %v1401
      %v1418 = vpop.xlane.xlu0 %1417
      %1419 = vmax.xlane.f32.xlu0 %v1402
      %v1420 = vpop.xlane.xlu0 %1419
      %1421 = vmax.xlane.f32.xlu0 %v1403
      %v1422 = vpop.xlane.xlu0 %1421
      %1423 = vmax.xlane.f32.xlu0 %v1404
      %v1424 = vpop.xlane.xlu0 %1423
      %1425 = vmax.xlane.f32.xlu0 %v1405
      %v1426 = vpop.xlane.xlu0 %1425
      %1427 = vmax.xlane.f32.xlu0 %v1406
      %v1428 = vpop.xlane.xlu0 %1427
      %1429 = vmax.xlane.f32.xlu0 %v1407
      %v1430 = vpop.xlane.xlu0 %1429
      %1431 = vmax.xlane.f32.xlu0 %v1408
      %v1432 = vpop.xlane.xlu0 %1431
      %1433 = vmax.xlane.f32.xlu0 %v1409
      %v1434 = vpop.xlane.xlu0 %1433
      %1435 = vmax.xlane.f32.xlu0 %v1410
      %v1436 = vpop.xlane.xlu0 %1435
      %1437 = vmax.xlane.f32.xlu0 %v1411
      %v1438 = vpop.xlane.xlu0 %1437
      %1439 = vmax.xlane.f32.xlu0 %v1412
      %v1440 = vpop.xlane.xlu0 %1439
      %1441 = vmax.xlane.f32.xlu0 %v1413
      %v1442 = vpop.xlane.xlu0 %1441
      %1443 = vmax.xlane.f32.xlu0 %v1414
      %v1444 = vpop.xlane.xlu0 %1443
      %1445 = vmax.xlane.f32.xlu0 %v1415
      %v1446 = vpop.xlane.xlu0 %1445
      %1447 = vmax.xlane.f32.xlu0 %v1416
      %v1448 = vpop.xlane.xlu0 %1447
      %v1449 = vsub.f32 %v1401, %v1418
      %v1450 = vsub.f32 %v1402, %v1420
      %v1451 = vsub.f32 %v1403, %v1422
      %v1452 = vsub.f32 %v1404, %v1424
      %v1453 = vsub.f32 %v1405, %v1426
      %v1454 = vsub.f32 %v1406, %v1428
      %v1455 = vsub.f32 %v1407, %v1430
      %v1456 = vsub.f32 %v1408, %v1432
      %v1457 = vsub.f32 %v1409, %v1434
      %v1458 = vsub.f32 %v1410, %v1436
      %v1459 = vsub.f32 %v1411, %v1438
      %v1460 = vsub.f32 %v1412, %v1440
      %v1461 = vsub.f32 %v1413, %v1442
      %v1462 = vsub.f32 %v1414, %v1444
      %v1463 = vsub.f32 %v1415, %v1446
      %v1464 = vsub.f32 %v1416, %v1448
      %v1465 = vmul.f32 %v1449, 1.442695
      %v1466 = vpow.pop %v1465
      %v1467 = vmul.f32 %v1450, 1.442695
      %v1468 = vpow.pop %v1467
      %v1469 = vmul.f32 %v1451, 1.442695
      %v1470 = vpow.pop %v1469
      %v1471 = vmul.f32 %v1452, 1.442695
      %v1472 = vpow.pop %v1471
      %v1473 = vmul.f32 %v1453, 1.442695
      %v1474 = vpow.pop %v1473
      %v1475 = vmul.f32 %v1454, 1.442695
      %v1476 = vpow.pop %v1475
      %v1477 = vmul.f32 %v1455, 1.442695
      %v1478 = vpow.pop %v1477
      %v1479 = vmul.f32 %v1456, 1.442695
      %v1480 = vpow.pop %v1479
      %v1481 = vmul.f32 %v1457, 1.442695
      %v1482 = vpow.pop %v1481
      %v1483 = vmul.f32 %v1458, 1.442695
      %v1484 = vpow.pop %v1483
      %v1485 = vmul.f32 %v1459, 1.442695
      %v1486 = vpow.pop %v1485
      %v1487 = vmul.f32 %v1460, 1.442695
      %v1488 = vpow.pop %v1487
      %v1489 = vmul.f32 %v1461, 1.442695
      %v1490 = vpow.pop %v1489
      %v1491 = vmul.f32 %v1462, 1.442695
      %v1492 = vpow.pop %v1491
      %v1493 = vmul.f32 %v1463, 1.442695
      %v1494 = vpow.pop %v1493
      %v1495 = vmul.f32 %v1464, 1.442695
      %v1496 = vpow.pop %v1495
      %1497 = vadd.xlane.f32.xlu0 %v1466
      %v1498 = vpop.xlane.xlu0 %1497
      %1499 = vadd.xlane.f32.xlu0 %v1468
      %v1500 = vpop.xlane.xlu0 %1499
      %1501 = vadd.xlane.f32.xlu0 %v1470
      %v1502 = vpop.xlane.xlu0 %1501
      %1503 = vadd.xlane.f32.xlu0 %v1472
      %v1504 = vpop.xlane.xlu0 %1503
      %1505 = vadd.xlane.f32.xlu0 %v1474
      %v1506 = vpop.xlane.xlu0 %1505
      %1507 = vadd.xlane.f32.xlu0 %v1476
      %v1508 = vpop.xlane.xlu0 %1507
      %1509 = vadd.xlane.f32.xlu0 %v1478
      %v1510 = vpop.xlane.xlu0 %1509
      %1511 = vadd.xlane.f32.xlu0 %v1480
      %v1512 = vpop.xlane.xlu0 %1511
      %1513 = vadd.xlane.f32.xlu0 %v1482
      %v1514 = vpop.xlane.xlu0 %1513
      %1515 = vadd.xlane.f32.xlu0 %v1484
      %v1516 = vpop.xlane.xlu0 %1515
      %1517 = vadd.xlane.f32.xlu0 %v1486
      %v1518 = vpop.xlane.xlu0 %1517
      %1519 = vadd.xlane.f32.xlu0 %v1488
      %v1520 = vpop.xlane.xlu0 %1519
      %1521 = vadd.xlane.f32.xlu0 %v1490
      %v1522 = vpop.xlane.xlu0 %1521
      %1523 = vadd.xlane.f32.xlu0 %v1492
      %v1524 = vpop.xlane.xlu0 %1523
      %1525 = vadd.xlane.f32.xlu0 %v1494
      %v1526 = vpop.xlane.xlu0 %1525
      %1527 = vadd.xlane.f32.xlu0 %v1496
      %v1528 = vpop.xlane.xlu0 %1527
      %v1529 = vrcp.pop %v1498
      %v1530 = vrcp.pop %v1500
      %v1531 = vrcp.pop %v1502
      %v1532 = vrcp.pop %v1504
      %v1533 = vrcp.pop %v1506
      %v1534 = vrcp.pop %v1508
      %v1535 = vrcp.pop %v1510
      %v1536 = vrcp.pop %v1512
      %v1537 = vrcp.pop %v1514
      %v1538 = vrcp.pop %v1516
      %v1539 = vrcp.pop %v1518
      %v1540 = vrcp.pop %v1520
      %v1541 = vrcp.pop %v1522
      %v1542 = vrcp.pop %v1524
      %v1543 = vrcp.pop %v1526
      %v1544 = vrcp.pop %v1528
      %v1545 = vmul.f32 %v1466, %v1529
      %v1546 = vmul.f32 %v1468, %v1530
      %v1547 = vmul.f32 %v1470, %v1531
      %v1548 = vmul.f32 %v1472, %v1532
      %v1549 = vmul.f32 %v1474, %v1533
      %v1550 = vmul.f32 %v1476, %v1534
      %v1551 = vmul.f32 %v1478, %v1535
      %v1552 = vmul.f32 %v1480, %v1536
      %v1553 = vmul.f32 %v1482, %v1537
      %v1554 = vmul.f32 %v1484, %v1538
      %v1555 = vmul.f32 %v1486, %v1539
      %v1556 = vmul.f32 %v1488, %v1540
      %v1557 = vmul.f32 %v1490, %v1541
      %v1558 = vmul.f32 %v1492, %v1542
      %v1559 = vmul.f32 %v1494, %v1543
      %v1560 = vmul.f32 %v1496, %v1544
      %v1561 = vpack.c.bf16 %v1546, %v1545
      %v1562 = vpack.c.bf16 %v1548, %v1547
      %v1563 = vpack.c.bf16 %v1550, %v1549
      %v1564 = vpack.c.bf16 %v1552, %v1551
      %v1565 = vpack.c.bf16 %v1554, %v1553
      %v1566 = vpack.c.bf16 %v1556, %v1555
      %v1567 = vpack.c.bf16 %v1558, %v1557
      %v1568 = vpack.c.bf16 %v1560, %v1559
      %1577 = vrot.lane.b32.xlu0 %v741, 96
      %v1578 = vpop.permute.xlu0 %1577
      %1579 = vrot.lane.b32.xlu0 %v742, 96
      %v1580 = vpop.permute.xlu0 %1579
      %1581 = vrot.lane.b32.xlu0 %v743, 96
      %v1582 = vpop.permute.xlu0 %1581
      %1583 = vrot.lane.b32.xlu0 %v744, 96
      %v1584 = vpop.permute.xlu0 %1583
      %1585 = vrot.lane.b32.xlu0 %v745, 96
      %v1586 = vpop.permute.xlu0 %1585
      %1587 = vrot.lane.b32.xlu0 %v746, 96
      %v1588 = vpop.permute.xlu0 %1587
      %1589 = vrot.lane.b32.xlu0 %v747, 96
      %v1590 = vpop.permute.xlu0 %1589
      %1591 = vrot.lane.b32.xlu0 %v748, 96
      %v1592 = vpop.permute.xlu0 %1591
      %1601 = vmatprep.subr.bf16.mxu0 0
      %1602 = vmatpush1.bf16.msra.mxu0 %v1578
      %1603 = vmatprep.subr.bf16.mxu0 0
      %1604 = vmatpush1.bf16.msra.mxu0 %v1580
      %1605 = vmatprep.subr.bf16.mxu0 0
      %1606 = vmatpush1.bf16.msra.mxu0 %v1582
      %1607 = vmatprep.subr.bf16.mxu0 0
      %1608 = vmatpush1.bf16.msra.mxu0 %v1584
      %1609 = vmatprep.subr.bf16.mxu0 0
      %1610 = vmatpush1.bf16.msra.mxu0 %v1586
      %1611 = vmatprep.subr.bf16.mxu0 0
      %1612 = vmatpush1.bf16.msra.mxu0 %v1588
      %1613 = vmatprep.subr.bf16.mxu0 0
      %1614 = vmatpush1.bf16.msra.mxu0 %v1590
      %1615 = vmatprep.subr.bf16.mxu0 0
      %1616 = vmatpush1.bf16.msra.mxu0 %v1592
      %1617 = vmatprep.subr.bf16.mxu0 0
      %1618 = vmatpush1.bf16.msra.mxu0 0
      %1619 = vmatprep.subr.bf16.mxu0 0
      %1620 = vmatpush1.bf16.msra.mxu0 0
      %1621 = vmatprep.subr.bf16.mxu0 0
      %1622 = vmatpush1.bf16.msra.mxu0 0
      %1623 = vmatprep.subr.bf16.mxu0 0
      %1624 = vmatpush1.bf16.msra.mxu0 0
      %1625 = vmatprep.subr.bf16.mxu0 0
      %1626 = vmatpush1.bf16.msra.mxu0 0
      %1627 = vmatprep.subr.bf16.mxu0 0
      %1628 = vmatpush1.bf16.msra.mxu0 0
      %1629 = vmatprep.subr.bf16.mxu0 0
      %1630 = vmatpush1.bf16.msra.mxu0 0
      %1631 = vmatprep.subr.bf16.mxu0 0
      %1632 = vmatpush1.bf16.msra.mxu0 0
      %1633 = vmatprep.mubr.bf16.mxu0 0
      %1634 = vmatmul.mubr.bf16.gmra.mrb[0].mxu0 %v1561
      %v1635 = vpop.f32.mrb[0].mxu0
      %v1636 = vadd.f32 0.0, %v1635
      %v1637 = vpop.f32.mrb[0].mxu0
      %v1638 = vpop.f32.mrb[0].mxu0
      %v1639 = vadd.f32 0.0, %v1638
      %v1640 = vpop.f32.mrb[0].mxu0
      %1641 = vmatprep.mubr.bf16.mxu0 0
      %1642 = vmatmul.mubr.bf16.gmra.mrb[0].mxu0 %v1562
      %v1643 = vpop.f32.mrb[0].mxu0
      %v1644 = vadd.f32 0.0, %v1643
      %v1645 = vpop.f32.mrb[0].mxu0
      %v1646 = vpop.f32.mrb[0].mxu0
      %v1647 = vadd.f32 0.0, %v1646
      %v1648 = vpop.f32.mrb[0].mxu0
      %1649 = vmatprep.mubr.bf16.mxu0 0
      %1650 = vmatmul.mubr.bf16.gmra.mrb[0].mxu0 %v1563
      %v1651 = vpop.f32.mrb[0].mxu0
      %v1652 = vadd.f32 0.0, %v1651
      %v1653 = vpop.f32.mrb[0].mxu0
      %v1654 = vpop.f32.mrb[0].mxu0
      %v1655 = vadd.f32 0.0, %v1654
      %v1656 = vpop.f32.mrb[0].mxu0
      %1657 = vmatprep.mubr.bf16.mxu0 0
      %1658 = vmatmul.mubr.bf16.gmra.mrb[0].mxu0 %v1564
      %v1659 = vpop.f32.mrb[0].mxu0
      %v1660 = vadd.f32 0.0, %v1659
      %v1661 = vpop.f32.mrb[0].mxu0
      %v1662 = vpop.f32.mrb[0].mxu0
      %v1663 = vadd.f32 0.0, %v1662
      %v1664 = vpop.f32.mrb[0].mxu0
      %1665 = vmatprep.mubr.bf16.mxu0 0
      %1666 = vmatmul.mubr.bf16.gmra.mrb[0].mxu0 %v1565
      %v1667 = vpop.f32.mrb[0].mxu0
      %v1668 = vadd.f32 0.0, %v1667
      %v1669 = vpop.f32.mrb[0].mxu0
      %v1670 = vpop.f32.mrb[0].mxu0
      %v1671 = vadd.f32 0.0, %v1670
      %v1672 = vpop.f32.mrb[0].mxu0
      %1673 = vmatprep.mubr.bf16.mxu0 0
      %1674 = vmatmul.mubr.bf16.gmra.mrb[0].mxu0 %v1566
      %v1675 = vpop.f32.mrb[0].mxu0
      %v1676 = vadd.f32 0.0, %v1675
      %v1677 = vpop.f32.mrb[0].mxu0
      %v1678 = vpop.f32.mrb[0].mxu0
      %v1679 = vadd.f32 0.0, %v1678
      %v1680 = vpop.f32.mrb[0].mxu0
      %1681 = vmatprep.mubr.bf16.mxu0 0
      %1682 = vmatmul.mubr.bf16.gmra.mrb[0].mxu0 %v1567
      %v1683 = vpop.f32.mrb[0].mxu0
      %v1684 = vadd.f32 0.0, %v1683
      %v1685 = vpop.f32.mrb[0].mxu0
      %v1686 = vpop.f32.mrb[0].mxu0
      %v1687 = vadd.f32 0.0, %v1686
      %v1688 = vpop.f32.mrb[0].mxu0
      %1689 = vmatprep.mubr.bf16.mxu0 0
      %1690 = vmatmul.mubr.bf16.gmra.mrb[0].mxu0 %v1568
      %v1691 = vpop.f32.mrb[0].mxu0
      %v1692 = vadd.f32 0.0, %v1691
      %v1693 = vpop.f32.mrb[0].mxu0
      %v1694 = vpop.f32.mrb[0].mxu0
      %v1695 = vadd.f32 0.0, %v1694
      %v1696 = vpop.f32.mrb[0].mxu0
      %1697 = vdwg.mxu0
      %v1698 = vpack.c.bf16 %v1639, %v1636
      %v1699 = vpack.c.bf16 %v1647, %v1644
      %v1700 = vpack.c.bf16 %v1655, %v1652
      %v1701 = vpack.c.bf16 %v1663, %v1660
      %v1702 = vpack.c.bf16 %v1671, %v1668
      %v1703 = vpack.c.bf16 %v1679, %v1676
      %v1704 = vpack.c.bf16 %v1687, %v1684
      %v1705 = vpack.c.bf16 %v1695, %v1692
      %v1706 = vld [vmem:[%s4 + $0x10] sm:$0xf]
      %v1707 = vld [vmem:[%s4 + $0x14] sm:$0xf]
      %v1708 = vld [vmem:[%s4 + $0x18] sm:$0xf]
      %v1709 = vld [vmem:[%s4 + $0x1c] sm:$0xf]
      %v1714 = vunpack.c.l.b16 %v1706
      %v1715 = vunpack.c.l.b16 %v1707
      %v1716 = vunpack.c.l.b16 %v1708
      %v1717 = vunpack.c.l.b16 %v1709
      %v1718 = vpack.c.b16 %v1715, %v1714
      %v1719 = vpack.c.b16 %v1717, %v1716
      %v1723 = vsel %vm749, %v1698, 0
      %v1726 = vsel %vm749, %v1699, 0
      %v1729 = vsel %vm749, %v1700, 0
      %v1732 = vsel %vm749, %v1701, 0
      %v1735 = vsel %vm749, %v1702, 0
      %v1738 = vsel %vm749, %v1703, 0
      %v1741 = vsel %vm749, %v1704, 0
      %v1744 = vsel %vm749, %v1705, 0
      %1746 = vmatprep.subr.bf16.mxu0 0
      %1747 = vmatpush1.bf16.msra.mxu0 %v1718
      %1748 = vmatprep.subr.bf16.mxu0 0
      %1749 = vmatpush1.bf16.msra.mxu0 %v1719
      %1750 = vmatprep.subr.bf16.mxu0 0
      %1751 = vmatpush1.bf16.msra.mxu0 0
      %1752 = vmatprep.subr.bf16.mxu0 0
      %1753 = vmatpush1.bf16.msra.mxu0 0
      %1754 = vmatprep.subr.bf16.mxu0 0
      %1755 = vmatpush1.bf16.msra.mxu0 0
      %1756 = vmatprep.subr.bf16.mxu0 0
      %1757 = vmatpush1.bf16.msra.mxu0 0
      %1758 = vmatprep.subr.bf16.mxu0 0
      %1759 = vmatpush1.bf16.msra.mxu0 0
      %1760 = vmatprep.subr.bf16.mxu0 0
      %1761 = vmatpush1.bf16.msra.mxu0 0
      %1762 = vmatprep.subr.bf16.mxu0 0
      %1763 = vmatpush1.bf16.msra.mxu0 0
      %1764 = vmatprep.subr.bf16.mxu0 0
      %1765 = vmatpush1.bf16.msra.mxu0 0
      %1766 = vmatprep.subr.bf16.mxu0 0
      %1767 = vmatpush1.bf16.msra.mxu0 0
      %1768 = vmatprep.subr.bf16.mxu0 0
      %1769 = vmatpush1.bf16.msra.mxu0 0
      %1770 = vmatprep.subr.bf16.mxu0 0
      %1771 = vmatpush1.bf16.msra.mxu0 0
      %1772 = vmatprep.subr.bf16.mxu0 0
      %1773 = vmatpush1.bf16.msra.mxu0 0
      %1774 = vmatprep.subr.bf16.mxu0 0
      %1775 = vmatpush1.bf16.msra.mxu0 0
      %1776 = vmatprep.subr.bf16.mxu0 0
      %1777 = vmatpush1.bf16.msra.mxu0 0
      %1778 = vmatprep.mubr.bf16.mxu0 0
      %1779 = vmatmul.mubr.bf16.gmra.mrb[0].mxu0 %v1723
      %v1780 = vpop.f32.mrb[0].mxu0
      %v1781 = vadd.f32 0.0, %v1780
      %v1782 = vpop.f32.mrb[0].mxu0
      %v1783 = vpop.f32.mrb[0].mxu0
      %v1784 = vadd.f32 0.0, %v1783
      %v1785 = vpop.f32.mrb[0].mxu0
      %1786 = vmatprep.mubr.bf16.mxu0 0
      %1787 = vmatmul.mubr.bf16.gmra.mrb[0].mxu0 %v1726
      %v1788 = vpop.f32.mrb[0].mxu0
      %v1789 = vadd.f32 0.0, %v1788
      %v1790 = vpop.f32.mrb[0].mxu0
      %v1791 = vpop.f32.mrb[0].mxu0
      %v1792 = vadd.f32 0.0, %v1791
      %v1793 = vpop.f32.mrb[0].mxu0
      %1794 = vmatprep.mubr.bf16.mxu0 0
      %1795 = vmatmul.mubr.bf16.gmra.mrb[0].mxu0 %v1729
      %v1796 = vpop.f32.mrb[0].mxu0
      %v1797 = vadd.f32 0.0, %v1796
      %v1798 = vpop.f32.mrb[0].mxu0
      %v1799 = vpop.f32.mrb[0].mxu0
      %v1800 = vadd.f32 0.0, %v1799
      %v1801 = vpop.f32.mrb[0].mxu0
      %1802 = vmatprep.mubr.bf16.mxu0 0
      %1803 = vmatmul.mubr.bf16.gmra.mrb[0].mxu0 %v1732
      %v1804 = vpop.f32.mrb[0].mxu0
      %v1805 = vadd.f32 0.0, %v1804
      %v1806 = vpop.f32.mrb[0].mxu0
      %v1807 = vpop.f32.mrb[0].mxu0
      %v1808 = vadd.f32 0.0, %v1807
      %v1809 = vpop.f32.mrb[0].mxu0
      %1810 = vmatprep.mubr.bf16.mxu0 0
      %1811 = vmatmul.mubr.bf16.gmra.mrb[0].mxu0 %v1735
      %v1812 = vpop.f32.mrb[0].mxu0
      %v1813 = vadd.f32 0.0, %v1812
      %v1814 = vpop.f32.mrb[0].mxu0
      %v1815 = vpop.f32.mrb[0].mxu0
      %v1816 = vadd.f32 0.0, %v1815
      %v1817 = vpop.f32.mrb[0].mxu0
      %1818 = vmatprep.mubr.bf16.mxu0 0
      %1819 = vmatmul.mubr.bf16.gmra.mrb[0].mxu0 %v1738
      %v1820 = vpop.f32.mrb[0].mxu0
      %v1821 = vadd.f32 0.0, %v1820
      %v1822 = vpop.f32.mrb[0].mxu0
      %v1823 = vpop.f32.mrb[0].mxu0
      %v1824 = vadd.f32 0.0, %v1823
      %v1825 = vpop.f32.mrb[0].mxu0
      %1826 = vmatprep.mubr.bf16.mxu0 0
      %1827 = vmatmul.mubr.bf16.gmra.mrb[0].mxu0 %v1741
      %v1828 = vpop.f32.mrb[0].mxu0
      %v1829 = vadd.f32 0.0, %v1828
      %v1830 = vpop.f32.mrb[0].mxu0
      %v1831 = vpop.f32.mrb[0].mxu0
      %v1832 = vadd.f32 0.0, %v1831
      %v1833 = vpop.f32.mrb[0].mxu0
      %1834 = vmatprep.mubr.bf16.mxu0 0
      %1835 = vmatmul.mubr.bf16.gmra.mrb[0].mxu0 %v1744
      %v1836 = vpop.f32.mrb[0].mxu0
      %v1837 = vadd.f32 0.0, %v1836
      %v1838 = vpop.f32.mrb[0].mxu0
      %v1839 = vpop.f32.mrb[0].mxu0
      %v1840 = vadd.f32 0.0, %v1839
      %v1841 = vpop.f32.mrb[0].mxu0
      %1842 = vdwg.mxu0
      %v1847 = vunpack.c.l.b16 %v1188
      %v1848 = vunpack.c.l.b16 %v1189
      %v1849 = vunpack.c.l.b16 %v1190
      %v1850 = vunpack.c.l.b16 %v1191
      %v1851 = vpack.c.b16 %v1848, %v1847
      %v1852 = vpack.c.b16 %v1850, %v1849
      %v1856 = vsel %vm749, %v1180, 0
      %v1859 = vsel %vm749, %v1181, 0
      %v1862 = vsel %vm749, %v1182, 0
      %v1865 = vsel %vm749, %v1183, 0
      %v1868 = vsel %vm749, %v1184, 0
      %v1871 = vsel %vm749, %v1185, 0
      %v1874 = vsel %vm749, %v1186, 0
      %v1877 = vsel %vm749, %v1187, 0
      %1879 = vmatprep.subr.bf16.mxu0 0
      %1880 = vmatpush1.bf16.msra.mxu0 %v1851
      %1881 = vmatprep.subr.bf16.mxu0 0
      %1882 = vmatpush1.bf16.msra.mxu0 %v1852
      %1883 = vmatprep.subr.bf16.mxu0 0
      %1884 = vmatpush1.bf16.msra.mxu0 0
      %1885 = vmatprep.subr.bf16.mxu0 0
      %1886 = vmatpush1.bf16.msra.mxu0 0
      %1887 = vmatprep.subr.bf16.mxu0 0
      %1888 = vmatpush1.bf16.msra.mxu0 0
      %1889 = vmatprep.subr.bf16.mxu0 0
      %1890 = vmatpush1.bf16.msra.mxu0 0
      %1891 = vmatprep.subr.bf16.mxu0 0
      %1892 = vmatpush1.bf16.msra.mxu0 0
      %1893 = vmatprep.subr.bf16.mxu0 0
      %1894 = vmatpush1.bf16.msra.mxu0 0
      %1895 = vmatprep.subr.bf16.mxu0 0
      %1896 = vmatpush1.bf16.msra.mxu0 0
      %1897 = vmatprep.subr.bf16.mxu0 0
      %1898 = vmatpush1.bf16.msra.mxu0 0
      %1899 = vmatprep.subr.bf16.mxu0 0
      %1900 = vmatpush1.bf16.msra.mxu0 0
      %1901 = vmatprep.subr.bf16.mxu0 0
      %1902 = vmatpush1.bf16.msra.mxu0 0
      %1903 = vmatprep.subr.bf16.mxu0 0
      %1904 = vmatpush1.bf16.msra.mxu0 0
      %1905 = vmatprep.subr.bf16.mxu0 0
      %1906 = vmatpush1.bf16.msra.mxu0 0
      %1907 = vmatprep.subr.bf16.mxu0 0
      %1908 = vmatpush1.bf16.msra.mxu0 0
      %1909 = vmatprep.subr.bf16.mxu0 0
      %1910 = vmatpush1.bf16.msra.mxu0 0
      %1911 = vmatprep.mubr.bf16.mxu0 0
      %1912 = vmatmul.mubr.bf16.gmra.mrb[0].mxu0 %v1856
      %v1913 = vpop.f32.mrb[0].mxu0
      %v1914 = vadd.f32 %v1781, %v1913
      %v1915 = vpop.f32.mrb[0].mxu0
      %v1916 = vpop.f32.mrb[0].mxu0
      %v1917 = vadd.f32 %v1784, %v1916
      %v1918 = vpop.f32.mrb[0].mxu0
      %1919 = vmatprep.mubr.bf16.mxu0 0
      %1920 = vmatmul.mubr.bf16.gmra.mrb[0].mxu0 %v1859
      %v1921 = vpop.f32.mrb[0].mxu0
      %v1922 = vadd.f32 %v1789, %v1921
      %v1923 = vpop.f32.mrb[0].mxu0
      %v1924 = vpop.f32.mrb[0].mxu0
      %v1925 = vadd.f32 %v1792, %v1924
      %v1926 = vpop.f32.mrb[0].mxu0
      %1927 = vmatprep.mubr.bf16.mxu0 0
      %1928 = vmatmul.mubr.bf16.gmra.mrb[0].mxu0 %v1862
      %v1929 = vpop.f32.mrb[0].mxu0
      %v1930 = vadd.f32 %v1797, %v1929
      %v1931 = vpop.f32.mrb[0].mxu0
      %v1932 = vpop.f32.mrb[0].mxu0
      %v1933 = vadd.f32 %v1800, %v1932
      %v1934 = vpop.f32.mrb[0].mxu0
      %1935 = vmatprep.mubr.bf16.mxu0 0
      %1936 = vmatmul.mubr.bf16.gmra.mrb[0].mxu0 %v1865
      %v1937 = vpop.f32.mrb[0].mxu0
      %v1938 = vadd.f32 %v1805, %v1937
      %v1939 = vpop.f32.mrb[0].mxu0
      %v1940 = vpop.f32.mrb[0].mxu0
      %v1941 = vadd.f32 %v1808, %v1940
      %v1942 = vpop.f32.mrb[0].mxu0
      %1943 = vmatprep.mubr.bf16.mxu0 0
      %1944 = vmatmul.mubr.bf16.gmra.mrb[0].mxu0 %v1868
      %v1945 = vpop.f32.mrb[0].mxu0
      %v1946 = vadd.f32 %v1813, %v1945
      %v1947 = vpop.f32.mrb[0].mxu0
      %v1948 = vpop.f32.mrb[0].mxu0
      %v1949 = vadd.f32 %v1816, %v1948
      %v1950 = vpop.f32.mrb[0].mxu0
      %1951 = vmatprep.mubr.bf16.mxu0 0
      %1952 = vmatmul.mubr.bf16.gmra.mrb[0].mxu0 %v1871
      %v1953 = vpop.f32.mrb[0].mxu0
      %v1954 = vadd.f32 %v1821, %v1953
      %v1955 = vpop.f32.mrb[0].mxu0
      %v1956 = vpop.f32.mrb[0].mxu0
      %v1957 = vadd.f32 %v1824, %v1956
      %v1958 = vpop.f32.mrb[0].mxu0
      %1959 = vmatprep.mubr.bf16.mxu0 0
      %1960 = vmatmul.mubr.bf16.gmra.mrb[0].mxu0 %v1874
      %v1961 = vpop.f32.mrb[0].mxu0
      %v1962 = vadd.f32 %v1829, %v1961
      %v1963 = vpop.f32.mrb[0].mxu0
      %v1964 = vpop.f32.mrb[0].mxu0
      %v1965 = vadd.f32 %v1832, %v1964
      %v1966 = vpop.f32.mrb[0].mxu0
      %1967 = vmatprep.mubr.bf16.mxu0 0
      %1968 = vmatmul.mubr.bf16.gmra.mrb[0].mxu0 %v1877
      %v1969 = vpop.f32.mrb[0].mxu0
      %v1970 = vadd.f32 %v1837, %v1969
      %v1971 = vpop.f32.mrb[0].mxu0
      %v1972 = vpop.f32.mrb[0].mxu0
      %v1973 = vadd.f32 %v1840, %v1972
      %v1974 = vpop.f32.mrb[0].mxu0
      %1975 = vdwg.mxu0
      %1976 = vrot.lane.b32.xlu0 %v725, 64
      %v1977 = vpop.permute.xlu0 %1976
      %1978 = vrot.lane.b32.xlu0 %v726, 64
      %v1979 = vpop.permute.xlu0 %1978
      %1980 = vrot.lane.b32.xlu0 %v727, 64
      %v1981 = vpop.permute.xlu0 %1980
      %1982 = vrot.lane.b32.xlu0 %v728, 64
      %v1983 = vpop.permute.xlu0 %1982
      %1984 = vrot.lane.b32.xlu0 %v729, 64
      %v1985 = vpop.permute.xlu0 %1984
      %1986 = vrot.lane.b32.xlu0 %v730, 64
      %v1987 = vpop.permute.xlu0 %1986
      %1988 = vrot.lane.b32.xlu0 %v731, 64
      %v1989 = vpop.permute.xlu0 %1988
      %1990 = vrot.lane.b32.xlu0 %v732, 64
      %v1991 = vpop.permute.xlu0 %1990
      %1992 = vrot.lane.b32.xlu0 %v733, 64
      %v1993 = vpop.permute.xlu0 %1992
      %1994 = vrot.lane.b32.xlu0 %v734, 64
      %v1995 = vpop.permute.xlu0 %1994
      %1996 = vrot.lane.b32.xlu0 %v735, 64
      %v1997 = vpop.permute.xlu0 %1996
      %1998 = vrot.lane.b32.xlu0 %v736, 64
      %v1999 = vpop.permute.xlu0 %1998
      %2000 = vrot.lane.b32.xlu0 %v737, 64
      %v2001 = vpop.permute.xlu0 %2000
      %2002 = vrot.lane.b32.xlu0 %v738, 64
      %v2003 = vpop.permute.xlu0 %2002
      %2004 = vrot.lane.b32.xlu0 %v739, 64
      %v2005 = vpop.permute.xlu0 %2004
      %2006 = vrot.lane.b32.xlu0 %v740, 64
      %v2007 = vpop.permute.xlu0 %2006
      %v2009 = vsel %vm749, %v1977, 0
      %v2012 = vsel %vm749, %v1979, 0
      %v2015 = vsel %vm749, %v1981, 0
      %v2018 = vsel %vm749, %v1983, 0
      %v2021 = vsel %vm749, %v1985, 0
      %v2024 = vsel %vm749, %v1987, 0
      %v2027 = vsel %vm749, %v1989, 0
      %v2030 = vsel %vm749, %v1991, 0
      %v2033 = vsel %vm749, %v1993, 0
      %v2036 = vsel %vm749, %v1995, 0
      %v2039 = vsel %vm749, %v1997, 0
      %v2042 = vsel %vm749, %v1999, 0
      %v2045 = vsel %vm749, %v2001, 0
      %v2048 = vsel %vm749, %v2003, 0
      %v2051 = vsel %vm749, %v2005, 0
      %v2054 = vsel %vm749, %v2007, 0
      %2056 = vmatprep.subr.bf16.mxu0 0
      %2057 = vmatpush1.bf16.xpose.msra.mxu0 %v2033
      %2058 = vmatprep.subr.bf16.mxu0 0
      %2059 = vmatpush1.bf16.xpose.msra.mxu0 %v2036
      %2060 = vmatprep.subr.bf16.mxu0 0
      %2061 = vmatpush1.bf16.xpose.msra.mxu0 %v2039
      %2062 = vmatprep.subr.bf16.mxu0 0
      %2063 = vmatpush1.bf16.xpose.msra.mxu0 %v2042
      %2064 = vmatprep.subr.bf16.mxu0 0
      %2065 = vmatpush1.bf16.xpose.msra.mxu0 %v2045
      %2066 = vmatprep.subr.bf16.mxu0 0
      %2067 = vmatpush1.bf16.xpose.msra.mxu0 %v2048
      %2068 = vmatprep.subr.bf16.mxu0 0
      %2069 = vmatpush1.bf16.xpose.msra.mxu0 %v2051
      %2070 = vmatprep.subr.bf16.mxu0 0
      %2071 = vmatpush1.bf16.xpose.msra.mxu0 %v2054
      %2072 = vmatprep.subr.bf16.mxu0 0
      %2073 = vmatpush1.bf16.xpose.msra.mxu0 0
      %2074 = vmatprep.subr.bf16.mxu0 0
      %2075 = vmatpush1.bf16.xpose.msra.mxu0 0
      %2076 = vmatprep.subr.bf16.mxu0 0
      %2077 = vmatpush1.bf16.xpose.msra.mxu0 0
      %2078 = vmatprep.subr.bf16.mxu0 0
      %2079 = vmatpush1.bf16.xpose.msra.mxu0 0
      %2080 = vmatprep.subr.bf16.mxu0 0
      %2081 = vmatpush1.bf16.xpose.msra.mxu0 0
      %2082 = vmatprep.subr.bf16.mxu0 0
      %2083 = vmatpush1.bf16.xpose.msra.mxu0 0
      %2084 = vmatprep.subr.bf16.mxu0 0
      %2085 = vmatpush1.bf16.xpose.msra.mxu0 0
      %2086 = vmatprep.subr.bf16.mxu0 0
      %2087 = vmatpush1.bf16.xpose.msra.mxu0 0
      %2088 = vmatprep.mubr.bf16.mxu0 0
      %2089 = vmatmul.mubr.bf16.gmra.mrb[0].mxu0 %v2009
      %v2090 = vpop.f32.mrb[0].mxu0
      %v2091 = vadd.f32 0.0, %v2090
      %v2092 = vpop.f32.mrb[0].mxu0
      %v2093 = vpop.f32.mrb[0].mxu0
      %v2094 = vadd.f32 0.0, %v2093
      %v2095 = vpop.f32.mrb[0].mxu0
      %2096 = vmatprep.mubr.bf16.mxu0 0
      %2097 = vmatmul.mubr.bf16.gmra.mrb[0].mxu0 %v2012
      %v2098 = vpop.f32.mrb[0].mxu0
      %v2099 = vadd.f32 0.0, %v2098
      %v2100 = vpop.f32.mrb[0].mxu0
      %v2101 = vpop.f32.mrb[0].mxu0
      %v2102 = vadd.f32 0.0, %v2101
      %v2103 = vpop.f32.mrb[0].mxu0
      %2104 = vmatprep.mubr.bf16.mxu0 0
      %2105 = vmatmul.mubr.bf16.gmra.mrb[0].mxu0 %v2015
      %v2106 = vpop.f32.mrb[0].mxu0
      %v2107 = vadd.f32 0.0, %v2106
      %v2108 = vpop.f32.mrb[0].mxu0
      %v2109 = vpop.f32.mrb[0].mxu0
      %v2110 = vadd.f32 0.0, %v2109
      %v2111 = vpop.f32.mrb[0].mxu0
      %2112 = vmatprep.mubr.bf16.mxu0 0
      %2113 = vmatmul.mubr.bf16.gmra.mrb[0].mxu0 %v2018
      %v2114 = vpop.f32.mrb[0].mxu0
      %v2115 = vadd.f32 0.0, %v2114
      %v2116 = vpop.f32.mrb[0].mxu0
      %v2117 = vpop.f32.mrb[0].mxu0
      %v2118 = vadd.f32 0.0, %v2117
      %v2119 = vpop.f32.mrb[0].mxu0
      %2120 = vmatprep.mubr.bf16.mxu0 0
      %2121 = vmatmul.mubr.bf16.gmra.mrb[0].mxu0 %v2021
      %v2122 = vpop.f32.mrb[0].mxu0
      %v2123 = vadd.f32 0.0, %v2122
      %v2124 = vpop.f32.mrb[0].mxu0
      %v2125 = vpop.f32.mrb[0].mxu0
      %v2126 = vadd.f32 0.0, %v2125
      %v2127 = vpop.f32.mrb[0].mxu0
      %2128 = vmatprep.mubr.bf16.mxu0 0
      %2129 = vmatmul.mubr.bf16.gmra.mrb[0].mxu0 %v2024
      %v2130 = vpop.f32.mrb[0].mxu0
      %v2131 = vadd.f32 0.0, %v2130
      %v2132 = vpop.f32.mrb[0].mxu0
      %v2133 = vpop.f32.mrb[0].mxu0
      %v2134 = vadd.f32 0.0, %v2133
      %v2135 = vpop.f32.mrb[0].mxu0
      %2136 = vmatprep.mubr.bf16.mxu0 0
      %2137 = vmatmul.mubr.bf16.gmra.mrb[0].mxu0 %v2027
      %v2138 = vpop.f32.mrb[0].mxu0
      %v2139 = vadd.f32 0.0, %v2138
      %v2140 = vpop.f32.mrb[0].mxu0
      %v2141 = vpop.f32.mrb[0].mxu0
      %v2142 = vadd.f32 0.0, %v2141
      %v2143 = vpop.f32.mrb[0].mxu0
      %2144 = vmatprep.mubr.bf16.mxu0 0
      %2145 = vmatmul.mubr.bf16.gmra.mrb[0].mxu0 %v2030
      %v2146 = vpop.f32.mrb[0].mxu0
      %v2147 = vadd.f32 0.0, %v2146
      %v2148 = vpop.f32.mrb[0].mxu0
      %v2149 = vpop.f32.mrb[0].mxu0
      %v2150 = vadd.f32 0.0, %v2149
      %v2151 = vpop.f32.mrb[0].mxu0
      %2152 = vdwg.mxu0
      %v2153 = vmul.f32 %v2091, 0.17677669
      %v2154 = vmul.f32 %v2094, 0.17677669
      %v2155 = vmul.f32 %v2099, 0.17677669
      %v2156 = vmul.f32 %v2102, 0.17677669
      %v2157 = vmul.f32 %v2107, 0.17677669
      %v2158 = vmul.f32 %v2110, 0.17677669
      %v2159 = vmul.f32 %v2115, 0.17677669
      %v2160 = vmul.f32 %v2118, 0.17677669
      %v2161 = vmul.f32 %v2123, 0.17677669
      %v2162 = vmul.f32 %v2126, 0.17677669
      %v2163 = vmul.f32 %v2131, 0.17677669
      %v2164 = vmul.f32 %v2134, 0.17677669
      %v2165 = vmul.f32 %v2139, 0.17677669
      %v2166 = vmul.f32 %v2142, 0.17677669
      %v2167 = vmul.f32 %v2147, 0.17677669
      %v2168 = vmul.f32 %v2150, 0.17677669
      %v2169 = vadd.f32 %v2153, %v914
      %v2170 = vadd.f32 %v2154, %v914
      %v2171 = vadd.f32 %v2155, %v914
      %v2172 = vadd.f32 %v2156, %v914
      %v2173 = vadd.f32 %v2157, %v914
      %v2174 = vadd.f32 %v2158, %v914
      %v2175 = vadd.f32 %v2159, %v914
      %v2176 = vadd.f32 %v2160, %v914
      %v2177 = vadd.f32 %v2161, %v914
      %v2178 = vadd.f32 %v2162, %v914
      %v2179 = vadd.f32 %v2163, %v914
      %v2180 = vadd.f32 %v2164, %v914
      %v2181 = vadd.f32 %v2165, %v914
      %v2182 = vadd.f32 %v2166, %v914
      %v2183 = vadd.f32 %v2167, %v914
      %v2184 = vadd.f32 %v2168, %v914
      %2185 = vmax.xlane.f32.xlu0 %v2169
      %v2186 = vpop.xlane.xlu0 %2185
      %2187 = vmax.xlane.f32.xlu0 %v2170
      %v2188 = vpop.xlane.xlu0 %2187
      %2189 = vmax.xlane.f32.xlu0 %v2171
      %v2190 = vpop.xlane.xlu0 %2189
      %2191 = vmax.xlane.f32.xlu0 %v2172
      %v2192 = vpop.xlane.xlu0 %2191
      %2193 = vmax.xlane.f32.xlu0 %v2173
      %v2194 = vpop.xlane.xlu0 %2193
      %2195 = vmax.xlane.f32.xlu0 %v2174
      %v2196 = vpop.xlane.xlu0 %2195
      %2197 = vmax.xlane.f32.xlu0 %v2175
      %v2198 = vpop.xlane.xlu0 %2197
      %2199 = vmax.xlane.f32.xlu0 %v2176
      %v2200 = vpop.xlane.xlu0 %2199
      %2201 = vmax.xlane.f32.xlu0 %v2177
      %v2202 = vpop.xlane.xlu0 %2201
      %2203 = vmax.xlane.f32.xlu0 %v2178
      %v2204 = vpop.xlane.xlu0 %2203
      %2205 = vmax.xlane.f32.xlu0 %v2179
      %v2206 = vpop.xlane.xlu0 %2205
      %2207 = vmax.xlane.f32.xlu0 %v2180
      %v2208 = vpop.xlane.xlu0 %2207
      %2209 = vmax.xlane.f32.xlu0 %v2181
      %v2210 = vpop.xlane.xlu0 %2209
      %2211 = vmax.xlane.f32.xlu0 %v2182
      %v2212 = vpop.xlane.xlu0 %2211
      %2213 = vmax.xlane.f32.xlu0 %v2183
      %v2214 = vpop.xlane.xlu0 %2213
      %2215 = vmax.xlane.f32.xlu0 %v2184
      %v2216 = vpop.xlane.xlu0 %2215
      %v2217 = vsub.f32 %v2169, %v2186
      %v2218 = vsub.f32 %v2170, %v2188
      %v2219 = vsub.f32 %v2171, %v2190
      %v2220 = vsub.f32 %v2172, %v2192
      %v2221 = vsub.f32 %v2173, %v2194
      %v2222 = vsub.f32 %v2174, %v2196
      %v2223 = vsub.f32 %v2175, %v2198
      %v2224 = vsub.f32 %v2176, %v2200
      %v2225 = vsub.f32 %v2177, %v2202
      %v2226 = vsub.f32 %v2178, %v2204
      %v2227 = vsub.f32 %v2179, %v2206
      %v2228 = vsub.f32 %v2180, %v2208
      %v2229 = vsub.f32 %v2181, %v2210
      %v2230 = vsub.f32 %v2182, %v2212
      %v2231 = vsub.f32 %v2183, %v2214
      %v2232 = vsub.f32 %v2184, %v2216
      %v2233 = vmul.f32 %v2217, 1.442695
      %v2234 = vpow.pop %v2233
      %v2235 = vmul.f32 %v2218, 1.442695
      %v2236 = vpow.pop %v2235
      %v2237 = vmul.f32 %v2219, 1.442695
      %v2238 = vpow.pop %v2237
      %v2239 = vmul.f32 %v2220, 1.442695
      %v2240 = vpow.pop %v2239
      %v2241 = vmul.f32 %v2221, 1.442695
      %v2242 = vpow.pop %v2241
      %v2243 = vmul.f32 %v2222, 1.442695
      %v2244 = vpow.pop %v2243
      %v2245 = vmul.f32 %v2223, 1.442695
      %v2246 = vpow.pop %v2245
      %v2247 = vmul.f32 %v2224, 1.442695
      %v2248 = vpow.pop %v2247
      %v2249 = vmul.f32 %v2225, 1.442695
      %v2250 = vpow.pop %v2249
      %v2251 = vmul.f32 %v2226, 1.442695
      %v2252 = vpow.pop %v2251
      %v2253 = vmul.f32 %v2227, 1.442695
      %v2254 = vpow.pop %v2253
      %v2255 = vmul.f32 %v2228, 1.442695
      %v2256 = vpow.pop %v2255
      %v2257 = vmul.f32 %v2229, 1.442695
      %v2258 = vpow.pop %v2257
      %v2259 = vmul.f32 %v2230, 1.442695
      %v2260 = vpow.pop %v2259
      %v2261 = vmul.f32 %v2231, 1.442695
      %v2262 = vpow.pop %v2261
      %v2263 = vmul.f32 %v2232, 1.442695
      %v2264 = vpow.pop %v2263
      %2265 = vadd.xlane.f32.xlu0 %v2234
      %v2266 = vpop.xlane.xlu0 %2265
      %2267 = vadd.xlane.f32.xlu0 %v2236
      %v2268 = vpop.xlane.xlu0 %2267
      %2269 = vadd.xlane.f32.xlu0 %v2238
      %v2270 = vpop.xlane.xlu0 %2269
      %2271 = vadd.xlane.f32.xlu0 %v2240
      %v2272 = vpop.xlane.xlu0 %2271
      %2273 = vadd.xlane.f32.xlu0 %v2242
      %v2274 = vpop.xlane.xlu0 %2273
      %2275 = vadd.xlane.f32.xlu0 %v2244
      %v2276 = vpop.xlane.xlu0 %2275
      %2277 = vadd.xlane.f32.xlu0 %v2246
      %v2278 = vpop.xlane.xlu0 %2277
      %2279 = vadd.xlane.f32.xlu0 %v2248
      %v2280 = vpop.xlane.xlu0 %2279
      %2281 = vadd.xlane.f32.xlu0 %v2250
      %v2282 = vpop.xlane.xlu0 %2281
      %2283 = vadd.xlane.f32.xlu0 %v2252
      %v2284 = vpop.xlane.xlu0 %2283
      %2285 = vadd.xlane.f32.xlu0 %v2254
      %v2286 = vpop.xlane.xlu0 %2285
      %2287 = vadd.xlane.f32.xlu0 %v2256
      %v2288 = vpop.xlane.xlu0 %2287
      %2289 = vadd.xlane.f32.xlu0 %v2258
      %v2290 = vpop.xlane.xlu0 %2289
      %2291 = vadd.xlane.f32.xlu0 %v2260
      %v2292 = vpop.xlane.xlu0 %2291
      %2293 = vadd.xlane.f32.xlu0 %v2262
      %v2294 = vpop.xlane.xlu0 %2293
      %2295 = vadd.xlane.f32.xlu0 %v2264
      %v2296 = vpop.xlane.xlu0 %2295
      %v2297 = vrcp.pop %v2266
      %v2298 = vrcp.pop %v2268
      %v2299 = vrcp.pop %v2270
      %v2300 = vrcp.pop %v2272
      %v2301 = vrcp.pop %v2274
      %v2302 = vrcp.pop %v2276
      %v2303 = vrcp.pop %v2278
      %v2304 = vrcp.pop %v2280
      %v2305 = vrcp.pop %v2282
      %v2306 = vrcp.pop %v2284
      %v2307 = vrcp.pop %v2286
      %v2308 = vrcp.pop %v2288
      %v2309 = vrcp.pop %v2290
      %v2310 = vrcp.pop %v2292
      %v2311 = vrcp.pop %v2294
      %v2312 = vrcp.pop %v2296
      %v2313 = vmul.f32 %v2234, %v2297
      %v2314 = vmul.f32 %v2236, %v2298
      %v2315 = vmul.f32 %v2238, %v2299
      %v2316 = vmul.f32 %v2240, %v2300
      %v2317 = vmul.f32 %v2242, %v2301
      %v2318 = vmul.f32 %v2244, %v2302
      %v2319 = vmul.f32 %v2246, %v2303
      %v2320 = vmul.f32 %v2248, %v2304
      %v2321 = vmul.f32 %v2250, %v2305
      %v2322 = vmul.f32 %v2252, %v2306
      %v2323 = vmul.f32 %v2254, %v2307
      %v2324 = vmul.f32 %v2256, %v2308
      %v2325 = vmul.f32 %v2258, %v2309
      %v2326 = vmul.f32 %v2260, %v2310
      %v2327 = vmul.f32 %v2262, %v2311
      %v2328 = vmul.f32 %v2264, %v2312
      %v2329 = vpack.c.bf16 %v2314, %v2313
      %v2330 = vpack.c.bf16 %v2316, %v2315
      %v2331 = vpack.c.bf16 %v2318, %v2317
      %v2332 = vpack.c.bf16 %v2320, %v2319
      %v2333 = vpack.c.bf16 %v2322, %v2321
      %v2334 = vpack.c.bf16 %v2324, %v2323
      %v2335 = vpack.c.bf16 %v2326, %v2325
      %v2336 = vpack.c.bf16 %v2328, %v2327
      %2337 = vrot.lane.b32.xlu0 %v741, 64
      %v2338 = vpop.permute.xlu0 %2337
      %2339 = vrot.lane.b32.xlu0 %v742, 64
      %v2340 = vpop.permute.xlu0 %2339
      %2341 = vrot.lane.b32.xlu0 %v743, 64
      %v2342 = vpop.permute.xlu0 %2341
      %2343 = vrot.lane.b32.xlu0 %v744, 64
      %v2344 = vpop.permute.xlu0 %2343
      %2345 = vrot.lane.b32.xlu0 %v745, 64
      %v2346 = vpop.permute.xlu0 %2345
      %2347 = vrot.lane.b32.xlu0 %v746, 64
      %v2348 = vpop.permute.xlu0 %2347
      %2349 = vrot.lane.b32.xlu0 %v747, 64
      %v2350 = vpop.permute.xlu0 %2349
      %2351 = vrot.lane.b32.xlu0 %v748, 64
      %v2352 = vpop.permute.xlu0 %2351
      %2361 = vmatprep.subr.bf16.mxu0 0
      %2362 = vmatpush1.bf16.msra.mxu0 %v2338
      %2363 = vmatprep.subr.bf16.mxu0 0
      %2364 = vmatpush1.bf16.msra.mxu0 %v2340
      %2365 = vmatprep.subr.bf16.mxu0 0
      %2366 = vmatpush1.bf16.msra.mxu0 %v2342
      %2367 = vmatprep.subr.bf16.mxu0 0
      %2368 = vmatpush1.bf16.msra.mxu0 %v2344
      %2369 = vmatprep.subr.bf16.mxu0 0
      %2370 = vmatpush1.bf16.msra.mxu0 %v2346
      %2371 = vmatprep.subr.bf16.mxu0 0
      %2372 = vmatpush1.bf16.msra.mxu0 %v2348
      %2373 = vmatprep.subr.bf16.mxu0 0
      %2374 = vmatpush1.bf16.msra.mxu0 %v2350
      %2375 = vmatprep.subr.bf16.mxu0 0
      %2376 = vmatpush1.bf16.msra.mxu0 %v2352
      %2377 = vmatprep.subr.bf16.mxu0 0
      %2378 = vmatpush1.bf16.msra.mxu0 0
      %2379 = vmatprep.subr.bf16.mxu0 0
      %2380 = vmatpush1.bf16.msra.mxu0 0
      %2381 = vmatprep.subr.bf16.mxu0 0
      %2382 = vmatpush1.bf16.msra.mxu0 0
      %2383 = vmatprep.subr.bf16.mxu0 0
      %2384 = vmatpush1.bf16.msra.mxu0 0
      %2385 = vmatprep.subr.bf16.mxu0 0
      %2386 = vmatpush1.bf16.msra.mxu0 0
      %2387 = vmatprep.subr.bf16.mxu0 0
      %2388 = vmatpush1.bf16.msra.mxu0 0
      %2389 = vmatprep.subr.bf16.mxu0 0
      %2390 = vmatpush1.bf16.msra.mxu0 0
      %2391 = vmatprep.subr.bf16.mxu0 0
      %2392 = vmatpush1.bf16.msra.mxu0 0
      %2393 = vmatprep.mubr.bf16.mxu0 0
      %2394 = vmatmul.mubr.bf16.gmra.mrb[0].mxu0 %v2329
      %v2395 = vpop.f32.mrb[0].mxu0
      %v2396 = vadd.f32 0.0, %v2395
      %v2397 = vpop.f32.mrb[0].mxu0
      %v2398 = vpop.f32.mrb[0].mxu0
      %v2399 = vadd.f32 0.0, %v2398
      %v2400 = vpop.f32.mrb[0].mxu0
      %2401 = vmatprep.mubr.bf16.mxu0 0
      %2402 = vmatmul.mubr.bf16.gmra.mrb[0].mxu0 %v2330
      %v2403 = vpop.f32.mrb[0].mxu0
      %v2404 = vadd.f32 0.0, %v2403
      %v2405 = vpop.f32.mrb[0].mxu0
      %v2406 = vpop.f32.mrb[0].mxu0
      %v2407 = vadd.f32 0.0, %v2406
      %v2408 = vpop.f32.mrb[0].mxu0
      %2409 = vmatprep.mubr.bf16.mxu0 0
      %2410 = vmatmul.mubr.bf16.gmra.mrb[0].mxu0 %v2331
      %v2411 = vpop.f32.mrb[0].mxu0
      %v2412 = vadd.f32 0.0, %v2411
      %v2413 = vpop.f32.mrb[0].mxu0
      %v2414 = vpop.f32.mrb[0].mxu0
      %v2415 = vadd.f32 0.0, %v2414
      %v2416 = vpop.f32.mrb[0].mxu0
      %2417 = vmatprep.mubr.bf16.mxu0 0
      %2418 = vmatmul.mubr.bf16.gmra.mrb[0].mxu0 %v2332
      %v2419 = vpop.f32.mrb[0].mxu0
      %v2420 = vadd.f32 0.0, %v2419
      %v2421 = vpop.f32.mrb[0].mxu0
      %v2422 = vpop.f32.mrb[0].mxu0
      %v2423 = vadd.f32 0.0, %v2422
      %v2424 = vpop.f32.mrb[0].mxu0
      %2425 = vmatprep.mubr.bf16.mxu0 0
      %2426 = vmatmul.mubr.bf16.gmra.mrb[0].mxu0 %v2333
      %v2427 = vpop.f32.mrb[0].mxu0
      %v2428 = vadd.f32 0.0, %v2427
      %v2429 = vpop.f32.mrb[0].mxu0
      %v2430 = vpop.f32.mrb[0].mxu0
      %v2431 = vadd.f32 0.0, %v2430
      %v2432 = vpop.f32.mrb[0].mxu0
      %2433 = vmatprep.mubr.bf16.mxu0 0
      %2434 = vmatmul.mubr.bf16.gmra.mrb[0].mxu0 %v2334
      %v2435 = vpop.f32.mrb[0].mxu0
      %v2436 = vadd.f32 0.0, %v2435
      %v2437 = vpop.f32.mrb[0].mxu0
      %v2438 = vpop.f32.mrb[0].mxu0
      %v2439 = vadd.f32 0.0, %v2438
      %v2440 = vpop.f32.mrb[0].mxu0
      %2441 = vmatprep.mubr.bf16.mxu0 0
      %2442 = vmatmul.mubr.bf16.gmra.mrb[0].mxu0 %v2335
      %v2443 = vpop.f32.mrb[0].mxu0
      %v2444 = vadd.f32 0.0, %v2443
      %v2445 = vpop.f32.mrb[0].mxu0
      %v2446 = vpop.f32.mrb[0].mxu0
      %v2447 = vadd.f32 0.0, %v2446
      %v2448 = vpop.f32.mrb[0].mxu0
      %2449 = vmatprep.mubr.bf16.mxu0 0
      %2450 = vmatmul.mubr.bf16.gmra.mrb[0].mxu0 %v2336
      %v2451 = vpop.f32.mrb[0].mxu0
      %v2452 = vadd.f32 0.0, %v2451
      %v2453 = vpop.f32.mrb[0].mxu0
      %v2454 = vpop.f32.mrb[0].mxu0
      %v2455 = vadd.f32 0.0, %v2454
      %v2456 = vpop.f32.mrb[0].mxu0
      %2457 = vdwg.mxu0
      %v2458 = vpack.c.bf16 %v2399, %v2396
      %v2459 = vpack.c.bf16 %v2407, %v2404
      %v2460 = vpack.c.bf16 %v2415, %v2412
      %v2461 = vpack.c.bf16 %v2423, %v2420
      %v2462 = vpack.c.bf16 %v2431, %v2428
      %v2463 = vpack.c.bf16 %v2439, %v2436
      %v2464 = vpack.c.bf16 %v2447, %v2444
      %v2465 = vpack.c.bf16 %v2455, %v2452
      %v2466 = vld [vmem:[%s4 + $0x20] sm:$0xf]
      %v2467 = vld [vmem:[%s4 + $0x24] sm:$0xf]
      %v2468 = vld [vmem:[%s4 + $0x28] sm:$0xf]
      %v2469 = vld [vmem:[%s4 + $0x2c] sm:$0xf]
      %v2474 = vunpack.c.l.b16 %v2466
      %v2475 = vunpack.c.l.b16 %v2467
      %v2476 = vunpack.c.l.b16 %v2468
      %v2477 = vunpack.c.l.b16 %v2469
      %v2478 = vpack.c.b16 %v2475, %v2474
      %v2479 = vpack.c.b16 %v2477, %v2476
      %v2483 = vsel %vm749, %v2458, 0
      %v2486 = vsel %vm749, %v2459, 0
      %v2489 = vsel %vm749, %v2460, 0
      %v2492 = vsel %vm749, %v2461, 0
      %v2495 = vsel %vm749, %v2462, 0
      %v2498 = vsel %vm749, %v2463, 0
      %v2501 = vsel %vm749, %v2464, 0
      %v2504 = vsel %vm749, %v2465, 0
      %2506 = vmatprep.subr.bf16.mxu0 0
      %2507 = vmatpush1.bf16.msra.mxu0 %v2478
      %2508 = vmatprep.subr.bf16.mxu0 0
      %2509 = vmatpush1.bf16.msra.mxu0 %v2479
      %2510 = vmatprep.subr.bf16.mxu0 0
      %2511 = vmatpush1.bf16.msra.mxu0 0
      %2512 = vmatprep.subr.bf16.mxu0 0
      %2513 = vmatpush1.bf16.msra.mxu0 0
      %2514 = vmatprep.subr.bf16.mxu0 0
      %2515 = vmatpush1.bf16.msra.mxu0 0
      %2516 = vmatprep.subr.bf16.mxu0 0
      %2517 = vmatpush1.bf16.msra.mxu0 0
      %2518 = vmatprep.subr.bf16.mxu0 0
      %2519 = vmatpush1.bf16.msra.mxu0 0
      %2520 = vmatprep.subr.bf16.mxu0 0
      %2521 = vmatpush1.bf16.msra.mxu0 0
      %2522 = vmatprep.subr.bf16.mxu0 0
      %2523 = vmatpush1.bf16.msra.mxu0 0
      %2524 = vmatprep.subr.bf16.mxu0 0
      %2525 = vmatpush1.bf16.msra.mxu0 0
      %2526 = vmatprep.subr.bf16.mxu0 0
      %2527 = vmatpush1.bf16.msra.mxu0 0
      %2528 = vmatprep.subr.bf16.mxu0 0
      %2529 = vmatpush1.bf16.msra.mxu0 0
      %2530 = vmatprep.subr.bf16.mxu0 0
      %2531 = vmatpush1.bf16.msra.mxu0 0
      %2532 = vmatprep.subr.bf16.mxu0 0
      %2533 = vmatpush1.bf16.msra.mxu0 0
      %2534 = vmatprep.subr.bf16.mxu0 0
      %2535 = vmatpush1.bf16.msra.mxu0 0
      %2536 = vmatprep.subr.bf16.mxu0 0
      %2537 = vmatpush1.bf16.msra.mxu0 0
      %2538 = vmatprep.mubr.bf16.mxu0 0
      %2539 = vmatmul.mubr.bf16.gmra.mrb[0].mxu0 %v2483
      %v2540 = vpop.f32.mrb[0].mxu0
      %v2541 = vadd.f32 0.0, %v2540
      %v2542 = vpop.f32.mrb[0].mxu0
      %v2543 = vpop.f32.mrb[0].mxu0
      %v2544 = vadd.f32 0.0, %v2543
      %v2545 = vpop.f32.mrb[0].mxu0
      %2546 = vmatprep.mubr.bf16.mxu0 0
      %2547 = vmatmul.mubr.bf16.gmra.mrb[0].mxu0 %v2486
      %v2548 = vpop.f32.mrb[0].mxu0
      %v2549 = vadd.f32 0.0, %v2548
      %v2550 = vpop.f32.mrb[0].mxu0
      %v2551 = vpop.f32.mrb[0].mxu0
      %v2552 = vadd.f32 0.0, %v2551
      %v2553 = vpop.f32.mrb[0].mxu0
      %2554 = vmatprep.mubr.bf16.mxu0 0
      %2555 = vmatmul.mubr.bf16.gmra.mrb[0].mxu0 %v2489
      %v2556 = vpop.f32.mrb[0].mxu0
      %v2557 = vadd.f32 0.0, %v2556
      %v2558 = vpop.f32.mrb[0].mxu0
      %v2559 = vpop.f32.mrb[0].mxu0
      %v2560 = vadd.f32 0.0, %v2559
      %v2561 = vpop.f32.mrb[0].mxu0
      %2562 = vmatprep.mubr.bf16.mxu0 0
      %2563 = vmatmul.mubr.bf16.gmra.mrb[0].mxu0 %v2492
      %v2564 = vpop.f32.mrb[0].mxu0
      %v2565 = vadd.f32 0.0, %v2564
      %v2566 = vpop.f32.mrb[0].mxu0
      %v2567 = vpop.f32.mrb[0].mxu0
      %v2568 = vadd.f32 0.0, %v2567
      %v2569 = vpop.f32.mrb[0].mxu0
      %2570 = vmatprep.mubr.bf16.mxu0 0
      %2571 = vmatmul.mubr.bf16.gmra.mrb[0].mxu0 %v2495
      %v2572 = vpop.f32.mrb[0].mxu0
      %v2573 = vadd.f32 0.0, %v2572
      %v2574 = vpop.f32.mrb[0].mxu0
      %v2575 = vpop.f32.mrb[0].mxu0
      %v2576 = vadd.f32 0.0, %v2575
      %v2577 = vpop.f32.mrb[0].mxu0
      %2578 = vmatprep.mubr.bf16.mxu0 0
      %2579 = vmatmul.mubr.bf16.gmra.mrb[0].mxu0 %v2498
      %v2580 = vpop.f32.mrb[0].mxu0
      %v2581 = vadd.f32 0.0, %v2580
      %v2582 = vpop.f32.mrb[0].mxu0
      %v2583 = vpop.f32.mrb[0].mxu0
      %v2584 = vadd.f32 0.0, %v2583
      %v2585 = vpop.f32.mrb[0].mxu0
      %2586 = vmatprep.mubr.bf16.mxu0 0
      %2587 = vmatmul.mubr.bf16.gmra.mrb[0].mxu0 %v2501
      %v2588 = vpop.f32.mrb[0].mxu0
      %v2589 = vadd.f32 0.0, %v2588
      %v2590 = vpop.f32.mrb[0].mxu0
      %v2591 = vpop.f32.mrb[0].mxu0
      %v2592 = vadd.f32 0.0, %v2591
      %v2593 = vpop.f32.mrb[0].mxu0
      %2594 = vmatprep.mubr.bf16.mxu0 0
      %2595 = vmatmul.mubr.bf16.gmra.mrb[0].mxu0 %v2504
      %v2596 = vpop.f32.mrb[0].mxu0
      %v2597 = vadd.f32 0.0, %v2596
      %v2598 = vpop.f32.mrb[0].mxu0
      %v2599 = vpop.f32.mrb[0].mxu0
      %v2600 = vadd.f32 0.0, %v2599
      %v2601 = vpop.f32.mrb[0].mxu0
      %2602 = vdwg.mxu0
      %v2603 = vadd.f32 %v1914, %v2541
      %v2604 = vadd.f32 %v1917, %v2544
      %v2605 = vadd.f32 %v1922, %v2549
      %v2606 = vadd.f32 %v1925, %v2552
      %v2607 = vadd.f32 %v1930, %v2557
      %v2608 = vadd.f32 %v1933, %v2560
      %v2609 = vadd.f32 %v1938, %v2565
      %v2610 = vadd.f32 %v1941, %v2568
      %v2611 = vadd.f32 %v1946, %v2573
      %v2612 = vadd.f32 %v1949, %v2576
      %v2613 = vadd.f32 %v1954, %v2581
      %v2614 = vadd.f32 %v1957, %v2584
      %v2615 = vadd.f32 %v1962, %v2589
      %v2616 = vadd.f32 %v1965, %v2592
      %v2617 = vadd.f32 %v1970, %v2597
      %v2618 = vadd.f32 %v1973, %v2600
      %2619 = vrot.lane.b32.xlu0 %v725, 32
      %v2620 = vpop.permute.xlu0 %2619
      %2621 = vrot.lane.b32.xlu0 %v726, 32
      %v2622 = vpop.permute.xlu0 %2621
      %2623 = vrot.lane.b32.xlu0 %v727, 32
      %v2624 = vpop.permute.xlu0 %2623
      %2625 = vrot.lane.b32.xlu0 %v728, 32
      %v2626 = vpop.permute.xlu0 %2625
      %2627 = vrot.lane.b32.xlu0 %v729, 32
      %v2628 = vpop.permute.xlu0 %2627
      %2629 = vrot.lane.b32.xlu0 %v730, 32
      %v2630 = vpop.permute.xlu0 %2629
      %2631 = vrot.lane.b32.xlu0 %v731, 32
      %v2632 = vpop.permute.xlu0 %2631
      %2633 = vrot.lane.b32.xlu0 %v732, 32
      %v2634 = vpop.permute.xlu0 %2633
      %2635 = vrot.lane.b32.xlu0 %v733, 32
      %v2636 = vpop.permute.xlu0 %2635
      %2637 = vrot.lane.b32.xlu0 %v734, 32
      %v2638 = vpop.permute.xlu0 %2637
      %2639 = vrot.lane.b32.xlu0 %v735, 32
      %v2640 = vpop.permute.xlu0 %2639
      %2641 = vrot.lane.b32.xlu0 %v736, 32
      %v2642 = vpop.permute.xlu0 %2641
      %2643 = vrot.lane.b32.xlu0 %v737, 32
      %v2644 = vpop.permute.xlu0 %2643
      %2645 = vrot.lane.b32.xlu0 %v738, 32
      %v2646 = vpop.permute.xlu0 %2645
      %2647 = vrot.lane.b32.xlu0 %v739, 32
      %v2648 = vpop.permute.xlu0 %2647
      %2649 = vrot.lane.b32.xlu0 %v740, 32
      %v2650 = vpop.permute.xlu0 %2649
      %v2652 = vsel %vm749, %v2620, 0
      %v2655 = vsel %vm749, %v2622, 0
      %v2658 = vsel %vm749, %v2624, 0
      %v2661 = vsel %vm749, %v2626, 0
      %v2664 = vsel %vm749, %v2628, 0
      %v2667 = vsel %vm749, %v2630, 0
      %v2670 = vsel %vm749, %v2632, 0
      %v2673 = vsel %vm749, %v2634, 0
      %v2676 = vsel %vm749, %v2636, 0
      %v2679 = vsel %vm749, %v2638, 0
      %v2682 = vsel %vm749, %v2640, 0
      %v2685 = vsel %vm749, %v2642, 0
      %v2688 = vsel %vm749, %v2644, 0
      %v2691 = vsel %vm749, %v2646, 0
      %v2694 = vsel %vm749, %v2648, 0
      %v2697 = vsel %vm749, %v2650, 0
      %2699 = vmatprep.subr.bf16.mxu0 0
      %2700 = vmatpush1.bf16.xpose.msra.mxu0 %v2676
      %2701 = vmatprep.subr.bf16.mxu0 0
      %2702 = vmatpush1.bf16.xpose.msra.mxu0 %v2679
      %2703 = vmatprep.subr.bf16.mxu0 0
      %2704 = vmatpush1.bf16.xpose.msra.mxu0 %v2682
      %2705 = vmatprep.subr.bf16.mxu0 0
      %2706 = vmatpush1.bf16.xpose.msra.mxu0 %v2685
      %2707 = vmatprep.subr.bf16.mxu0 0
      %2708 = vmatpush1.bf16.xpose.msra.mxu0 %v2688
      %2709 = vmatprep.subr.bf16.mxu0 0
      %2710 = vmatpush1.bf16.xpose.msra.mxu0 %v2691
      %2711 = vmatprep.subr.bf16.mxu0 0
      %2712 = vmatpush1.bf16.xpose.msra.mxu0 %v2694
      %2713 = vmatprep.subr.bf16.mxu0 0
      %2714 = vmatpush1.bf16.xpose.msra.mxu0 %v2697
      %2715 = vmatprep.subr.bf16.mxu0 0
      %2716 = vmatpush1.bf16.xpose.msra.mxu0 0
      %2717 = vmatprep.subr.bf16.mxu0 0
      %2718 = vmatpush1.bf16.xpose.msra.mxu0 0
      %2719 = vmatprep.subr.bf16.mxu0 0
      %2720 = vmatpush1.bf16.xpose.msra.mxu0 0
      %2721 = vmatprep.subr.bf16.mxu0 0
      %2722 = vmatpush1.bf16.xpose.msra.mxu0 0
      %2723 = vmatprep.subr.bf16.mxu0 0
      %2724 = vmatpush1.bf16.xpose.msra.mxu0 0
      %2725 = vmatprep.subr.bf16.mxu0 0
      %2726 = vmatpush1.bf16.xpose.msra.mxu0 0
      %2727 = vmatprep.subr.bf16.mxu0 0
      %2728 = vmatpush1.bf16.xpose.msra.mxu0 0
      %2729 = vmatprep.subr.bf16.mxu0 0
      %2730 = vmatpush1.bf16.xpose.msra.mxu0 0
      %2731 = vmatprep.mubr.bf16.mxu0 0
      %2732 = vmatmul.mubr.bf16.gmra.mrb[0].mxu0 %v2652
      %v2733 = vpop.f32.mrb[0].mxu0
      %v2734 = vadd.f32 0.0, %v2733
      %v2735 = vpop.f32.mrb[0].mxu0
      %v2736 = vpop.f32.mrb[0].mxu0
      %v2737 = vadd.f32 0.0, %v2736
      %v2738 = vpop.f32.mrb[0].mxu0
      %2739 = vmatprep.mubr.bf16.mxu0 0
      %2740 = vmatmul.mubr.bf16.gmra.mrb[0].mxu0 %v2655
      %v2741 = vpop.f32.mrb[0].mxu0
      %v2742 = vadd.f32 0.0, %v2741
      %v2743 = vpop.f32.mrb[0].mxu0
      %v2744 = vpop.f32.mrb[0].mxu0
      %v2745 = vadd.f32 0.0, %v2744
      %v2746 = vpop.f32.mrb[0].mxu0
      %2747 = vmatprep.mubr.bf16.mxu0 0
      %2748 = vmatmul.mubr.bf16.gmra.mrb[0].mxu0 %v2658
      %v2749 = vpop.f32.mrb[0].mxu0
      %v2750 = vadd.f32 0.0, %v2749
      %v2751 = vpop.f32.mrb[0].mxu0
      %v2752 = vpop.f32.mrb[0].mxu0
      %v2753 = vadd.f32 0.0, %v2752
      %v2754 = vpop.f32.mrb[0].mxu0
      %2755 = vmatprep.mubr.bf16.mxu0 0
      %2756 = vmatmul.mubr.bf16.gmra.mrb[0].mxu0 %v2661
      %v2757 = vpop.f32.mrb[0].mxu0
      %v2758 = vadd.f32 0.0, %v2757
      %v2759 = vpop.f32.mrb[0].mxu0
      %v2760 = vpop.f32.mrb[0].mxu0
      %v2761 = vadd.f32 0.0, %v2760
      %v2762 = vpop.f32.mrb[0].mxu0
      %2763 = vmatprep.mubr.bf16.mxu0 0
      %2764 = vmatmul.mubr.bf16.gmra.mrb[0].mxu0 %v2664
      %v2765 = vpop.f32.mrb[0].mxu0
      %v2766 = vadd.f32 0.0, %v2765
      %v2767 = vpop.f32.mrb[0].mxu0
      %v2768 = vpop.f32.mrb[0].mxu0
      %v2769 = vadd.f32 0.0, %v2768
      %v2770 = vpop.f32.mrb[0].mxu0
      %2771 = vmatprep.mubr.bf16.mxu0 0
      %2772 = vmatmul.mubr.bf16.gmra.mrb[0].mxu0 %v2667
      %v2773 = vpop.f32.mrb[0].mxu0
      %v2774 = vadd.f32 0.0, %v2773
      %v2775 = vpop.f32.mrb[0].mxu0
      %v2776 = vpop.f32.mrb[0].mxu0
      %v2777 = vadd.f32 0.0, %v2776
      %v2778 = vpop.f32.mrb[0].mxu0
      %2779 = vmatprep.mubr.bf16.mxu0 0
      %2780 = vmatmul.mubr.bf16.gmra.mrb[0].mxu0 %v2670
      %v2781 = vpop.f32.mrb[0].mxu0
      %v2782 = vadd.f32 0.0, %v2781
      %v2783 = vpop.f32.mrb[0].mxu0
      %v2784 = vpop.f32.mrb[0].mxu0
      %v2785 = vadd.f32 0.0, %v2784
      %v2786 = vpop.f32.mrb[0].mxu0
      %2787 = vmatprep.mubr.bf16.mxu0 0
      %2788 = vmatmul.mubr.bf16.gmra.mrb[0].mxu0 %v2673
      %v2789 = vpop.f32.mrb[0].mxu0
      %v2790 = vadd.f32 0.0, %v2789
      %v2791 = vpop.f32.mrb[0].mxu0
      %v2792 = vpop.f32.mrb[0].mxu0
      %v2793 = vadd.f32 0.0, %v2792
      %v2794 = vpop.f32.mrb[0].mxu0
      %2795 = vdwg.mxu0
      %v2796 = vmul.f32 %v2734, 0.17677669
      %v2797 = vmul.f32 %v2737, 0.17677669
      %v2798 = vmul.f32 %v2742, 0.17677669
      %v2799 = vmul.f32 %v2745, 0.17677669
      %v2800 = vmul.f32 %v2750, 0.17677669
      %v2801 = vmul.f32 %v2753, 0.17677669
      %v2802 = vmul.f32 %v2758, 0.17677669
      %v2803 = vmul.f32 %v2761, 0.17677669
      %v2804 = vmul.f32 %v2766, 0.17677669
      %v2805 = vmul.f32 %v2769, 0.17677669
      %v2806 = vmul.f32 %v2774, 0.17677669
      %v2807 = vmul.f32 %v2777, 0.17677669
      %v2808 = vmul.f32 %v2782, 0.17677669
      %v2809 = vmul.f32 %v2785, 0.17677669
      %v2810 = vmul.f32 %v2790, 0.17677669
      %v2811 = vmul.f32 %v2793, 0.17677669
      %v2812 = vadd.f32 %v2796, %v914
      %v2813 = vadd.f32 %v2797, %v914
      %v2814 = vadd.f32 %v2798, %v914
      %v2815 = vadd.f32 %v2799, %v914
      %v2816 = vadd.f32 %v2800, %v914
      %v2817 = vadd.f32 %v2801, %v914
      %v2818 = vadd.f32 %v2802, %v914
      %v2819 = vadd.f32 %v2803, %v914
      %v2820 = vadd.f32 %v2804, %v914
      %v2821 = vadd.f32 %v2805, %v914
      %v2822 = vadd.f32 %v2806, %v914
      %v2823 = vadd.f32 %v2807, %v914
      %v2824 = vadd.f32 %v2808, %v914
      %v2825 = vadd.f32 %v2809, %v914
      %v2826 = vadd.f32 %v2810, %v914
      %v2827 = vadd.f32 %v2811, %v914
      %2828 = vmax.xlane.f32.xlu0 %v2812
      %v2829 = vpop.xlane.xlu0 %2828
      %2830 = vmax.xlane.f32.xlu0 %v2813
      %v2831 = vpop.xlane.xlu0 %2830
      %2832 = vmax.xlane.f32.xlu0 %v2814
      %v2833 = vpop.xlane.xlu0 %2832
      %2834 = vmax.xlane.f32.xlu0 %v2815
      %v2835 = vpop.xlane.xlu0 %2834
      %2836 = vmax.xlane.f32.xlu0 %v2816
      %v2837 = vpop.xlane.xlu0 %2836
      %2838 = vmax.xlane.f32.xlu0 %v2817
      %v2839 = vpop.xlane.xlu0 %2838
      %2840 = vmax.xlane.f32.xlu0 %v2818
      %v2841 = vpop.xlane.xlu0 %2840
      %2842 = vmax.xlane.f32.xlu0 %v2819
      %v2843 = vpop.xlane.xlu0 %2842
      %2844 = vmax.xlane.f32.xlu0 %v2820
      %v2845 = vpop.xlane.xlu0 %2844
      %2846 = vmax.xlane.f32.xlu0 %v2821
      %v2847 = vpop.xlane.xlu0 %2846
      %2848 = vmax.xlane.f32.xlu0 %v2822
      %v2849 = vpop.xlane.xlu0 %2848
      %2850 = vmax.xlane.f32.xlu0 %v2823
      %v2851 = vpop.xlane.xlu0 %2850
      %2852 = vmax.xlane.f32.xlu0 %v2824
      %v2853 = vpop.xlane.xlu0 %2852
      %2854 = vmax.xlane.f32.xlu0 %v2825
      %v2855 = vpop.xlane.xlu0 %2854
      %2856 = vmax.xlane.f32.xlu0 %v2826
      %v2857 = vpop.xlane.xlu0 %2856
      %2858 = vmax.xlane.f32.xlu0 %v2827
      %v2859 = vpop.xlane.xlu0 %2858
      %v2860 = vsub.f32 %v2812, %v2829
      %v2861 = vsub.f32 %v2813, %v2831
      %v2862 = vsub.f32 %v2814, %v2833
      %v2863 = vsub.f32 %v2815, %v2835
      %v2864 = vsub.f32 %v2816, %v2837
      %v2865 = vsub.f32 %v2817, %v2839
      %v2866 = vsub.f32 %v2818, %v2841
      %v2867 = vsub.f32 %v2819, %v2843
      %v2868 = vsub.f32 %v2820, %v2845
      %v2869 = vsub.f32 %v2821, %v2847
      %v2870 = vsub.f32 %v2822, %v2849
      %v2871 = vsub.f32 %v2823, %v2851
      %v2872 = vsub.f32 %v2824, %v2853
      %v2873 = vsub.f32 %v2825, %v2855
      %v2874 = vsub.f32 %v2826, %v2857
      %v2875 = vsub.f32 %v2827, %v2859
      %v2876 = vmul.f32 %v2860, 1.442695
      %v2877 = vpow.pop %v2876
      %v2878 = vmul.f32 %v2861, 1.442695
      %v2879 = vpow.pop %v2878
      %v2880 = vmul.f32 %v2862, 1.442695
      %v2881 = vpow.pop %v2880
      %v2882 = vmul.f32 %v2863, 1.442695
      %v2883 = vpow.pop %v2882
      %v2884 = vmul.f32 %v2864, 1.442695
      %v2885 = vpow.pop %v2884
      %v2886 = vmul.f32 %v2865, 1.442695
      %v2887 = vpow.pop %v2886
      %v2888 = vmul.f32 %v2866, 1.442695
      %v2889 = vpow.pop %v2888
      %v2890 = vmul.f32 %v2867, 1.442695
      %v2891 = vpow.pop %v2890
      %v2892 = vmul.f32 %v2868, 1.442695
      %v2893 = vpow.pop %v2892
      %v2894 = vmul.f32 %v2869, 1.442695
      %v2895 = vpow.pop %v2894
      %v2896 = vmul.f32 %v2870, 1.442695
      %v2897 = vpow.pop %v2896
      %v2898 = vmul.f32 %v2871, 1.442695
      %v2899 = vpow.pop %v2898
      %v2900 = vmul.f32 %v2872, 1.442695
      %v2901 = vpow.pop %v2900
      %v2902 = vmul.f32 %v2873, 1.442695
      %v2903 = vpow.pop %v2902
      %v2904 = vmul.f32 %v2874, 1.442695
      %v2905 = vpow.pop %v2904
      %v2906 = vmul.f32 %v2875, 1.442695
      %v2907 = vpow.pop %v2906
      %2908 = vadd.xlane.f32.xlu0 %v2877
      %v2909 = vpop.xlane.xlu0 %2908
      %2910 = vadd.xlane.f32.xlu0 %v2879
      %v2911 = vpop.xlane.xlu0 %2910
      %2912 = vadd.xlane.f32.xlu0 %v2881
      %v2913 = vpop.xlane.xlu0 %2912
      %2914 = vadd.xlane.f32.xlu0 %v2883
      %v2915 = vpop.xlane.xlu0 %2914
      %2916 = vadd.xlane.f32.xlu0 %v2885
      %v2917 = vpop.xlane.xlu0 %2916
      %2918 = vadd.xlane.f32.xlu0 %v2887
      %v2919 = vpop.xlane.xlu0 %2918
      %2920 = vadd.xlane.f32.xlu0 %v2889
      %v2921 = vpop.xlane.xlu0 %2920
      %2922 = vadd.xlane.f32.xlu0 %v2891
      %v2923 = vpop.xlane.xlu0 %2922
      %2924 = vadd.xlane.f32.xlu0 %v2893
      %v2925 = vpop.xlane.xlu0 %2924
      %2926 = vadd.xlane.f32.xlu0 %v2895
      %v2927 = vpop.xlane.xlu0 %2926
      %2928 = vadd.xlane.f32.xlu0 %v2897
      %v2929 = vpop.xlane.xlu0 %2928
      %2930 = vadd.xlane.f32.xlu0 %v2899
      %v2931 = vpop.xlane.xlu0 %2930
      %2932 = vadd.xlane.f32.xlu0 %v2901
      %v2933 = vpop.xlane.xlu0 %2932
      %2934 = vadd.xlane.f32.xlu0 %v2903
      %v2935 = vpop.xlane.xlu0 %2934
      %2936 = vadd.xlane.f32.xlu0 %v2905
      %v2937 = vpop.xlane.xlu0 %2936
      %2938 = vadd.xlane.f32.xlu0 %v2907
      %v2939 = vpop.xlane.xlu0 %2938
      %v2940 = vrcp.pop %v2909
      %v2941 = vrcp.pop %v2911
      %v2942 = vrcp.pop %v2913
      %v2943 = vrcp.pop %v2915
      %v2944 = vrcp.pop %v2917
      %v2945 = vrcp.pop %v2919
      %v2946 = vrcp.pop %v2921
      %v2947 = vrcp.pop %v2923
      %v2948 = vrcp.pop %v2925
      %v2949 = vrcp.pop %v2927
      %v2950 = vrcp.pop %v2929
      %v2951 = vrcp.pop %v2931
      %v2952 = vrcp.pop %v2933
      %v2953 = vrcp.pop %v2935
      %v2954 = vrcp.pop %v2937
      %v2955 = vrcp.pop %v2939
      %v2956 = vmul.f32 %v2877, %v2940
      %v2957 = vmul.f32 %v2879, %v2941
      %v2958 = vmul.f32 %v2881, %v2942
      %v2959 = vmul.f32 %v2883, %v2943
      %v2960 = vmul.f32 %v2885, %v2944
      %v2961 = vmul.f32 %v2887, %v2945
      %v2962 = vmul.f32 %v2889, %v2946
      %v2963 = vmul.f32 %v2891, %v2947
      %v2964 = vmul.f32 %v2893, %v2948
      %v2965 = vmul.f32 %v2895, %v2949
      %v2966 = vmul.f32 %v2897, %v2950
      %v2967 = vmul.f32 %v2899, %v2951
      %v2968 = vmul.f32 %v2901, %v2952
      %v2969 = vmul.f32 %v2903, %v2953
      %v2970 = vmul.f32 %v2905, %v2954
      %v2971 = vmul.f32 %v2907, %v2955
      %v2972 = vpack.c.bf16 %v2957, %v2956
      %v2973 = vpack.c.bf16 %v2959, %v2958
      %v2974 = vpack.c.bf16 %v2961, %v2960
      %v2975 = vpack.c.bf16 %v2963, %v2962
      %v2976 = vpack.c.bf16 %v2965, %v2964
      %v2977 = vpack.c.bf16 %v2967, %v2966
      %v2978 = vpack.c.bf16 %v2969, %v2968
      %v2979 = vpack.c.bf16 %v2971, %v2970
      %2980 = vrot.lane.b32.xlu0 %v741, 32
      %v2981 = vpop.permute.xlu0 %2980
      %2982 = vrot.lane.b32.xlu0 %v742, 32
      %v2983 = vpop.permute.xlu0 %2982
      %2984 = vrot.lane.b32.xlu0 %v743, 32
      %v2985 = vpop.permute.xlu0 %2984
      %2986 = vrot.lane.b32.xlu0 %v744, 32
      %v2987 = vpop.permute.xlu0 %2986
      %2988 = vrot.lane.b32.xlu0 %v745, 32
      %v2989 = vpop.permute.xlu0 %2988
      %2990 = vrot.lane.b32.xlu0 %v746, 32
      %v2991 = vpop.permute.xlu0 %2990
      %2992 = vrot.lane.b32.xlu0 %v747, 32
      %v2993 = vpop.permute.xlu0 %2992
      %2994 = vrot.lane.b32.xlu0 %v748, 32
      %v2995 = vpop.permute.xlu0 %2994
      %3004 = vmatprep.subr.bf16.mxu0 0
      %3005 = vmatpush1.bf16.msra.mxu0 %v2981
      %3006 = vmatprep.subr.bf16.mxu0 0
      %3007 = vmatpush1.bf16.msra.mxu0 %v2983
      %3008 = vmatprep.subr.bf16.mxu0 0
      %3009 = vmatpush1.bf16.msra.mxu0 %v2985
      %3010 = vmatprep.subr.bf16.mxu0 0
      %3011 = vmatpush1.bf16.msra.mxu0 %v2987
      %3012 = vmatprep.subr.bf16.mxu0 0
      %3013 = vmatpush1.bf16.msra.mxu0 %v2989
      %3014 = vmatprep.subr.bf16.mxu0 0
      %3015 = vmatpush1.bf16.msra.mxu0 %v2991
      %3016 = vmatprep.subr.bf16.mxu0 0
      %3017 = vmatpush1.bf16.msra.mxu0 %v2993
      %3018 = vmatprep.subr.bf16.mxu0 0
      %3019 = vmatpush1.bf16.msra.mxu0 %v2995
      %3020 = vmatprep.subr.bf16.mxu0 0
      %3021 = vmatpush1.bf16.msra.mxu0 0
      %3022 = vmatprep.subr.bf16.mxu0 0
      %3023 = vmatpush1.bf16.msra.mxu0 0
      %3024 = vmatprep.subr.bf16.mxu0 0
      %3025 = vmatpush1.bf16.msra.mxu0 0
      %3026 = vmatprep.subr.bf16.mxu0 0
      %3027 = vmatpush1.bf16.msra.mxu0 0
      %3028 = vmatprep.subr.bf16.mxu0 0
      %3029 = vmatpush1.bf16.msra.mxu0 0
      %3030 = vmatprep.subr.bf16.mxu0 0
      %3031 = vmatpush1.bf16.msra.mxu0 0
      %3032 = vmatprep.subr.bf16.mxu0 0
      %3033 = vmatpush1.bf16.msra.mxu0 0
      %3034 = vmatprep.subr.bf16.mxu0 0
      %3035 = vmatpush1.bf16.msra.mxu0 0
      %3036 = vmatprep.mubr.bf16.mxu0 0
      %3037 = vmatmul.mubr.bf16.gmra.mrb[0].mxu0 %v2972
      %v3038 = vpop.f32.mrb[0].mxu0
      %v3039 = vadd.f32 0.0, %v3038
      %v3040 = vpop.f32.mrb[0].mxu0
      %v3041 = vpop.f32.mrb[0].mxu0
      %v3042 = vadd.f32 0.0, %v3041
      %v3043 = vpop.f32.mrb[0].mxu0
      %3044 = vmatprep.mubr.bf16.mxu0 0
      %3045 = vmatmul.mubr.bf16.gmra.mrb[0].mxu0 %v2973
      %v3046 = vpop.f32.mrb[0].mxu0
      %v3047 = vadd.f32 0.0, %v3046
      %v3048 = vpop.f32.mrb[0].mxu0
      %v3049 = vpop.f32.mrb[0].mxu0
      %v3050 = vadd.f32 0.0, %v3049
      %v3051 = vpop.f32.mrb[0].mxu0
      %3052 = vmatprep.mubr.bf16.mxu0 0
      %3053 = vmatmul.mubr.bf16.gmra.mrb[0].mxu0 %v2974
      %v3054 = vpop.f32.mrb[0].mxu0
      %v3055 = vadd.f32 0.0, %v3054
      %v3056 = vpop.f32.mrb[0].mxu0
      %v3057 = vpop.f32.mrb[0].mxu0
      %v3058 = vadd.f32 0.0, %v3057
      %v3059 = vpop.f32.mrb[0].mxu0
      %3060 = vmatprep.mubr.bf16.mxu0 0
      %3061 = vmatmul.mubr.bf16.gmra.mrb[0].mxu0 %v2975
      %v3062 = vpop.f32.mrb[0].mxu0
      %v3063 = vadd.f32 0.0, %v3062
      %v3064 = vpop.f32.mrb[0].mxu0
      %v3065 = vpop.f32.mrb[0].mxu0
      %v3066 = vadd.f32 0.0, %v3065
      %v3067 = vpop.f32.mrb[0].mxu0
      %3068 = vmatprep.mubr.bf16.mxu0 0
      %3069 = vmatmul.mubr.bf16.gmra.mrb[0].mxu0 %v2976
      %v3070 = vpop.f32.mrb[0].mxu0
      %v3071 = vadd.f32 0.0, %v3070
      %v3072 = vpop.f32.mrb[0].mxu0
      %v3073 = vpop.f32.mrb[0].mxu0
      %v3074 = vadd.f32 0.0, %v3073
      %v3075 = vpop.f32.mrb[0].mxu0
      %3076 = vmatprep.mubr.bf16.mxu0 0
      %3077 = vmatmul.mubr.bf16.gmra.mrb[0].mxu0 %v2977
      %v3078 = vpop.f32.mrb[0].mxu0
      %v3079 = vadd.f32 0.0, %v3078
      %v3080 = vpop.f32.mrb[0].mxu0
      %v3081 = vpop.f32.mrb[0].mxu0
      %v3082 = vadd.f32 0.0, %v3081
      %v3083 = vpop.f32.mrb[0].mxu0
      %3084 = vmatprep.mubr.bf16.mxu0 0
      %3085 = vmatmul.mubr.bf16.gmra.mrb[0].mxu0 %v2978
      %v3086 = vpop.f32.mrb[0].mxu0
      %v3087 = vadd.f32 0.0, %v3086
      %v3088 = vpop.f32.mrb[0].mxu0
      %v3089 = vpop.f32.mrb[0].mxu0
      %v3090 = vadd.f32 0.0, %v3089
      %v3091 = vpop.f32.mrb[0].mxu0
      %3092 = vmatprep.mubr.bf16.mxu0 0
      %3093 = vmatmul.mubr.bf16.gmra.mrb[0].mxu0 %v2979
      %v3094 = vpop.f32.mrb[0].mxu0
      %v3095 = vadd.f32 0.0, %v3094
      %v3096 = vpop.f32.mrb[0].mxu0
      %v3097 = vpop.f32.mrb[0].mxu0
      %v3098 = vadd.f32 0.0, %v3097
      %v3099 = vpop.f32.mrb[0].mxu0
      %3100 = vdwg.mxu0
      %v3101 = vpack.c.bf16 %v3042, %v3039
      %v3102 = vpack.c.bf16 %v3050, %v3047
      %v3103 = vpack.c.bf16 %v3058, %v3055
      %v3104 = vpack.c.bf16 %v3066, %v3063
      %v3105 = vpack.c.bf16 %v3074, %v3071
      %v3106 = vpack.c.bf16 %v3082, %v3079
      %v3107 = vpack.c.bf16 %v3090, %v3087
      %v3108 = vpack.c.bf16 %v3098, %v3095
      %v3109 = vld [vmem:[%s4 + $0x30] sm:$0xf]
      %v3110 = vld [vmem:[%s4 + $0x34] sm:$0xf]
      %v3111 = vld [vmem:[%s4 + $0x38] sm:$0xf]
      %v3112 = vld [vmem:[%s4 + $0x3c] sm:$0xf]
      %v3117 = vunpack.c.l.b16 %v3109
      %v3118 = vunpack.c.l.b16 %v3110
      %v3119 = vunpack.c.l.b16 %v3111
      %v3120 = vunpack.c.l.b16 %v3112
      %v3121 = vpack.c.b16 %v3118, %v3117
      %v3122 = vpack.c.b16 %v3120, %v3119
      %v3126 = vsel %vm749, %v3101, 0
      %v3129 = vsel %vm749, %v3102, 0
      %v3132 = vsel %vm749, %v3103, 0
      %v3135 = vsel %vm749, %v3104, 0
      %v3138 = vsel %vm749, %v3105, 0
      %v3141 = vsel %vm749, %v3106, 0
      %v3144 = vsel %vm749, %v3107, 0
      %v3147 = vsel %vm749, %v3108, 0
      %3149 = vmatprep.subr.bf16.mxu0 0
      %3150 = vmatpush1.bf16.msra.mxu0 %v3121
      %3151 = vmatprep.subr.bf16.mxu0 0
      %3152 = vmatpush1.bf16.msra.mxu0 %v3122
      %3153 = vmatprep.subr.bf16.mxu0 0
      %3154 = vmatpush1.bf16.msra.mxu0 0
      %3155 = vmatprep.subr.bf16.mxu0 0
      %3156 = vmatpush1.bf16.msra.mxu0 0
      %3157 = vmatprep.subr.bf16.mxu0 0
      %3158 = vmatpush1.bf16.msra.mxu0 0
      %3159 = vmatprep.subr.bf16.mxu0 0
      %3160 = vmatpush1.bf16.msra.mxu0 0
      %3161 = vmatprep.subr.bf16.mxu0 0
      %3162 = vmatpush1.bf16.msra.mxu0 0
      %3163 = vmatprep.subr.bf16.mxu0 0
      %3164 = vmatpush1.bf16.msra.mxu0 0
      %3165 = vmatprep.subr.bf16.mxu0 0
      %3166 = vmatpush1.bf16.msra.mxu0 0
      %3167 = vmatprep.subr.bf16.mxu0 0
      %3168 = vmatpush1.bf16.msra.mxu0 0
      %3169 = vmatprep.subr.bf16.mxu0 0
      %3170 = vmatpush1.bf16.msra.mxu0 0
      %3171 = vmatprep.subr.bf16.mxu0 0
      %3172 = vmatpush1.bf16.msra.mxu0 0
      %3173 = vmatprep.subr.bf16.mxu0 0
      %3174 = vmatpush1.bf16.msra.mxu0 0
      %3175 = vmatprep.subr.bf16.mxu0 0
      %3176 = vmatpush1.bf16.msra.mxu0 0
      %3177 = vmatprep.subr.bf16.mxu0 0
      %3178 = vmatpush1.bf16.msra.mxu0 0
      %3179 = vmatprep.subr.bf16.mxu0 0
      %3180 = vmatpush1.bf16.msra.mxu0 0
      %3181 = vmatprep.mubr.bf16.mxu0 0
      %3182 = vmatmul.mubr.bf16.gmra.mrb[0].mxu0 %v3126
      %v3183 = vpop.f32.mrb[0].mxu0
      %v3184 = vadd.f32 0.0, %v3183
      %v3185 = vpop.f32.mrb[0].mxu0
      %v3186 = vpop.f32.mrb[0].mxu0
      %v3187 = vadd.f32 0.0, %v3186
      %v3188 = vpop.f32.mrb[0].mxu0
      %3189 = vmatprep.mubr.bf16.mxu0 0
      %3190 = vmatmul.mubr.bf16.gmra.mrb[0].mxu0 %v3129
      %v3191 = vpop.f32.mrb[0].mxu0
      %v3192 = vadd.f32 0.0, %v3191
      %v3193 = vpop.f32.mrb[0].mxu0
      %v3194 = vpop.f32.mrb[0].mxu0
      %v3195 = vadd.f32 0.0, %v3194
      %v3196 = vpop.f32.mrb[0].mxu0
      %3197 = vmatprep.mubr.bf16.mxu0 0
      %3198 = vmatmul.mubr.bf16.gmra.mrb[0].mxu0 %v3132
      %v3199 = vpop.f32.mrb[0].mxu0
      %v3200 = vadd.f32 0.0, %v3199
      %v3201 = vpop.f32.mrb[0].mxu0
      %v3202 = vpop.f32.mrb[0].mxu0
      %v3203 = vadd.f32 0.0, %v3202
      %v3204 = vpop.f32.mrb[0].mxu0
      %3205 = vmatprep.mubr.bf16.mxu0 0
      %3206 = vmatmul.mubr.bf16.gmra.mrb[0].mxu0 %v3135
      %v3207 = vpop.f32.mrb[0].mxu0
      %v3208 = vadd.f32 0.0, %v3207
      %v3209 = vpop.f32.mrb[0].mxu0
      %v3210 = vpop.f32.mrb[0].mxu0
      %v3211 = vadd.f32 0.0, %v3210
      %v3212 = vpop.f32.mrb[0].mxu0
      %3213 = vmatprep.mubr.bf16.mxu0 0
      %3214 = vmatmul.mubr.bf16.gmra.mrb[0].mxu0 %v3138
      %v3215 = vpop.f32.mrb[0].mxu0
      %v3216 = vadd.f32 0.0, %v3215
      %v3217 = vpop.f32.mrb[0].mxu0
      %v3218 = vpop.f32.mrb[0].mxu0
      %v3219 = vadd.f32 0.0, %v3218
      %v3220 = vpop.f32.mrb[0].mxu0
      %3221 = vmatprep.mubr.bf16.mxu0 0
      %3222 = vmatmul.mubr.bf16.gmra.mrb[0].mxu0 %v3141
      %v3223 = vpop.f32.mrb[0].mxu0
      %v3224 = vadd.f32 0.0, %v3223
      %v3225 = vpop.f32.mrb[0].mxu0
      %v3226 = vpop.f32.mrb[0].mxu0
      %v3227 = vadd.f32 0.0, %v3226
      %v3228 = vpop.f32.mrb[0].mxu0
      %3229 = vmatprep.mubr.bf16.mxu0 0
      %3230 = vmatmul.mubr.bf16.gmra.mrb[0].mxu0 %v3144
      %v3231 = vpop.f32.mrb[0].mxu0
      %v3232 = vadd.f32 0.0, %v3231
      %v3233 = vpop.f32.mrb[0].mxu0
      %v3234 = vpop.f32.mrb[0].mxu0
      %v3235 = vadd.f32 0.0, %v3234
      %v3236 = vpop.f32.mrb[0].mxu0
      %3237 = vmatprep.mubr.bf16.mxu0 0
      %3238 = vmatmul.mubr.bf16.gmra.mrb[0].mxu0 %v3147
      %v3239 = vpop.f32.mrb[0].mxu0
      %v3240 = vadd.f32 0.0, %v3239
      %v3241 = vpop.f32.mrb[0].mxu0
      %v3242 = vpop.f32.mrb[0].mxu0
      %v3243 = vadd.f32 0.0, %v3242
      %v3244 = vpop.f32.mrb[0].mxu0
      %3245 = vdwg.mxu0
      %v3246 = vadd.f32 %v2603, %v3184
      %v3247 = vadd.f32 %v2604, %v3187
      %v3248 = vadd.f32 %v2605, %v3192
      %v3249 = vadd.f32 %v2606, %v3195
      %v3250 = vadd.f32 %v2607, %v3200
      %v3251 = vadd.f32 %v2608, %v3203
      %v3252 = vadd.f32 %v2609, %v3208
      %v3253 = vadd.f32 %v2610, %v3211
      %v3254 = vadd.f32 %v2611, %v3216
      %v3255 = vadd.f32 %v2612, %v3219
      %v3256 = vadd.f32 %v2613, %v3224
      %v3257 = vadd.f32 %v2614, %v3227
      %v3258 = vadd.f32 %v2615, %v3232
      %v3259 = vadd.f32 %v2616, %v3235
      %v3260 = vadd.f32 %v2617, %v3240
      %v3261 = vadd.f32 %v2618, %v3243
      %v3262 = vld [vmem:[%s5] sm:$0x1]
      %v3264 = vlaneseq
      %v3265 = vshrl.u32 %v3264, 7
      %v3266 = vsub.s32 0, %v3265
      %v3267 = vrot.slane %v3262, %v3266
      %v3269 = vadd.f32 %v3246, %v3267
      %v3270 = vadd.f32 %v3247, %v3267
      %v3271 = vadd.f32 %v3248, %v3267
      %v3272 = vadd.f32 %v3249, %v3267
      %v3273 = vadd.f32 %v3250, %v3267
      %v3274 = vadd.f32 %v3251, %v3267
      %v3275 = vadd.f32 %v3252, %v3267
      %v3276 = vadd.f32 %v3253, %v3267
      %v3277 = vadd.f32 %v3254, %v3267
      %v3278 = vadd.f32 %v3255, %v3267
      %v3279 = vadd.f32 %v3256, %v3267
      %v3280 = vadd.f32 %v3257, %v3267
      %v3281 = vadd.f32 %v3258, %v3267
      %v3282 = vadd.f32 %v3259, %v3267
      %v3283 = vadd.f32 %v3260, %v3267
      %v3284 = vadd.f32 %v3261, %v3267
      %v3285 = vadd.f32 %v3269, %v310
      %v3286 = vadd.f32 %v3270, %v311
      %v3287 = vadd.f32 %v3271, %v312
      %v3288 = vadd.f32 %v3272, %v313
      %v3289 = vadd.f32 %v3273, %v314
      %v3290 = vadd.f32 %v3274, %v315
      %v3291 = vadd.f32 %v3275, %v316
      %v3292 = vadd.f32 %v3276, %v317
      %v3293 = vadd.f32 %v3277, %v318
      %v3294 = vadd.f32 %v3278, %v319
      %v3295 = vadd.f32 %v3279, %v320
      %v3296 = vadd.f32 %v3280, %v321
      %v3297 = vadd.f32 %v3281, %v322
      %v3298 = vadd.f32 %v3282, %v323
      %v3299 = vadd.f32 %v3283, %v324
      %v3300 = vadd.f32 %v3284, %v325
      %v3301 = vld [vmem:[%s6] sm:$0x1]
      %v3302 = vld [vmem:[%s7] sm:$0x1]
      %3303 = vadd.xlane.f32.xlu0 %v3285
      %v3304 = vpop.xlane.xlu0 %3303
      %3305 = vadd.xlane.f32.xlu0 %v3286
      %v3306 = vpop.xlane.xlu0 %3305
      %3307 = vadd.xlane.f32.xlu0 %v3287
      %v3308 = vpop.xlane.xlu0 %3307
      %3309 = vadd.xlane.f32.xlu0 %v3288
      %v3310 = vpop.xlane.xlu0 %3309
      %3311 = vadd.xlane.f32.xlu0 %v3289
      %v3312 = vpop.xlane.xlu0 %3311
      %3313 = vadd.xlane.f32.xlu0 %v3290
      %v3314 = vpop.xlane.xlu0 %3313
      %3315 = vadd.xlane.f32.xlu0 %v3291
      %v3316 = vpop.xlane.xlu0 %3315
      %3317 = vadd.xlane.f32.xlu0 %v3292
      %v3318 = vpop.xlane.xlu0 %3317
      %3319 = vadd.xlane.f32.xlu0 %v3293
      %v3320 = vpop.xlane.xlu0 %3319
      %3321 = vadd.xlane.f32.xlu0 %v3294
      %v3322 = vpop.xlane.xlu0 %3321
      %3323 = vadd.xlane.f32.xlu0 %v3295
      %v3324 = vpop.xlane.xlu0 %3323
      %3325 = vadd.xlane.f32.xlu0 %v3296
      %v3326 = vpop.xlane.xlu0 %3325
      %3327 = vadd.xlane.f32.xlu0 %v3297
      %v3328 = vpop.xlane.xlu0 %3327
      %3329 = vadd.xlane.f32.xlu0 %v3298
      %v3330 = vpop.xlane.xlu0 %3329
      %3331 = vadd.xlane.f32.xlu0 %v3299
      %v3332 = vpop.xlane.xlu0 %3331
      %3333 = vadd.xlane.f32.xlu0 %v3300
      %v3334 = vpop.xlane.xlu0 %3333
      %v3335 = vrcp.pop 128.0
      %v3336 = vmul.f32 %v3304, %v3335
      %v3337 = vmul.f32 %v3306, %v3335
      %v3338 = vmul.f32 %v3308, %v3335
      %v3339 = vmul.f32 %v3310, %v3335
      %v3340 = vmul.f32 %v3312, %v3335
      %v3341 = vmul.f32 %v3314, %v3335
      %v3342 = vmul.f32 %v3316, %v3335
      %v3343 = vmul.f32 %v3318, %v3335
      %v3344 = vmul.f32 %v3320, %v3335
      %v3345 = vmul.f32 %v3322, %v3335
      %v3346 = vmul.f32 %v3324, %v3335
      %v3347 = vmul.f32 %v3326, %v3335
      %v3348 = vmul.f32 %v3328, %v3335
      %v3349 = vmul.f32 %v3330, %v3335
      %v3350 = vmul.f32 %v3332, %v3335
      %v3351 = vmul.f32 %v3334, %v3335
      %v3352 = vsub.f32 %v3285, %v3336
      %v3353 = vsub.f32 %v3286, %v3337
      %v3354 = vsub.f32 %v3287, %v3338
      %v3355 = vsub.f32 %v3288, %v3339
      %v3356 = vsub.f32 %v3289, %v3340
      %v3357 = vsub.f32 %v3290, %v3341
      %v3358 = vsub.f32 %v3291, %v3342
      %v3359 = vsub.f32 %v3292, %v3343
      %v3360 = vsub.f32 %v3293, %v3344
      %v3361 = vsub.f32 %v3294, %v3345
      %v3362 = vsub.f32 %v3295, %v3346
      %v3363 = vsub.f32 %v3296, %v3347
      %v3364 = vsub.f32 %v3297, %v3348
      %v3365 = vsub.f32 %v3298, %v3349
      %v3366 = vsub.f32 %v3299, %v3350
      %v3367 = vsub.f32 %v3300, %v3351
      %v3368 = vmul.f32 %v3352, %v3352
      %v3369 = vmul.f32 %v3353, %v3353
      %v3370 = vmul.f32 %v3354, %v3354
      %v3371 = vmul.f32 %v3355, %v3355
      %v3372 = vmul.f32 %v3356, %v3356
      %v3373 = vmul.f32 %v3357, %v3357
      %v3374 = vmul.f32 %v3358, %v3358
      %v3375 = vmul.f32 %v3359, %v3359
      %v3376 = vmul.f32 %v3360, %v3360
      %v3377 = vmul.f32 %v3361, %v3361
      %v3378 = vmul.f32 %v3362, %v3362
      %v3379 = vmul.f32 %v3363, %v3363
      %v3380 = vmul.f32 %v3364, %v3364
      %v3381 = vmul.f32 %v3365, %v3365
      %v3382 = vmul.f32 %v3366, %v3366
      %v3383 = vmul.f32 %v3367, %v3367
      %3384 = vadd.xlane.f32.xlu0 %v3368
      %v3385 = vpop.xlane.xlu0 %3384
      %3386 = vadd.xlane.f32.xlu0 %v3369
      %v3387 = vpop.xlane.xlu0 %3386
      %3388 = vadd.xlane.f32.xlu0 %v3370
      %v3389 = vpop.xlane.xlu0 %3388
      %3390 = vadd.xlane.f32.xlu0 %v3371
      %v3391 = vpop.xlane.xlu0 %3390
      %3392 = vadd.xlane.f32.xlu0 %v3372
      %v3393 = vpop.xlane.xlu0 %3392
      %3394 = vadd.xlane.f32.xlu0 %v3373
      %v3395 = vpop.xlane.xlu0 %3394
      %3396 = vadd.xlane.f32.xlu0 %v3374
      %v3397 = vpop.xlane.xlu0 %3396
      %3398 = vadd.xlane.f32.xlu0 %v3375
      %v3399 = vpop.xlane.xlu0 %3398
      %3400 = vadd.xlane.f32.xlu0 %v3376
      %v3401 = vpop.xlane.xlu0 %3400
      %3402 = vadd.xlane.f32.xlu0 %v3377
      %v3403 = vpop.xlane.xlu0 %3402
      %3404 = vadd.xlane.f32.xlu0 %v3378
      %v3405 = vpop.xlane.xlu0 %3404
      %3406 = vadd.xlane.f32.xlu0 %v3379
      %v3407 = vpop.xlane.xlu0 %3406
      %3408 = vadd.xlane.f32.xlu0 %v3380
      %v3409 = vpop.xlane.xlu0 %3408
      %3410 = vadd.xlane.f32.xlu0 %v3381
      %v3411 = vpop.xlane.xlu0 %3410
      %3412 = vadd.xlane.f32.xlu0 %v3382
      %v3413 = vpop.xlane.xlu0 %3412
      %3414 = vadd.xlane.f32.xlu0 %v3383
      %v3415 = vpop.xlane.xlu0 %3414
      %v3416 = vmul.f32 %v3385, %v3335
      %v3417 = vmul.f32 %v3387, %v3335
      %v3418 = vmul.f32 %v3389, %v3335
      %v3419 = vmul.f32 %v3391, %v3335
      %v3420 = vmul.f32 %v3393, %v3335
      %v3421 = vmul.f32 %v3395, %v3335
      %v3422 = vmul.f32 %v3397, %v3335
      %v3423 = vmul.f32 %v3399, %v3335
      %v3424 = vmul.f32 %v3401, %v3335
      %v3425 = vmul.f32 %v3403, %v3335
      %v3426 = vmul.f32 %v3405, %v3335
      %v3427 = vmul.f32 %v3407, %v3335
      %v3428 = vmul.f32 %v3409, %v3335
      %v3429 = vmul.f32 %v3411, %v3335
      %v3430 = vmul.f32 %v3413, %v3335
      %v3431 = vmul.f32 %v3415, %v3335
      %v3432 = vadd.f32 %v3416, 1e-12
      %v3433 = vadd.f32 %v3417, 1e-12
      %v3434 = vadd.f32 %v3418, 1e-12
      %v3435 = vadd.f32 %v3419, 1e-12
      %v3436 = vadd.f32 %v3420, 1e-12
      %v3437 = vadd.f32 %v3421, 1e-12
      %v3438 = vadd.f32 %v3422, 1e-12
      %v3439 = vadd.f32 %v3423, 1e-12
      %v3440 = vadd.f32 %v3424, 1e-12
      %v3441 = vadd.f32 %v3425, 1e-12
      %v3442 = vadd.f32 %v3426, 1e-12
      %v3443 = vadd.f32 %v3427, 1e-12
      %v3444 = vadd.f32 %v3428, 1e-12
      %v3445 = vadd.f32 %v3429, 1e-12
      %v3446 = vadd.f32 %v3430, 1e-12
      %v3447 = vadd.f32 %v3431, 1e-12
      %v3448 = vrsqrt.pop %v3432
      %v3449 = vrsqrt.pop %v3433
      %v3450 = vrsqrt.pop %v3434
      %v3451 = vrsqrt.pop %v3435
      %v3452 = vrsqrt.pop %v3436
      %v3453 = vrsqrt.pop %v3437
      %v3454 = vrsqrt.pop %v3438
      %v3455 = vrsqrt.pop %v3439
      %v3456 = vrsqrt.pop %v3440
      %v3457 = vrsqrt.pop %v3441
      %v3458 = vrsqrt.pop %v3442
      %v3459 = vrsqrt.pop %v3443
      %v3460 = vrsqrt.pop %v3444
      %v3461 = vrsqrt.pop %v3445
      %v3462 = vrsqrt.pop %v3446
      %v3463 = vrsqrt.pop %v3447
      %v3464 = vmul.f32 %v3352, %v3448
      %v3465 = vmul.f32 %v3353, %v3449
      %v3466 = vmul.f32 %v3354, %v3450
      %v3467 = vmul.f32 %v3355, %v3451
      %v3468 = vmul.f32 %v3356, %v3452
      %v3469 = vmul.f32 %v3357, %v3453
      %v3470 = vmul.f32 %v3358, %v3454
      %v3471 = vmul.f32 %v3359, %v3455
      %v3472 = vmul.f32 %v3360, %v3456
      %v3473 = vmul.f32 %v3361, %v3457
      %v3474 = vmul.f32 %v3362, %v3458
      %v3475 = vmul.f32 %v3363, %v3459
      %v3476 = vmul.f32 %v3364, %v3460
      %v3477 = vmul.f32 %v3365, %v3461
      %v3478 = vmul.f32 %v3366, %v3462
      %v3479 = vmul.f32 %v3367, %v3463
      %v3481 = vlaneseq
      %v3482 = vshrl.u32 %v3481, 7
      %v3483 = vsub.s32 0, %v3482
      %v3484 = vrot.slane %v3301, %v3483
      %v3486 = vmul.f32 %v3464, %v3484
      %v3487 = vmul.f32 %v3465, %v3484
      %v3488 = vmul.f32 %v3466, %v3484
      %v3489 = vmul.f32 %v3467, %v3484
      %v3490 = vmul.f32 %v3468, %v3484
      %v3491 = vmul.f32 %v3469, %v3484
      %v3492 = vmul.f32 %v3470, %v3484
      %v3493 = vmul.f32 %v3471, %v3484
      %v3494 = vmul.f32 %v3472, %v3484
      %v3495 = vmul.f32 %v3473, %v3484
      %v3496 = vmul.f32 %v3474, %v3484
      %v3497 = vmul.f32 %v3475, %v3484
      %v3498 = vmul.f32 %v3476, %v3484
      %v3499 = vmul.f32 %v3477, %v3484
      %v3500 = vmul.f32 %v3478, %v3484
      %v3501 = vmul.f32 %v3479, %v3484
      %v3503 = vlaneseq
      %v3504 = vshrl.u32 %v3503, 7
      %v3505 = vsub.s32 0, %v3504
      %v3506 = vrot.slane %v3302, %v3505
      %v3508 = vadd.f32 %v3486, %v3506
      %v3509 = vadd.f32 %v3487, %v3506
      %v3510 = vadd.f32 %v3488, %v3506
      %v3511 = vadd.f32 %v3489, %v3506
      %v3512 = vadd.f32 %v3490, %v3506
      %v3513 = vadd.f32 %v3491, %v3506
      %v3514 = vadd.f32 %v3492, %v3506
      %v3515 = vadd.f32 %v3493, %v3506
      %v3516 = vadd.f32 %v3494, %v3506
      %v3517 = vadd.f32 %v3495, %v3506
      %v3518 = vadd.f32 %v3496, %v3506
      %v3519 = vadd.f32 %v3497, %v3506
      %v3520 = vadd.f32 %v3498, %v3506
      %v3521 = vadd.f32 %v3499, %v3506
      %v3522 = vadd.f32 %v3500, %v3506
      %v3523 = vadd.f32 %v3501, %v3506
      %3524 = vst [vmem:[%s307] sm:$0xff] %v3508
      %3525 = vst [vmem:[%s307 + $0x8] sm:$0xff] %v3509
      %3526 = vst [vmem:[%s307 + $0x10] sm:$0xff] %v3510
      %3527 = vst [vmem:[%s307 + $0x18] sm:$0xff] %v3511
      %3528 = vst [vmem:[%s307 + $0x20] sm:$0xff] %v3512
      %3529 = vst [vmem:[%s307 + $0x28] sm:$0xff] %v3513
      %3530 = vst [vmem:[%s307 + $0x30] sm:$0xff] %v3514
      %3531 = vst [vmem:[%s307 + $0x38] sm:$0xff] %v3515
      %3532 = vst [vmem:[%s307 + $0x40] sm:$0xff] %v3516
      %3533 = vst [vmem:[%s307 + $0x48] sm:$0xff] %v3517
      %3534 = vst [vmem:[%s307 + $0x50] sm:$0xff] %v3518
      %3535 = vst [vmem:[%s307 + $0x58] sm:$0xff] %v3519
      %3536 = vst [vmem:[%s307 + $0x60] sm:$0xff] %v3520
      %3537 = vst [vmem:[%s307 + $0x68] sm:$0xff] %v3521
      %3538 = vst [vmem:[%s307 + $0x70] sm:$0xff] %v3522
      %3539 = vst [vmem:[%s307 + $0x78] sm:$0xff] %v3523
      %s3540 = smul.u32 16, %s19
      %p3541 = scmp.lt.s32.totalorder %s3540, 31
      %s3542 = scalar_select %p3541, %s3540, 31
      %s3543 = smul.addr %s3542, 8
      %s3544 = scalar_lea.vmem %s8, %s3543
      // Predicated region
      $region53: #{bert_forward.6} parent=51 // pred_check
        %p3545 = pneg %p210
      $region54: #{bert_forward.6} parent=51 // pred_check_branch
        %3547 = sbr.rel (%p3545) target = $region56
      $region55: #{bert_forward.6} parent=51 // pred_region
        %s3548 = smul.u32 16, %s19
      $region56: #{bert_forward.6} parent=51 // pred_fallthru
        _
    $region52: #{bert_forward.6} parent=5 // pred_fallthru
      _
    %p3549 = scmp.le.s32.totalorder 2, %s14
    // Predicated region
    $region57: #{bert_forward.6} parent=5 // pred_check
      %p3550 = pneg %p3549
    $region58: #{bert_forward.6} parent=5 // pred_check_branch
      %3552 = sbr.rel (%p3550) target = $region60
    $region59: #{bert_forward.6} parent=5 // pred_region
      %s3553 = ssub.s32 %s14, 2
      // Predicated region
      $region61: #{bert_forward.6} parent=59 // pred_check
        %p3554 = pneg %p216
      $region62: #{bert_forward.6} parent=59 // pred_check_branch
        %3556 = sbr.rel (%p3554) target = $region64
      $region63: #{bert_forward.6} parent=59 // pred_region
        %s3557 = smul.u32 16, %s20
        %p3558 = scmp.lt.s32.totalorder %s3557, 31
        %s3559 = scalar_select %p3558, %s3557, 31
        %s3560 = smul.addr %s3559, 8
        %s3561 = scalar_lea.vmem %s8, %s3560
      $region64: #{bert_forward.6} parent=59 // pred_fallthru
        _
    $region60: #{bert_forward.6} parent=5 // pred_fallthru
      _
  $region6: #{bert_forward.6} parent=0 // loop_footer
    %s18 = sadd.s32 1, %s14
  $region7: #{bert_forward.6} parent=0 // loop_footer_branch
    %13 = sbr.rel target = $region3
  $region8: #{bert_forward.6} parent=0 // loop_exit
    _

</llo_original>
